<compile_context>
chip_gen: v7x
topology: tpu7x:2x2x1
jax: 0.10.0
libtpu: 0.0.40
codegen_flags: <defaults>
</compile_context>

<pallas_src>
import functools

import jax
import jax.numpy as jnp
from jax.experimental import pallas as pl
from jax.experimental.pallas import tpu as pltpu

_VMEM = pltpu.MemorySpace.VMEM
_SMEM = pltpu.MemorySpace.SMEM

# Exact division by default (PyTorch parity); True -> EUP approximate reciprocal (perf).
_APPROX_RECIP = False
# Cast big matmul operands to bf16 (f32 accumulate). False -> exact f32 PyTorch parity.
_MXU_BF16 = True


def _recip(x):
    return pl.reciprocal(x, approx=_APPROX_RECIP)


def _mxdot(a, b):
    """MXU matmul with optional bf16 operand cast, always f32 accumulation."""
    if _MXU_BF16:
        a = a.astype(jnp.bfloat16)
        b = b.astype(jnp.bfloat16)
    return jnp.dot(a, b, preferred_element_type=jnp.float32)


# --------------------------------------------------------------------------------------
# Fused graph branch:
#   [GMMConv -> BatchNorm1d(eval) -> (ReLU except last) -> dropout(id)] x nlayers
#   -> JumpingKnowledge(mode='lstm') -> global_mean_pool -> Linear -> ReLU -> Linear -> LN
# --------------------------------------------------------------------------------------
def graph_branch_kernel(x_ref, mask_ref, pseudo_ref, mu_ref, nisig_ref,
                        pool_ref, g_ref, root_ref, bn_a_ref, bn_b_ref,
                        wih_ref, bih_ref, whh_f_ref, whh_b_ref,
                        attw_f_ref, attw_b_ref, attb_ref,
                        p1w_ref, p1b_ref, p2w_ref, p2b_ref, lng_ref, lnb_ref,
                        out_ref, hs_ref,
                        *, nlayers, kernel_size, dim, channels, hidden):
    N = x_ref.shape[0]
    K, C, H, L = kernel_size, channels, hidden, nlayers
    T = L + 1                                                   # JK sequence = [x, h1..hL]

    mask = mask_ref[...]                                        # [N, N]  (dst, src)
    pseudo = [pseudo_ref[d] for d in range(dim)]                # dim x [N, N]

    # mean aggregation: in-degree
    deg = jnp.maximum(jnp.sum(mask, axis=1, keepdims=True), 1.0)
    inv_deg = _recip(deg)                                       # [N, 1]

    # ---- GMMConv stack; activations live in the persistent VMEM slab hs_ref ----
    hs_ref[pl.ds(0, N), :] = x_ref[...]
    for li in range(L):
        x_cur = hs_ref[pl.ds(li * N, N), :]                     # [N, C]
        # one MXU matmul produces all K kernel projections at once (lane-dense output)
        xg = _mxdot(x_cur, g_ref[li])                           # [N, K*C]
        acc = jnp.zeros((N, C), jnp.float32)
        for k in range(K):
            # gaussian edge weights for kernel k; mu / (-0.5/(eps+sigma^2)) are SMEM scalars
            sq = jnp.zeros((N, N), jnp.float32)
            for d in range(dim):
                idx = (li * dim + d) * K + k                    # layout [L, dim, K]
                diff = pseudo[d] - mu_ref[idx]
                sq = sq + diff * diff * nisig_ref[idx]          # -0.5 already folded in
            w_k = jnp.exp(sq) * mask                            # [N, N]
            acc = acc + _mxdot(w_k, xg[:, k * C:(k + 1) * C])   # per-k MXU accumulation
        h = acc * inv_deg + _mxdot(x_cur, root_ref[li])
        h = h * bn_a_ref[li] + bn_b_ref[li]                     # conv bias + BN(eval) folded
        if li != L - 1:
            h = jnp.maximum(h, 0.0)                             # ReLU (skipped on last layer)
        # dropout(p=0.1) is identity in eval mode
        hs_ref[pl.ds((li + 1) * N, N), :] = h

    # ---- JumpingKnowledge(mode='lstm') ----
    # hoist every input projection (both directions, all timesteps) into ONE matmul
    xw = _mxdot(hs_ref[...], wih_ref[...]) + bih_ref[...]       # [T*N, 8H]
    whh_f = whh_f_ref[...]
    whh_b = whh_b_ref[...]
    attw_f = attw_f_ref[...]
    attw_b = attw_b_ref[...]

    def lstm_step(gates_x, h, c, whh):                          # only h@Whh on serial chain
        gates = gates_x + jnp.dot(h, whh, preferred_element_type=jnp.float32)
        i = jax.nn.sigmoid(gates[:, 0 * H:1 * H])
        f = jax.nn.sigmoid(gates[:, 1 * H:2 * H])
        g = jnp.tanh(gates[:, 2 * H:3 * H])
        o = jax.nn.sigmoid(gates[:, 3 * H:4 * H])
        c_new = f * c + i * g
        return o * jnp.tanh(c_new), c_new

    # interleave the independent forward / backward recurrences in one loop
    h_f = jnp.zeros((N, H), jnp.float32)
    c_f = jnp.zeros((N, H), jnp.float32)
    h_b = jnp.zeros((N, H), jnp.float32)
    c_b = jnp.zeros((N, H), jnp.float32)
    score_f = [None] * T
    score_b = [None] * T
    for s in range(T):
        tb = T - 1 - s
        h_f, c_f = lstm_step(xw[s * N:(s + 1) * N, 0:4 * H], h_f, c_f, whh_f)
        h_b, c_b = lstm_step(xw[tb * N:(tb + 1) * N, 4 * H:8 * H], h_b, c_b, whh_b)
        score_f[s] = jnp.sum(h_f * attw_f, axis=-1, keepdims=True)   # att: Linear(2H, 1)
        score_b[tb] = jnp.sum(h_b * attw_b, axis=-1, keepdims=True)

    attb = attb_ref[...]                                        # [1, 1]
    scores = [score_f[t] + score_b[t] + attb for t in range(T)]

    m = scores[0]                                               # softmax over layers
    for t in range(1, T):
        m = jnp.maximum(m, scores[t])
    exps = [jnp.exp(s - m) for s in scores]
    den = exps[0]
    for t in range(1, T):
        den = den + exps[t]
    inv_den = _recip(den)                                       # [N, 1]

    node_rep = (exps[0] * inv_den) * hs_ref[pl.ds(0, N), :]
    for t in range(1, T):
        node_rep = node_rep + (exps[t] * inv_den) * hs_ref[pl.ds(t * N, N), :]

    # ---- global_mean_pool + projection head + LayerNorm (head kept in f32) ----
    h_graph = _mxdot(pool_ref[...], node_rep)                   # [B, C]
    hh = jnp.maximum(jnp.dot(h_graph, p1w_ref[...],
                             preferred_element_type=jnp.float32) + p1b_ref[...], 0.0)
    # dropout(p=0.1) identity in eval mode
    hh = jnp.dot(hh, p2w_ref[...], preferred_element_type=jnp.float32) + p2b_ref[...]
    mean = jnp.mean(hh, axis=-1, keepdims=True)
    var = jnp.mean((hh - mean) ** 2, axis=-1, keepdims=True)    # biased var, as torch LN
    out_ref[...] = (hh - mean) * jax.lax.rsqrt(var + 1e-5) * lng_ref[...] + lnb_ref[...]


def monet_graph_forward(x, adj_mask, pseudo, pool_mat, gp):
    n = x.shape[0]
    b = pool_mat.shape[0]
    K, dim, L = gp["kernel_size"], gp["dim"], gp["nlayers"]
    C, H = gp["channels"], gp["hidden"]
    nout = gp["p2_w"].shape[1]

    kern = functools.partial(graph_branch_kernel, nlayers=L, kernel_size=K,
                             dim=dim, channels=C, hidden=H)
    args = (x, adj_mask, pseudo, gp["mu_flat"], gp["nisig_flat"], pool_mat,
            gp["g_st"], gp["root_st"], gp["bn_a_st"], gp["bn_b_st"],
            gp["jk_wih"], gp["jk_bih"], gp["jk_whh_f"], gp["jk_whh_b"],
            gp["jk_attw_f"], gp["jk_attw_b"], gp["jk_attb"],
            gp["p1_w"], gp["p1_b"], gp["p2_w"], gp["p2_b"],
            gp["ln2_g"], gp["ln2_b"])
    in_specs = [pl.BlockSpec(memory_space=_VMEM)] * len(args)
    in_specs[3] = pl.BlockSpec(memory_space=_SMEM)              # mu scalars
    in_specs[4] = pl.BlockSpec(memory_space=_SMEM)              # -0.5/(eps+sigma^2) scalars
    return pl.pallas_call(
        kern,
        out_shape=jax.ShapeDtypeStruct((b, nout), jnp.float32),
        in_specs=in_specs,
        out_specs=pl.BlockSpec(memory_space=_VMEM),
        scratch_shapes=[pltpu.VMEM(((L + 1) * n, C), jnp.float32)],   # JK activation slab
        compiler_params=pltpu.CompilerParams(vmem_limit_bytes=32 * 1024 * 1024),
    )(*args)


# --------------------------------------------------------------------------------------
# Fused text branch: attention-masked mean pooling (CLS surrogate) + Linear -> ReLU
# -> (dropout=id) -> Linear -> LayerNorm, all in one kernel.
# --------------------------------------------------------------------------------------
def text_branch_kernel(emb_ref, mask_ref, w1_ref, b1_ref, w2_ref, b2_ref,
                       lng_ref, lnb_ref, out_ref):
    emb = emb_ref[...]                                          # [B, S, Hbert]
    m = mask_ref[...]                                           # [B, S]
    num = jnp.sum(emb * m[:, :, None], axis=1)                  # [B, Hbert]
    den = jnp.maximum(jnp.sum(m, axis=1, keepdims=True), 1.0)
    cls = num * _recip(den)
    h = jnp.maximum(_mxdot(cls, w1_ref[...]) + b1_ref[...], 0.0)
    # dropout(p=0.1) identity in eval mode
    h = jnp.dot(h, w2_ref[...], preferred_element_type=jnp.float32) + b2_ref[...]
    mean = jnp.mean(h, axis=-1, keepdims=True)
    var = jnp.mean((h - mean) ** 2, axis=-1, keepdims=True)
    out_ref[...] = (h - mean) * jax.lax.rsqrt(var + 1e-5) * lng_ref[...] + lnb_ref[...]


def text_forward(input_ids, attention_mask, tp):
    # TODO(synk): pretrained BERT backbone (AutoModel.from_pretrained) is not reproducible
    # in-script; last_hidden_state[:, 0, :] is replaced by a deterministic token embedding
    # with attention-masked mean pooling.
    # TODO(synk): at real BERT shapes (B*S*768), grid over batch ("parallel") and keep the
    # embedding tensor in bf16 to fit v7x/scoped VMEM limits.
    emb = tp["emb_table"][input_ids]                            # [B, S, 768] gather (glue)
    b = emb.shape[0]
    nout = tp["lin2_w"].shape[1]
    args = (emb, attention_mask.astype(jnp.float32),
            tp["lin1_w"], tp["lin1_b"], tp["lin2_w"], tp["lin2_b"],
            tp["ln1_g"], tp["ln1_b"])
    return pl.pallas_call(
        text_branch_kernel,
        out_shape=jax.ShapeDtypeStruct((b, nout), jnp.float32),
        in_specs=[pl.BlockSpec(memory_space=_VMEM)] * len(args),
        out_specs=pl.BlockSpec(memory_space=_VMEM),
        compiler_params=pltpu.CompilerParams(vmem_limit_bytes=32 * 1024 * 1024),
    )(*args)


def monet_forward(x, adj_mask, pseudo, pool_mat, input_ids, attention_mask, params):
    graph_encoded = monet_graph_forward(x, adj_mask, pseudo, pool_mat, params["graph"])
    text_encoded = text_forward(input_ids, attention_mask, params["text"])
    return graph_encoded, text_encoded


# --------------------------------------------------------------------------------------
# Parameter init (deterministic, synthetic) with inference-time folding:
#   * BatchNorm1d(eval) + GMMConv bias folded into per-layer scale/shift
#   * -0.5/(1e-15 + sigma^2) precomputed (folded sign + hoisted reciprocal)
#   * mu / nisig flattened to SMEM-friendly [L*dim*K] scalars (layout [L, dim, K])
#   * LSTM fwd/bwd input weights + biases concatenated for the hoisted projection matmul
# --------------------------------------------------------------------------------------
def init_monet_params(key, *, num_node_features, nout, nhid, nlayers,
                      graph_hidden_channels, kernel_size, dim=2,
                      bert_hidden=768, vocab_size=64):
    # JumpingKnowledge(lstm) stacks [x, h1..hL] -> requires matching feature dims.
    assert num_node_features == graph_hidden_channels
    keys = iter(jax.random.split(key, 64))

    def nrm(shape, scale=0.1):
        return scale * jax.random.normal(next(keys), shape, dtype=jnp.float32)

    def uni(shape, lo, hi):
        return jax.random.uniform(next(keys), shape, minval=lo, maxval=hi, dtype=jnp.float32)

    L, K, C = nlayers, kernel_size, graph_hidden_channels

    g_st = nrm((L, C, K * C))
    root_st = nrm((L, C, C))
    bias = nrm((L, 1, C))
    mu = uni((L, K, dim), 0.0, 1.0)
    sigma = uni((L, K, dim), 0.5, 1.5)
    bn_gamma = uni((L, 1, C), 0.8, 1.2)
    bn_beta = nrm((L, 1, C))
    bn_mean = nrm((L, 1, C))
    bn_var = uni((L, 1, C), 0.5, 1.5)

    bn_a = bn_gamma * jax.lax.rsqrt(bn_var + 1e-5)              # BN eval scale
    bn_b = bn_beta + (bias - bn_mean) * bn_a                    # BN eval shift + conv bias
    nisig = -0.5 / (1e-15 + sigma * sigma)                      # PyG eps, -0.5 folded in
    mu_flat = jnp.transpose(mu, (0, 2, 1)).reshape(-1)          # [L*dim*K]
    nisig_flat = jnp.transpose(nisig, (0, 2, 1)).reshape(-1)    # [L*dim*K]

    H = (L * C) // 2                                            # PyG JK-LSTM hidden size
    wih_f, wih_b = nrm((C, 4 * H)), nrm((C, 4 * H))
    graph = dict(
        nlayers=L, kernel_size=K, dim=dim, channels=C, hidden=H,
        mu_flat=mu_flat, nisig_flat=nisig_flat,
        g_st=g_st, root_st=root_st, bn_a_st=bn_a, bn_b_st=bn_b,
        jk_wih=jnp.concatenate([wih_f, wih_b], axis=1),         # [C, 8H]  fwd|bwd
        jk_bih=jnp.concatenate([nrm((1, 4 * H)), nrm((1, 4 * H))], axis=1),   # [1, 8H]
        jk_whh_f=nrm((H, 4 * H)), jk_whh_b=nrm((H, 4 * H)),
        jk_attw_f=nrm((1, H)), jk_attw_b=nrm((1, H)), jk_attb=nrm((1, 1)),
        p1_w=nrm((C, nhid)), p1_b=nrm((1, nhid)),
        p2_w=nrm((nhid, nout)), p2_b=nrm((1, nout)),
        ln2_g=uni((1, nout), 0.8, 1.2), ln2_b=nrm((1, nout)),
    )
    text = dict(
        emb_table=nrm((vocab_size, bert_hidden), 1.0),
        lin1_w=nrm((bert_hidden, nhid), 0.05), lin1_b=nrm((1, nhid)),
        lin2_w=nrm((nhid, nout)), lin2_b=nrm((1, nout)),
        ln1_g=uni((1, nout), 0.8, 1.2), ln1_b=nrm((1, nout)),
    )
    return dict(graph=graph, text=text)


# --------------------------------------------------------------------------------------
if __name__ == "__main__":
    key = jax.random.PRNGKey(0)
    k_param, k_x, k_edge, k_ids = jax.random.split(key, 4)

    # model hyper-params (num_node_features == graph_hidden_channels required by JK-stack)
    num_node_features = 32
    graph_hidden_channels = 32
    nout, nhid, nlayers, kernel_size, dim = 16, 32, 2, 4, 2
    vocab_size, bert_hidden, seq_len = 64, 768, 8
    n_graphs, nodes_per_graph = 2, 8
    N = n_graphs * nodes_per_graph

    params = init_monet_params(
        k_param, num_node_features=num_node_features, nout=nout, nhid=nhid,
        nlayers=nlayers, graph_hidden_channels=graph_hidden_channels,
        kernel_size=kernel_size, dim=dim, bert_hidden=bert_hidden, vocab_size=vocab_size)

    # ---- build a small graph batch (x, edge_index, edge_attr, batch) ----
    x = jax.random.normal(k_x, (N, num_node_features), dtype=jnp.float32)
    src_l, dst_l = [], []
    for g in range(n_graphs):                                   # bidirectional ring per graph
        off = g * nodes_per_graph
        for i in range(nodes_per_graph):
            a, b = off + i, off + (i + 1) % nodes_per_graph
            src_l += [a, b]
            dst_l += [b, a]
    src = jnp.array(src_l, jnp.int32)
    dst = jnp.array(dst_l, jnp.int32)
    E = src.shape[0]
    edge_attr = jax.random.uniform(k_edge, (E, dim), dtype=jnp.float32)
    batch = jnp.repeat(jnp.arange(n_graphs, dtype=jnp.int32), nodes_per_graph)

    # glue: densify graph structure for the Pallas kernel (no K-replication anymore)
    adj_mask = jnp.zeros((N, N), jnp.float32).at[dst, src].set(1.0)            # [dst, src]
    pseudo_nn = jnp.zeros((N, N, dim), jnp.float32).at[dst, src].set(edge_attr)
    pseudo = jnp.transpose(pseudo_nn, (2, 0, 1))                                # [dim, N, N]
    one_hot = (batch[None, :] == jnp.arange(n_graphs)[:, None]).astype(jnp.float32)
    pool_mat = one_hot / jnp.maximum(one_hot.sum(axis=1, keepdims=True), 1.0)   # mean pool

    # ---- text inputs ----
    input_ids = jax.random.randint(k_ids, (n_graphs, seq_len), 0, vocab_size, dtype=jnp.int32)
    attention_mask = jnp.array([[1] * seq_len,
                                [1] * 5 + [0] * (seq_len - 5)], dtype=jnp.int32)

    graph_out, text_out = monet_forward(x, adj_mask, pseudo, pool_mat,
                                        input_ids, attention_mask, params)
    jax.block_until_ready((graph_out, text_out))

    assert graph_out.shape == (n_graphs, nout) and text_out.shape == (n_graphs, nout)
    assert bool(jnp.all(jnp.isfinite(graph_out))) and bool(jnp.all(jnp.isfinite(text_out)))
    print("KERNEL_OK")
</pallas_src>

<mosaic_0001>
module attributes {stable_mosaic.version = 11 : i64} {
  func.func @graph_branch_kernel(%arg0: memref<16x32xf32, #tpu.memory_space<vmem>>, %arg1: memref<16x16xf32, #tpu.memory_space<vmem>>, %arg2: memref<2x16x16xf32, #tpu.memory_space<vmem>>, %arg3: memref<16xf32, #tpu.memory_space<smem>>, %arg4: memref<16xf32, #tpu.memory_space<smem>>, %arg5: memref<2x16xf32, #tpu.memory_space<vmem>>, %arg6: memref<2x32x128xf32, #tpu.memory_space<vmem>>, %arg7: memref<2x32x32xf32, #tpu.memory_space<vmem>>, %arg8: memref<2x1x32xf32, #tpu.memory_space<vmem>>, %arg9: memref<2x1x32xf32, #tpu.memory_space<vmem>>, %arg10: memref<32x256xf32, #tpu.memory_space<vmem>>, %arg11: memref<1x256xf32, #tpu.memory_space<vmem>>, %arg12: memref<32x128xf32, #tpu.memory_space<vmem>>, %arg13: memref<32x128xf32, #tpu.memory_space<vmem>>, %arg14: memref<1x32xf32, #tpu.memory_space<vmem>>, %arg15: memref<1x32xf32, #tpu.memory_space<vmem>>, %arg16: memref<1x1xf32, #tpu.memory_space<vmem>>, %arg17: memref<32x32xf32, #tpu.memory_space<vmem>>, %arg18: memref<1x32xf32, #tpu.memory_space<vmem>>, %arg19: memref<32x16xf32, #tpu.memory_space<vmem>>, %arg20: memref<1x16xf32, #tpu.memory_space<vmem>>, %arg21: memref<1x16xf32, #tpu.memory_space<vmem>>, %arg22: memref<1x16xf32, #tpu.memory_space<vmem>>, %arg23: memref<2x16xf32, #tpu.memory_space<vmem>>, %arg24: memref<48x32xf32, #tpu.memory_space<vmem>>) attributes {dimension_semantics = [], scalar_prefetch = 0 : i64, scratch_operands = 1 : i64, tpu.core_type = #tpu.core_type<tc>} {
    %c0 = arith.constant 0 : index
    %c0_0 = arith.constant 0 : index
    %0 = vector.load %arg1[%c0, %c0_0] : memref<16x16xf32, #tpu.memory_space<vmem>>, vector<16x16xf32>
    %c0_1 = arith.constant 0 : index
    %c0_2 = arith.constant 0 : index
    %c0_3 = arith.constant 0 : index
    %1 = vector.load %arg2[%c0_1, %c0_2, %c0_3] : memref<2x16x16xf32, #tpu.memory_space<vmem>>, vector<1x16x16xf32>
    %2 = vector.shape_cast %1 : vector<1x16x16xf32> to vector<16x16xf32>
    %c1 = arith.constant 1 : index
    %c0_4 = arith.constant 0 : index
    %c0_5 = arith.constant 0 : index
    %3 = vector.load %arg2[%c1, %c0_4, %c0_5] : memref<2x16x16xf32, #tpu.memory_space<vmem>>, vector<1x16x16xf32>
    %4 = vector.shape_cast %3 : vector<1x16x16xf32> to vector<16x16xf32>
    %cst = arith.constant dense<0.000000e+00> : vector<16xf32>
    %5 = vector.multi_reduction <add>, %0, %cst [1] : vector<16x16xf32> to vector<16xf32>
    %6 = vector.shape_cast %5 : vector<16xf32> to vector<16x1xf32>
    %cst_6 = arith.constant 1.000000e+00 : f32
    %7 = vector.broadcast %cst_6 : f32 to vector<16x1xf32>
    %8 = arith.maximumf %6, %7 : vector<16x1xf32>
    %9 = tpu.reciprocal %8 : vector<16x1xf32> -> vector<16x1xf32>
    %c0_7 = arith.constant 0 : index
    %c0_8 = arith.constant 0 : index
    %10 = vector.load %arg0[%c0_7, %c0_8] : memref<16x32xf32, #tpu.memory_space<vmem>>, vector<16x32xf32>
    %c0_9 = arith.constant 0 : index
    %c0_10 = arith.constant 0 : index
    %11 = vector.load %arg24[%c0_9, %c0_10] : memref<48x32xf32, #tpu.memory_space<vmem>>, vector<16x32xf32>
    tpu.vector_store %arg24[%c0_9, %c0_10], %10 {strides = array<i32>} : memref<48x32xf32, #tpu.memory_space<vmem>>, vector<16x32xf32>,
    %c0_11 = arith.constant 0 : index
    %c0_12 = arith.constant 0 : index
    %12 = vector.load %arg24[%c0_11, %c0_12] : memref<48x32xf32, #tpu.memory_space<vmem>>, vector<16x32xf32>
    %c0_13 = arith.constant 0 : index
    %c0_14 = arith.constant 0 : index
    %c0_15 = arith.constant 0 : index
    %13 = vector.load %arg6[%c0_13, %c0_14, %c0_15] : memref<2x32x128xf32, #tpu.memory_space<vmem>>, vector<1x32x128xf32>
    %14 = vector.shape_cast %13 : vector<1x32x128xf32> to vector<32x128xf32>
    %15 = arith.truncf %12 : vector<16x32xf32> to vector<16x32xbf16>
    %16 = arith.truncf %14 : vector<32x128xf32> to vector<32x128xbf16>
    %cst_16 = arith.constant dense<0.000000e+00> : vector<16x128xf32>
    %17 = tpu.matmul %15, %16, %cst_16 {dimension_numbers = #tpu.dot_dimension_numbers<[1], [0], [0], [1], [0, 0, 1, 1], [], []>} : vector<16x32xbf16>, vector<32x128xbf16>, vector<16x128xf32> -> vector<16x128xf32>
    %cst_17 = arith.constant 0.000000e+00 : f32
    %18 = vector.broadcast %cst_17 : f32 to vector<16x32xf32>
    %cst_18 = arith.constant 0.000000e+00 : f32
    %19 = vector.broadcast %cst_18 : f32 to vector<16x16xf32>
    %c0_19 = arith.constant 0 : index
    %20 = memref.load %arg3[%c0_19] : memref<16xf32, #tpu.memory_space<smem>>
    %21 = vector.broadcast %20 : f32 to vector<16x16xf32>
    %22 = arith.subf %2, %21 : vector<16x16xf32>
    %23 = arith.mulf %22, %22 : vector<16x16xf32>
    %c0_20 = arith.constant 0 : index
    %24 = memref.load %arg4[%c0_20] : memref<16xf32, #tpu.memory_space<smem>>
    %25 = vector.broadcast %24 : f32 to vector<16x16xf32>
    %26 = arith.mulf %23, %25 : vector<16x16xf32>
    %27 = arith.addf %19, %26 : vector<16x16xf32>
    %c4 = arith.constant 4 : index
    %28 = memref.load %arg3[%c4] : memref<16xf32, #tpu.memory_space<smem>>
    %29 = vector.broadcast %28 : f32 to vector<16x16xf32>
    %30 = arith.subf %4, %29 : vector<16x16xf32>
    %31 = arith.mulf %30, %30 : vector<16x16xf32>
    %c4_21 = arith.constant 4 : index
    %32 = memref.load %arg4[%c4_21] : memref<16xf32, #tpu.memory_space<smem>>
    %33 = vector.broadcast %32 : f32 to vector<16x16xf32>
    %34 = arith.mulf %31, %33 : vector<16x16xf32>
    %35 = arith.addf %27, %34 : vector<16x16xf32>
    %36 = math.exp %35 : vector<16x16xf32>
    %37 = arith.mulf %36, %0 : vector<16x16xf32>
    %38 = vector.extract_strided_slice %17 {offsets = [0, 0], sizes = [16, 32], strides = [1, 1]} : vector<16x128xf32> to vector<16x32xf32>
    %39 = arith.truncf %37 : vector<16x16xf32> to vector<16x16xbf16>
    %40 = arith.truncf %38 : vector<16x32xf32> to vector<16x32xbf16>
    %cst_22 = arith.constant dense<0.000000e+00> : vector<16x32xf32>
    %41 = tpu.matmul %39, %40, %cst_22 {dimension_numbers = #tpu.dot_dimension_numbers<[1], [0], [0], [1], [0, 0, 1, 1], [], []>} : vector<16x16xbf16>, vector<16x32xbf16>, vector<16x32xf32> -> vector<16x32xf32>
    %42 = arith.addf %18, %41 : vector<16x32xf32>
    %cst_23 = arith.constant 0.000000e+00 : f32
    %43 = vector.broadcast %cst_23 : f32 to vector<16x16xf32>
    %c1_24 = arith.constant 1 : index
    %44 = memref.load %arg3[%c1_24] : memref<16xf32, #tpu.memory_space<smem>>
    %45 = vector.broadcast %44 : f32 to vector<16x16xf32>
    %46 = arith.subf %2, %45 : vector<16x16xf32>
    %47 = arith.mulf %46, %46 : vector<16x16xf32>
    %c1_25 = arith.constant 1 : index
    %48 = memref.load %arg4[%c1_25] : memref<16xf32, #tpu.memory_space<smem>>
    %49 = vector.broadcast %48 : f32 to vector<16x16xf32>
    %50 = arith.mulf %47, %49 : vector<16x16xf32>
    %51 = arith.addf %43, %50 : vector<16x16xf32>
    %c5 = arith.constant 5 : index
    %52 = memref.load %arg3[%c5] : memref<16xf32, #tpu.memory_space<smem>>
    %53 = vector.broadcast %52 : f32 to vector<16x16xf32>
    %54 = arith.subf %4, %53 : vector<16x16xf32>
    %55 = arith.mulf %54, %54 : vector<16x16xf32>
    %c5_26 = arith.constant 5 : index
    %56 = memref.load %arg4[%c5_26] : memref<16xf32, #tpu.memory_space<smem>>
    %57 = vector.broadcast %56 : f32 to vector<16x16xf32>
    %58 = arith.mulf %55, %57 : vector<16x16xf32>
    %59 = arith.addf %51, %58 : vector<16x16xf32>
    %60 = math.exp %59 : vector<16x16xf32>
    %61 = arith.mulf %60, %0 : vector<16x16xf32>
    %62 = vector.extract_strided_slice %17 {offsets = [0, 32], sizes = [16, 32], strides = [1, 1]} : vector<16x128xf32> to vector<16x32xf32>
    %63 = arith.truncf %61 : vector<16x16xf32> to vector<16x16xbf16>
    %64 = arith.truncf %62 : vector<16x32xf32> to vector<16x32xbf16>
    %cst_27 = arith.constant dense<0.000000e+00> : vector<16x32xf32>
    %65 = tpu.matmul %63, %64, %cst_27 {dimension_numbers = #tpu.dot_dimension_numbers<[1], [0], [0], [1], [0, 0, 1, 1], [], []>} : vector<16x16xbf16>, vector<16x32xbf16>, vector<16x32xf32> -> vector<16x32xf32>
    %66 = arith.addf %42, %65 : vector<16x32xf32>
    %cst_28 = arith.constant 0.000000e+00 : f32
    %67 = vector.broadcast %cst_28 : f32 to vector<16x16xf32>
    %c2 = arith.constant 2 : index
    %68 = memref.load %arg3[%c2] : memref<16xf32, #tpu.memory_space<smem>>
    %69 = vector.broadcast %68 : f32 to vector<16x16xf32>
    %70 = arith.subf %2, %69 : vector<16x16xf32>
    %71 = arith.mulf %70, %70 : vector<16x16xf32>
    %c2_29 = arith.constant 2 : index
    %72 = memref.load %arg4[%c2_29] : memref<16xf32, #tpu.memory_space<smem>>
    %73 = vector.broadcast %72 : f32 to vector<16x16xf32>
    %74 = arith.mulf %71, %73 : vector<16x16xf32>
    %75 = arith.addf %67, %74 : vector<16x16xf32>
    %c6 = arith.constant 6 : index
    %76 = memref.load %arg3[%c6] : memref<16xf32, #tpu.memory_space<smem>>
    %77 = vector.broadcast %76 : f32 to vector<16x16xf32>
    %78 = arith.subf %4, %77 : vector<16x16xf32>
    %79 = arith.mulf %78, %78 : vector<16x16xf32>
    %c6_30 = arith.constant 6 : index
    %80 = memref.load %arg4[%c6_30] : memref<16xf32, #tpu.memory_space<smem>>
    %81 = vector.broadcast %80 : f32 to vector<16x16xf32>
    %82 = arith.mulf %79, %81 : vector<16x16xf32>
    %83 = arith.addf %75, %82 : vector<16x16xf32>
    %84 = math.exp %83 : vector<16x16xf32>
    %85 = arith.mulf %84, %0 : vector<16x16xf32>
    %86 = vector.extract_strided_slice %17 {offsets = [0, 64], sizes = [16, 32], strides = [1, 1]} : vector<16x128xf32> to vector<16x32xf32>
    %87 = arith.truncf %85 : vector<16x16xf32> to vector<16x16xbf16>
    %88 = arith.truncf %86 : vector<16x32xf32> to vector<16x32xbf16>
    %cst_31 = arith.constant dense<0.000000e+00> : vector<16x32xf32>
    %89 = tpu.matmul %87, %88, %cst_31 {dimension_numbers = #tpu.dot_dimension_numbers<[1], [0], [0], [1], [0, 0, 1, 1], [], []>} : vector<16x16xbf16>, vector<16x32xbf16>, vector<16x32xf32> -> vector<16x32xf32>
    %90 = arith.addf %66, %89 : vector<16x32xf32>
    %cst_32 = arith.constant 0.000000e+00 : f32
    %91 = vector.broadcast %cst_32 : f32 to vector<16x16xf32>
    %c3 = arith.constant 3 : index
    %92 = memref.load %arg3[%c3] : memref<16xf32, #tpu.memory_space<smem>>
    %93 = vector.broadcast %92 : f32 to vector<16x16xf32>
    %94 = arith.subf %2, %93 : vector<16x16xf32>
    %95 = arith.mulf %94, %94 : vector<16x16xf32>
    %c3_33 = arith.constant 3 : index
    %96 = memref.load %arg4[%c3_33] : memref<16xf32, #tpu.memory_space<smem>>
    %97 = vector.broadcast %96 : f32 to vector<16x16xf32>
    %98 = arith.mulf %95, %97 : vector<16x16xf32>
    %99 = arith.addf %91, %98 : vector<16x16xf32>
    %c7 = arith.constant 7 : index
    %100 = memref.load %arg3[%c7] : memref<16xf32, #tpu.memory_space<smem>>
    %101 = vector.broadcast %100 : f32 to vector<16x16xf32>
    %102 = arith.subf %4, %101 : vector<16x16xf32>
    %103 = arith.mulf %102, %102 : vector<16x16xf32>
    %c7_34 = arith.constant 7 : index
    %104 = memref.load %arg4[%c7_34] : memref<16xf32, #tpu.memory_space<smem>>
    %105 = vector.broadcast %104 : f32 to vector<16x16xf32>
    %106 = arith.mulf %103, %105 : vector<16x16xf32>
    %107 = arith.addf %99, %106 : vector<16x16xf32>
    %108 = math.exp %107 : vector<16x16xf32>
    %109 = arith.mulf %108, %0 : vector<16x16xf32>
    %110 = vector.extract_strided_slice %17 {offsets = [0, 96], sizes = [16, 32], strides = [1, 1]} : vector<16x128xf32> to vector<16x32xf32>
    %111 = arith.truncf %109 : vector<16x16xf32> to vector<16x16xbf16>
    %112 = arith.truncf %110 : vector<16x32xf32> to vector<16x32xbf16>
    %cst_35 = arith.constant dense<0.000000e+00> : vector<16x32xf32>
    %113 = tpu.matmul %111, %112, %cst_35 {dimension_numbers = #tpu.dot_dimension_numbers<[1], [0], [0], [1], [0, 0, 1, 1], [], []>} : vector<16x16xbf16>, vector<16x32xbf16>, vector<16x32xf32> -> vector<16x32xf32>
    %114 = arith.addf %90, %113 : vector<16x32xf32>
    %115 = vector.broadcast %9 : vector<16x1xf32> to vector<16x32xf32>
    %116 = arith.mulf %114, %115 : vector<16x32xf32>
    %c0_36 = arith.constant 0 : index
    %c0_37 = arith.constant 0 : index
    %c0_38 = arith.constant 0 : index
    %117 = vector.load %arg7[%c0_36, %c0_37, %c0_38] : memref<2x32x32xf32, #tpu.memory_space<vmem>>, vector<1x32x32xf32>
    %118 = vector.shape_cast %117 : vector<1x32x32xf32> to vector<32x32xf32>
    %119 = arith.truncf %12 : vector<16x32xf32> to vector<16x32xbf16>
    %120 = arith.truncf %118 : vector<32x32xf32> to vector<32x32xbf16>
    %cst_39 = arith.constant dense<0.000000e+00> : vector<16x32xf32>
    %121 = tpu.matmul %119, %120, %cst_39 {dimension_numbers = #tpu.dot_dimension_numbers<[1], [0], [0], [1], [0, 0, 1, 1], [], []>} : vector<16x32xbf16>, vector<32x32xbf16>, vector<16x32xf32> -> vector<16x32xf32>
    %122 = arith.addf %116, %121 : vector<16x32xf32>
    %c0_40 = arith.constant 0 : index
    %c0_41 = arith.constant 0 : index
    %c0_42 = arith.constant 0 : index
    %123 = vector.load %arg8[%c0_40, %c0_41, %c0_42] : memref<2x1x32xf32, #tpu.memory_space<vmem>>, vector<1x1x32xf32>
    %124 = vector.shape_cast %123 : vector<1x1x32xf32> to vector<1x32xf32>
    %125 = vector.broadcast %124 : vector<1x32xf32> to vector<16x32xf32>
    %126 = arith.mulf %122, %125 : vector<16x32xf32>
    %c0_43 = arith.constant 0 : index
    %c0_44 = arith.constant 0 : index
    %c0_45 = arith.constant 0 : index
    %127 = vector.load %arg9[%c0_43, %c0_44, %c0_45] : memref<2x1x32xf32, #tpu.memory_space<vmem>>, vector<1x1x32xf32>
    %128 = vector.shape_cast %127 : vector<1x1x32xf32> to vector<1x32xf32>
    %129 = vector.broadcast %128 : vector<1x32xf32> to vector<16x32xf32>
    %130 = arith.addf %126, %129 : vector<16x32xf32>
    %cst_46 = arith.constant 0.000000e+00 : f32
    %131 = vector.broadcast %cst_46 : f32 to vector<16x32xf32>
    %132 = arith.maximumf %130, %131 : vector<16x32xf32>
    %c16 = arith.constant 16 : index
    %c0_47 = arith.constant 0 : index
    %133 = vector.load %arg24[%c16, %c0_47] : memref<48x32xf32, #tpu.memory_space<vmem>>, vector<16x32xf32>
    tpu.vector_store %arg24[%c16, %c0_47], %132 {strides = array<i32>} : memref<48x32xf32, #tpu.memory_space<vmem>>, vector<16x32xf32>,
    %c16_48 = arith.constant 16 : index
    %c0_49 = arith.constant 0 : index
    %134 = vector.load %arg24[%c16_48, %c0_49] : memref<48x32xf32, #tpu.memory_space<vmem>>, vector<16x32xf32>
    %c1_50 = arith.constant 1 : index
    %c0_51 = arith.constant 0 : index
    %c0_52 = arith.constant 0 : index
    %135 = vector.load %arg6[%c1_50, %c0_51, %c0_52] : memref<2x32x128xf32, #tpu.memory_space<vmem>>, vector<1x32x128xf32>
    %136 = vector.shape_cast %135 : vector<1x32x128xf32> to vector<32x128xf32>
    %137 = arith.truncf %134 : vector<16x32xf32> to vector<16x32xbf16>
    %138 = arith.truncf %136 : vector<32x128xf32> to vector<32x128xbf16>
    %cst_53 = arith.constant dense<0.000000e+00> : vector<16x128xf32>
    %139 = tpu.matmul %137, %138, %cst_53 {dimension_numbers = #tpu.dot_dimension_numbers<[1], [0], [0], [1], [0, 0, 1, 1], [], []>} : vector<16x32xbf16>, vector<32x128xbf16>, vector<16x128xf32> -> vector<16x128xf32>
    %cst_54 = arith.constant 0.000000e+00 : f32
    %140 = vector.broadcast %cst_54 : f32 to vector<16x32xf32>
    %cst_55 = arith.constant 0.000000e+00 : f32
    %141 = vector.broadcast %cst_55 : f32 to vector<16x16xf32>
    %c8 = arith.constant 8 : index
    %142 = memref.load %arg3[%c8] : memref<16xf32, #tpu.memory_space<smem>>
    %143 = vector.broadcast %142 : f32 to vector<16x16xf32>
    %144 = arith.subf %2, %143 : vector<16x16xf32>
    %145 = arith.mulf %144, %144 : vector<16x16xf32>
    %c8_56 = arith.constant 8 : index
    %146 = memref.load %arg4[%c8_56] : memref<16xf32, #tpu.memory_space<smem>>
    %147 = vector.broadcast %146 : f32 to vector<16x16xf32>
    %148 = arith.mulf %145, %147 : vector<16x16xf32>
    %149 = arith.addf %141, %148 : vector<16x16xf32>
    %c12 = arith.constant 12 : index
    %150 = memref.load %arg3[%c12] : memref<16xf32, #tpu.memory_space<smem>>
    %151 = vector.broadcast %150 : f32 to vector<16x16xf32>
    %152 = arith.subf %4, %151 : vector<16x16xf32>
    %153 = arith.mulf %152, %152 : vector<16x16xf32>
    %c12_57 = arith.constant 12 : index
    %154 = memref.load %arg4[%c12_57] : memref<16xf32, #tpu.memory_space<smem>>
    %155 = vector.broadcast %154 : f32 to vector<16x16xf32>
    %156 = arith.mulf %153, %155 : vector<16x16xf32>
    %157 = arith.addf %149, %156 : vector<16x16xf32>
    %158 = math.exp %157 : vector<16x16xf32>
    %159 = arith.mulf %158, %0 : vector<16x16xf32>
    %160 = vector.extract_strided_slice %139 {offsets = [0, 0], sizes = [16, 32], strides = [1, 1]} : vector<16x128xf32> to vector<16x32xf32>
    %161 = arith.truncf %159 : vector<16x16xf32> to vector<16x16xbf16>
    %162 = arith.truncf %160 : vector<16x32xf32> to vector<16x32xbf16>
    %cst_58 = arith.constant dense<0.000000e+00> : vector<16x32xf32>
    %163 = tpu.matmul %161, %162, %cst_58 {dimension_numbers = #tpu.dot_dimension_numbers<[1], [0], [0], [1], [0, 0, 1, 1], [], []>} : vector<16x16xbf16>, vector<16x32xbf16>, vector<16x32xf32> -> vector<16x32xf32>
    %164 = arith.addf %140, %163 : vector<16x32xf32>
    %cst_59 = arith.constant 0.000000e+00 : f32
    %165 = vector.broadcast %cst_59 : f32 to vector<16x16xf32>
    %c9 = arith.constant 9 : index
    %166 = memref.load %arg3[%c9] : memref<16xf32, #tpu.memory_space<smem>>
    %167 = vector.broadcast %166 : f32 to vector<16x16xf32>
    %168 = arith.subf %2, %167 : vector<16x16xf32>
    %169 = arith.mulf %168, %168 : vector<16x16xf32>
    %c9_60 = arith.constant 9 : index
    %170 = memref.load %arg4[%c9_60] : memref<16xf32, #tpu.memory_space<smem>>
    %171 = vector.broadcast %170 : f32 to vector<16x16xf32>
    %172 = arith.mulf %169, %171 : vector<16x16xf32>
    %173 = arith.addf %165, %172 : vector<16x16xf32>
    %c13 = arith.constant 13 : index
    %174 = memref.load %arg3[%c13] : memref<16xf32, #tpu.memory_space<smem>>
    %175 = vector.broadcast %174 : f32 to vector<16x16xf32>
    %176 = arith.subf %4, %175 : vector<16x16xf32>
    %177 = arith.mulf %176, %176 : vector<16x16xf32>
    %c13_61 = arith.constant 13 : index
    %178 = memref.load %arg4[%c13_61] : memref<16xf32, #tpu.memory_space<smem>>
    %179 = vector.broadcast %178 : f32 to vector<16x16xf32>
    %180 = arith.mulf %177, %179 : vector<16x16xf32>
    %181 = arith.addf %173, %180 : vector<16x16xf32>
    %182 = math.exp %181 : vector<16x16xf32>
    %183 = arith.mulf %182, %0 : vector<16x16xf32>
    %184 = vector.extract_strided_slice %139 {offsets = [0, 32], sizes = [16, 32], strides = [1, 1]} : vector<16x128xf32> to vector<16x32xf32>
    %185 = arith.truncf %183 : vector<16x16xf32> to vector<16x16xbf16>
    %186 = arith.truncf %184 : vector<16x32xf32> to vector<16x32xbf16>
    %cst_62 = arith.constant dense<0.000000e+00> : vector<16x32xf32>
    %187 = tpu.matmul %185, %186, %cst_62 {dimension_numbers = #tpu.dot_dimension_numbers<[1], [0], [0], [1], [0, 0, 1, 1], [], []>} : vector<16x16xbf16>, vector<16x32xbf16>, vector<16x32xf32> -> vector<16x32xf32>
    %188 = arith.addf %164, %187 : vector<16x32xf32>
    %cst_63 = arith.constant 0.000000e+00 : f32
    %189 = vector.broadcast %cst_63 : f32 to vector<16x16xf32>
    %c10 = arith.constant 10 : index
    %190 = memref.load %arg3[%c10] : memref<16xf32, #tpu.memory_space<smem>>
    %191 = vector.broadcast %190 : f32 to vector<16x16xf32>
    %192 = arith.subf %2, %191 : vector<16x16xf32>
    %193 = arith.mulf %192, %192 : vector<16x16xf32>
    %c10_64 = arith.constant 10 : index
    %194 = memref.load %arg4[%c10_64] : memref<16xf32, #tpu.memory_space<smem>>
    %195 = vector.broadcast %194 : f32 to vector<16x16xf32>
    %196 = arith.mulf %193, %195 : vector<16x16xf32>
    %197 = arith.addf %189, %196 : vector<16x16xf32>
    %c14 = arith.constant 14 : index
    %198 = memref.load %arg3[%c14] : memref<16xf32, #tpu.memory_space<smem>>
    %199 = vector.broadcast %198 : f32 to vector<16x16xf32>
    %200 = arith.subf %4, %199 : vector<16x16xf32>
    %201 = arith.mulf %200, %200 : vector<16x16xf32>
    %c14_65 = arith.constant 14 : index
    %202 = memref.load %arg4[%c14_65] : memref<16xf32, #tpu.memory_space<smem>>
    %203 = vector.broadcast %202 : f32 to vector<16x16xf32>
    %204 = arith.mulf %201, %203 : vector<16x16xf32>
    %205 = arith.addf %197, %204 : vector<16x16xf32>
    %206 = math.exp %205 : vector<16x16xf32>
    %207 = arith.mulf %206, %0 : vector<16x16xf32>
    %208 = vector.extract_strided_slice %139 {offsets = [0, 64], sizes = [16, 32], strides = [1, 1]} : vector<16x128xf32> to vector<16x32xf32>
    %209 = arith.truncf %207 : vector<16x16xf32> to vector<16x16xbf16>
    %210 = arith.truncf %208 : vector<16x32xf32> to vector<16x32xbf16>
    %cst_66 = arith.constant dense<0.000000e+00> : vector<16x32xf32>
    %211 = tpu.matmul %209, %210, %cst_66 {dimension_numbers = #tpu.dot_dimension_numbers<[1], [0], [0], [1], [0, 0, 1, 1], [], []>} : vector<16x16xbf16>, vector<16x32xbf16>, vector<16x32xf32> -> vector<16x32xf32>
    %212 = arith.addf %188, %211 : vector<16x32xf32>
    %cst_67 = arith.constant 0.000000e+00 : f32
    %213 = vector.broadcast %cst_67 : f32 to vector<16x16xf32>
    %c11 = arith.constant 11 : index
    %214 = memref.load %arg3[%c11] : memref<16xf32, #tpu.memory_space<smem>>
    %215 = vector.broadcast %214 : f32 to vector<16x16xf32>
    %216 = arith.subf %2, %215 : vector<16x16xf32>
    %217 = arith.mulf %216, %216 : vector<16x16xf32>
    %c11_68 = arith.constant 11 : index
    %218 = memref.load %arg4[%c11_68] : memref<16xf32, #tpu.memory_space<smem>>
    %219 = vector.broadcast %218 : f32 to vector<16x16xf32>
    %220 = arith.mulf %217, %219 : vector<16x16xf32>
    %221 = arith.addf %213, %220 : vector<16x16xf32>
    %c15 = arith.constant 15 : index
    %222 = memref.load %arg3[%c15] : memref<16xf32, #tpu.memory_space<smem>>
    %223 = vector.broadcast %222 : f32 to vector<16x16xf32>
    %224 = arith.subf %4, %223 : vector<16x16xf32>
    %225 = arith.mulf %224, %224 : vector<16x16xf32>
    %c15_69 = arith.constant 15 : index
    %226 = memref.load %arg4[%c15_69] : memref<16xf32, #tpu.memory_space<smem>>
    %227 = vector.broadcast %226 : f32 to vector<16x16xf32>
    %228 = arith.mulf %225, %227 : vector<16x16xf32>
    %229 = arith.addf %221, %228 : vector<16x16xf32>
    %230 = math.exp %229 : vector<16x16xf32>
    %231 = arith.mulf %230, %0 : vector<16x16xf32>
    %232 = vector.extract_strided_slice %139 {offsets = [0, 96], sizes = [16, 32], strides = [1, 1]} : vector<16x128xf32> to vector<16x32xf32>
    %233 = arith.truncf %231 : vector<16x16xf32> to vector<16x16xbf16>
    %234 = arith.truncf %232 : vector<16x32xf32> to vector<16x32xbf16>
    %cst_70 = arith.constant dense<0.000000e+00> : vector<16x32xf32>
    %235 = tpu.matmul %233, %234, %cst_70 {dimension_numbers = #tpu.dot_dimension_numbers<[1], [0], [0], [1], [0, 0, 1, 1], [], []>} : vector<16x16xbf16>, vector<16x32xbf16>, vector<16x32xf32> -> vector<16x32xf32>
    %236 = arith.addf %212, %235 : vector<16x32xf32>
    %237 = vector.broadcast %9 : vector<16x1xf32> to vector<16x32xf32>
    %238 = arith.mulf %236, %237 : vector<16x32xf32>
    %c1_71 = arith.constant 1 : index
    %c0_72 = arith.constant 0 : index
    %c0_73 = arith.constant 0 : index
    %239 = vector.load %arg7[%c1_71, %c0_72, %c0_73] : memref<2x32x32xf32, #tpu.memory_space<vmem>>, vector<1x32x32xf32>
    %240 = vector.shape_cast %239 : vector<1x32x32xf32> to vector<32x32xf32>
    %241 = arith.truncf %134 : vector<16x32xf32> to vector<16x32xbf16>
    %242 = arith.truncf %240 : vector<32x32xf32> to vector<32x32xbf16>
    %cst_74 = arith.constant dense<0.000000e+00> : vector<16x32xf32>
    %243 = tpu.matmul %241, %242, %cst_74 {dimension_numbers = #tpu.dot_dimension_numbers<[1], [0], [0], [1], [0, 0, 1, 1], [], []>} : vector<16x32xbf16>, vector<32x32xbf16>, vector<16x32xf32> -> vector<16x32xf32>
    %244 = arith.addf %238, %243 : vector<16x32xf32>
    %c1_75 = arith.constant 1 : index
    %c0_76 = arith.constant 0 : index
    %c0_77 = arith.constant 0 : index
    %245 = vector.load %arg8[%c1_75, %c0_76, %c0_77] : memref<2x1x32xf32, #tpu.memory_space<vmem>>, vector<1x1x32xf32>
    %246 = vector.shape_cast %245 : vector<1x1x32xf32> to vector<1x32xf32>
    %247 = vector.broadcast %246 : vector<1x32xf32> to vector<16x32xf32>
    %248 = arith.mulf %244, %247 : vector<16x32xf32>
    %c1_78 = arith.constant 1 : index
    %c0_79 = arith.constant 0 : index
    %c0_80 = arith.constant 0 : index
    %249 = vector.load %arg9[%c1_78, %c0_79, %c0_80] : memref<2x1x32xf32, #tpu.memory_space<vmem>>, vector<1x1x32xf32>
    %250 = vector.shape_cast %249 : vector<1x1x32xf32> to vector<1x32xf32>
    %251 = vector.broadcast %250 : vector<1x32xf32> to vector<16x32xf32>
    %252 = arith.addf %248, %251 : vector<16x32xf32>
    %c32 = arith.constant 32 : index
    %c0_81 = arith.constant 0 : index
    %253 = vector.load %arg24[%c32, %c0_81] : memref<48x32xf32, #tpu.memory_space<vmem>>, vector<16x32xf32>
    tpu.vector_store %arg24[%c32, %c0_81], %252 {strides = array<i32>} : memref<48x32xf32, #tpu.memory_space<vmem>>, vector<16x32xf32>,
    %c0_82 = arith.constant 0 : index
    %c0_83 = arith.constant 0 : index
    %254 = vector.load %arg24[%c0_82, %c0_83] : memref<48x32xf32, #tpu.memory_space<vmem>>, vector<48x32xf32>
    %c0_84 = arith.constant 0 : index
    %c0_85 = arith.constant 0 : index
    %255 = vector.load %arg10[%c0_84, %c0_85] : memref<32x256xf32, #tpu.memory_space<vmem>>, vector<32x256xf32>
    %256 = arith.truncf %254 : vector<48x32xf32> to vector<48x32xbf16>
    %257 = arith.truncf %255 : vector<32x256xf32> to vector<32x256xbf16>
    %cst_86 = arith.constant dense<0.000000e+00> : vector<48x256xf32>
    %258 = tpu.matmul %256, %257, %cst_86 {dimension_numbers = #tpu.dot_dimension_numbers<[1], [0], [0], [1], [0, 0, 1, 1], [], []>} : vector<48x32xbf16>, vector<32x256xbf16>, vector<48x256xf32> -> vector<48x256xf32>
    %c0_87 = arith.constant 0 : index
    %c0_88 = arith.constant 0 : index
    %259 = vector.load %arg11[%c0_87, %c0_88] : memref<1x256xf32, #tpu.memory_space<vmem>>, vector<1x256xf32>
    %260 = vector.broadcast %259 : vector<1x256xf32> to vector<48x256xf32>
    %261 = arith.addf %258, %260 : vector<48x256xf32>
    %c0_89 = arith.constant 0 : index
    %c0_90 = arith.constant 0 : index
    %262 = vector.load %arg12[%c0_89, %c0_90] : memref<32x128xf32, #tpu.memory_space<vmem>>, vector<32x128xf32>
    %c0_91 = arith.constant 0 : index
    %c0_92 = arith.constant 0 : index
    %263 = vector.load %arg13[%c0_91, %c0_92] : memref<32x128xf32, #tpu.memory_space<vmem>>, vector<32x128xf32>
    %c0_93 = arith.constant 0 : index
    %c0_94 = arith.constant 0 : index
    %264 = vector.load %arg14[%c0_93, %c0_94] : memref<1x32xf32, #tpu.memory_space<vmem>>, vector<1x32xf32>
    %c0_95 = arith.constant 0 : index
    %c0_96 = arith.constant 0 : index
    %265 = vector.load %arg15[%c0_95, %c0_96] : memref<1x32xf32, #tpu.memory_space<vmem>>, vector<1x32xf32>
    %cst_97 = arith.constant 0.000000e+00 : f32
    %266 = vector.broadcast %cst_97 : f32 to vector<16x32xf32>
    %cst_98 = arith.constant 0.000000e+00 : f32
    %267 = vector.broadcast %cst_98 : f32 to vector<16x32xf32>
    %cst_99 = arith.constant 0.000000e+00 : f32
    %268 = vector.broadcast %cst_99 : f32 to vector<16x32xf32>
    %cst_100 = arith.constant 0.000000e+00 : f32
    %269 = vector.broadcast %cst_100 : f32 to vector<16x32xf32>
    %270 = vector.extract_strided_slice %261 {offsets = [0, 0], sizes = [16, 128], strides = [1, 1]} : vector<48x256xf32> to vector<16x128xf32>
    %cst_101 = arith.constant dense<0.000000e+00> : vector<16x128xf32>
    %271 = tpu.matmul %266, %262, %cst_101 {dimension_numbers = #tpu.dot_dimension_numbers<[1], [0], [0], [1], [0, 0, 1, 1], [], []>} : vector<16x32xf32>, vector<32x128xf32>, vector<16x128xf32> -> vector<16x128xf32>
    %272 = arith.addf %270, %271 : vector<16x128xf32>
    %273 = vector.extract_strided_slice %272 {offsets = [0, 0], sizes = [16, 32], strides = [1, 1]} : vector<16x128xf32> to vector<16x32xf32>
    %274 = arith.negf %273 : vector<16x32xf32>
    %275 = math.exp %274 : vector<16x32xf32>
    %cst_102 = arith.constant 1.000000e+00 : f32
    %276 = vector.broadcast %cst_102 : f32 to vector<16x32xf32>
    %277 = arith.addf %276, %275 : vector<16x32xf32>
    %278 = arith.divf %276, %277 : vector<16x32xf32>
    %279 = vector.extract_strided_slice %272 {offsets = [0, 32], sizes = [16, 32], strides = [1, 1]} : vector<16x128xf32> to vector<16x32xf32>
    %280 = arith.negf %279 : vector<16x32xf32>
    %281 = math.exp %280 : vector<16x32xf32>
    %cst_103 = arith.constant 1.000000e+00 : f32
    %282 = vector.broadcast %cst_103 : f32 to vector<16x32xf32>
    %283 = arith.addf %282, %281 : vector<16x32xf32>
    %284 = arith.divf %282, %283 : vector<16x32xf32>
    %285 = vector.extract_strided_slice %272 {offsets = [0, 64], sizes = [16, 32], strides = [1, 1]} : vector<16x128xf32> to vector<16x32xf32>
    %286 = math.tanh %285 : vector<16x32xf32>
    %287 = vector.extract_strided_slice %272 {offsets = [0, 96], sizes = [16, 32], strides = [1, 1]} : vector<16x128xf32> to vector<16x32xf32>
    %288 = arith.negf %287 : vector<16x32xf32>
    %289 = math.exp %288 : vector<16x32xf32>
    %cst_104 = arith.constant 1.000000e+00 : f32
    %290 = vector.broadcast %cst_104 : f32 to vector<16x32xf32>
    %291 = arith.addf %290, %289 : vector<16x32xf32>
    %292 = arith.divf %290, %291 : vector<16x32xf32>
    %293 = arith.mulf %284, %267 : vector<16x32xf32>
    %294 = arith.mulf %278, %286 : vector<16x32xf32>
    %295 = arith.addf %293, %294 : vector<16x32xf32>
    %296 = math.tanh %295 : vector<16x32xf32>
    %297 = arith.mulf %292, %296 : vector<16x32xf32>
    %298 = vector.extract_strided_slice %261 {offsets = [32, 128], sizes = [16, 128], strides = [1, 1]} : vector<48x256xf32> to vector<16x128xf32>
    %cst_105 = arith.constant dense<0.000000e+00> : vector<16x128xf32>
    %299 = tpu.matmul %268, %263, %cst_105 {dimension_numbers = #tpu.dot_dimension_numbers<[1], [0], [0], [1], [0, 0, 1, 1], [], []>} : vector<16x32xf32>, vector<32x128xf32>, vector<16x128xf32> -> vector<16x128xf32>
    %300 = arith.addf %298, %299 : vector<16x128xf32>
    %301 = vector.extract_strided_slice %300 {offsets = [0, 0], sizes = [16, 32], strides = [1, 1]} : vector<16x128xf32> to vector<16x32xf32>
    %302 = arith.negf %301 : vector<16x32xf32>
    %303 = math.exp %302 : vector<16x32xf32>
    %cst_106 = arith.constant 1.000000e+00 : f32
    %304 = vector.broadcast %cst_106 : f32 to vector<16x32xf32>
    %305 = arith.addf %304, %303 : vector<16x32xf32>
    %306 = arith.divf %304, %305 : vector<16x32xf32>
    %307 = vector.extract_strided_slice %300 {offsets = [0, 32], sizes = [16, 32], strides = [1, 1]} : vector<16x128xf32> to vector<16x32xf32>
    %308 = arith.negf %307 : vector<16x32xf32>
    %309 = math.exp %308 : vector<16x32xf32>
    %cst_107 = arith.constant 1.000000e+00 : f32
    %310 = vector.broadcast %cst_107 : f32 to vector<16x32xf32>
    %311 = arith.addf %310, %309 : vector<16x32xf32>
    %312 = arith.divf %310, %311 : vector<16x32xf32>
    %313 = vector.extract_strided_slice %300 {offsets = [0, 64], sizes = [16, 32], strides = [1, 1]} : vector<16x128xf32> to vector<16x32xf32>
    %314 = math.tanh %313 : vector<16x32xf32>
    %315 = vector.extract_strided_slice %300 {offsets = [0, 96], sizes = [16, 32], strides = [1, 1]} : vector<16x128xf32> to vector<16x32xf32>
    %316 = arith.negf %315 : vector<16x32xf32>
    %317 = math.exp %316 : vector<16x32xf32>
    %cst_108 = arith.constant 1.000000e+00 : f32
    %318 = vector.broadcast %cst_108 : f32 to vector<16x32xf32>
    %319 = arith.addf %318, %317 : vector<16x32xf32>
    %320 = arith.divf %318, %319 : vector<16x32xf32>
    %321 = arith.mulf %312, %269 : vector<16x32xf32>
    %322 = arith.mulf %306, %314 : vector<16x32xf32>
    %323 = arith.addf %321, %322 : vector<16x32xf32>
    %324 = math.tanh %323 : vector<16x32xf32>
    %325 = arith.mulf %320, %324 : vector<16x32xf32>
    %326 = vector.broadcast %264 : vector<1x32xf32> to vector<16x32xf32>
    %327 = arith.mulf %297, %326 : vector<16x32xf32>
    %cst_109 = arith.constant dense<0.000000e+00> : vector<16xf32>
    %328 = vector.multi_reduction <add>, %327, %cst_109 [1] : vector<16x32xf32> to vector<16xf32>
    %329 = vector.shape_cast %328 : vector<16xf32> to vector<16x1xf32>
    %330 = vector.broadcast %265 : vector<1x32xf32> to vector<16x32xf32>
    %331 = arith.mulf %325, %330 : vector<16x32xf32>
    %cst_110 = arith.constant dense<0.000000e+00> : vector<16xf32>
    %332 = vector.multi_reduction <add>, %331, %cst_110 [1] : vector<16x32xf32> to vector<16xf32>
    %333 = vector.shape_cast %332 : vector<16xf32> to vector<16x1xf32>
    %334 = vector.extract_strided_slice %261 {offsets = [16, 0], sizes = [16, 128], strides = [1, 1]} : vector<48x256xf32> to vector<16x128xf32>
    %cst_111 = arith.constant dense<0.000000e+00> : vector<16x128xf32>
    %335 = tpu.matmul %297, %262, %cst_111 {dimension_numbers = #tpu.dot_dimension_numbers<[1], [0], [0], [1], [0, 0, 1, 1], [], []>} : vector<16x32xf32>, vector<32x128xf32>, vector<16x128xf32> -> vector<16x128xf32>
    %336 = arith.addf %334, %335 : vector<16x128xf32>
    %337 = vector.extract_strided_slice %336 {offsets = [0, 0], sizes = [16, 32], strides = [1, 1]} : vector<16x128xf32> to vector<16x32xf32>
    %338 = arith.negf %337 : vector<16x32xf32>
    %339 = math.exp %338 : vector<16x32xf32>
    %cst_112 = arith.constant 1.000000e+00 : f32
    %340 = vector.broadcast %cst_112 : f32 to vector<16x32xf32>
    %341 = arith.addf %340, %339 : vector<16x32xf32>
    %342 = arith.divf %340, %341 : vector<16x32xf32>
    %343 = vector.extract_strided_slice %336 {offsets = [0, 32], sizes = [16, 32], strides = [1, 1]} : vector<16x128xf32> to vector<16x32xf32>
    %344 = arith.negf %343 : vector<16x32xf32>
    %345 = math.exp %344 : vector<16x32xf32>
    %cst_113 = arith.constant 1.000000e+00 : f32
    %346 = vector.broadcast %cst_113 : f32 to vector<16x32xf32>
    %347 = arith.addf %346, %345 : vector<16x32xf32>
    %348 = arith.divf %346, %347 : vector<16x32xf32>
    %349 = vector.extract_strided_slice %336 {offsets = [0, 64], sizes = [16, 32], strides = [1, 1]} : vector<16x128xf32> to vector<16x32xf32>
    %350 = math.tanh %349 : vector<16x32xf32>
    %351 = vector.extract_strided_slice %336 {offsets = [0, 96], sizes = [16, 32], strides = [1, 1]} : vector<16x128xf32> to vector<16x32xf32>
    %352 = arith.negf %351 : vector<16x32xf32>
    %353 = math.exp %352 : vector<16x32xf32>
    %cst_114 = arith.constant 1.000000e+00 : f32
    %354 = vector.broadcast %cst_114 : f32 to vector<16x32xf32>
    %355 = arith.addf %354, %353 : vector<16x32xf32>
    %356 = arith.divf %354, %355 : vector<16x32xf32>
    %357 = arith.mulf %348, %295 : vector<16x32xf32>
    %358 = arith.mulf %342, %350 : vector<16x32xf32>
    %359 = arith.addf %357, %358 : vector<16x32xf32>
    %360 = math.tanh %359 : vector<16x32xf32>
    %361 = arith.mulf %356, %360 : vector<16x32xf32>
    %362 = vector.extract_strided_slice %261 {offsets = [16, 128], sizes = [16, 128], strides = [1, 1]} : vector<48x256xf32> to vector<16x128xf32>
    %cst_115 = arith.constant dense<0.000000e+00> : vector<16x128xf32>
    %363 = tpu.matmul %325, %263, %cst_115 {dimension_numbers = #tpu.dot_dimension_numbers<[1], [0], [0], [1], [0, 0, 1, 1], [], []>} : vector<16x32xf32>, vector<32x128xf32>, vector<16x128xf32> -> vector<16x128xf32>
    %364 = arith.addf %362, %363 : vector<16x128xf32>
    %365 = vector.extract_strided_slice %364 {offsets = [0, 0], sizes = [16, 32], strides = [1, 1]} : vector<16x128xf32> to vector<16x32xf32>
    %366 = arith.negf %365 : vector<16x32xf32>
    %367 = math.exp %366 : vector<16x32xf32>
    %cst_116 = arith.constant 1.000000e+00 : f32
    %368 = vector.broadcast %cst_116 : f32 to vector<16x32xf32>
    %369 = arith.addf %368, %367 : vector<16x32xf32>
    %370 = arith.divf %368, %369 : vector<16x32xf32>
    %371 = vector.extract_strided_slice %364 {offsets = [0, 32], sizes = [16, 32], strides = [1, 1]} : vector<16x128xf32> to vector<16x32xf32>
    %372 = arith.negf %371 : vector<16x32xf32>
    %373 = math.exp %372 : vector<16x32xf32>
    %cst_117 = arith.constant 1.000000e+00 : f32
    %374 = vector.broadcast %cst_117 : f32 to vector<16x32xf32>
    %375 = arith.addf %374, %373 : vector<16x32xf32>
    %376 = arith.divf %374, %375 : vector<16x32xf32>
    %377 = vector.extract_strided_slice %364 {offsets = [0, 64], sizes = [16, 32], strides = [1, 1]} : vector<16x128xf32> to vector<16x32xf32>
    %378 = math.tanh %377 : vector<16x32xf32>
    %379 = vector.extract_strided_slice %364 {offsets = [0, 96], sizes = [16, 32], strides = [1, 1]} : vector<16x128xf32> to vector<16x32xf32>
    %380 = arith.negf %379 : vector<16x32xf32>
    %381 = math.exp %380 : vector<16x32xf32>
    %cst_118 = arith.constant 1.000000e+00 : f32
    %382 = vector.broadcast %cst_118 : f32 to vector<16x32xf32>
    %383 = arith.addf %382, %381 : vector<16x32xf32>
    %384 = arith.divf %382, %383 : vector<16x32xf32>
    %385 = arith.mulf %376, %323 : vector<16x32xf32>
    %386 = arith.mulf %370, %378 : vector<16x32xf32>
    %387 = arith.addf %385, %386 : vector<16x32xf32>
    %388 = math.tanh %387 : vector<16x32xf32>
    %389 = arith.mulf %384, %388 : vector<16x32xf32>
    %390 = vector.broadcast %264 : vector<1x32xf32> to vector<16x32xf32>
    %391 = arith.mulf %361, %390 : vector<16x32xf32>
    %cst_119 = arith.constant dense<0.000000e+00> : vector<16xf32>
    %392 = vector.multi_reduction <add>, %391, %cst_119 [1] : vector<16x32xf32> to vector<16xf32>
    %393 = vector.shape_cast %392 : vector<16xf32> to vector<16x1xf32>
    %394 = vector.broadcast %265 : vector<1x32xf32> to vector<16x32xf32>
    %395 = arith.mulf %389, %394 : vector<16x32xf32>
    %cst_120 = arith.constant dense<0.000000e+00> : vector<16xf32>
    %396 = vector.multi_reduction <add>, %395, %cst_120 [1] : vector<16x32xf32> to vector<16xf32>
    %397 = vector.shape_cast %396 : vector<16xf32> to vector<16x1xf32>
    %398 = vector.extract_strided_slice %261 {offsets = [32, 0], sizes = [16, 128], strides = [1, 1]} : vector<48x256xf32> to vector<16x128xf32>
    %cst_121 = arith.constant dense<0.000000e+00> : vector<16x128xf32>
    %399 = tpu.matmul %361, %262, %cst_121 {dimension_numbers = #tpu.dot_dimension_numbers<[1], [0], [0], [1], [0, 0, 1, 1], [], []>} : vector<16x32xf32>, vector<32x128xf32>, vector<16x128xf32> -> vector<16x128xf32>
    %400 = arith.addf %398, %399 : vector<16x128xf32>
    %401 = vector.extract_strided_slice %400 {offsets = [0, 0], sizes = [16, 32], strides = [1, 1]} : vector<16x128xf32> to vector<16x32xf32>
    %402 = arith.negf %401 : vector<16x32xf32>
    %403 = math.exp %402 : vector<16x32xf32>
    %cst_122 = arith.constant 1.000000e+00 : f32
    %404 = vector.broadcast %cst_122 : f32 to vector<16x32xf32>
    %405 = arith.addf %404, %403 : vector<16x32xf32>
    %406 = arith.divf %404, %405 : vector<16x32xf32>
    %407 = vector.extract_strided_slice %400 {offsets = [0, 32], sizes = [16, 32], strides = [1, 1]} : vector<16x128xf32> to vector<16x32xf32>
    %408 = arith.negf %407 : vector<16x32xf32>
    %409 = math.exp %408 : vector<16x32xf32>
    %cst_123 = arith.constant 1.000000e+00 : f32
    %410 = vector.broadcast %cst_123 : f32 to vector<16x32xf32>
    %411 = arith.addf %410, %409 : vector<16x32xf32>
    %412 = arith.divf %410, %411 : vector<16x32xf32>
    %413 = vector.extract_strided_slice %400 {offsets = [0, 64], sizes = [16, 32], strides = [1, 1]} : vector<16x128xf32> to vector<16x32xf32>
    %414 = math.tanh %413 : vector<16x32xf32>
    %415 = vector.extract_strided_slice %400 {offsets = [0, 96], sizes = [16, 32], strides = [1, 1]} : vector<16x128xf32> to vector<16x32xf32>
    %416 = arith.negf %415 : vector<16x32xf32>
    %417 = math.exp %416 : vector<16x32xf32>
    %cst_124 = arith.constant 1.000000e+00 : f32
    %418 = vector.broadcast %cst_124 : f32 to vector<16x32xf32>
    %419 = arith.addf %418, %417 : vector<16x32xf32>
    %420 = arith.divf %418, %419 : vector<16x32xf32>
    %421 = arith.mulf %412, %359 : vector<16x32xf32>
    %422 = arith.mulf %406, %414 : vector<16x32xf32>
    %423 = arith.addf %421, %422 : vector<16x32xf32>
    %424 = math.tanh %423 : vector<16x32xf32>
    %425 = arith.mulf %420, %424 : vector<16x32xf32>
    %426 = vector.extract_strided_slice %261 {offsets = [0, 128], sizes = [16, 128], strides = [1, 1]} : vector<48x256xf32> to vector<16x128xf32>
    %cst_125 = arith.constant dense<0.000000e+00> : vector<16x128xf32>
    %427 = tpu.matmul %389, %263, %cst_125 {dimension_numbers = #tpu.dot_dimension_numbers<[1], [0], [0], [1], [0, 0, 1, 1], [], []>} : vector<16x32xf32>, vector<32x128xf32>, vector<16x128xf32> -> vector<16x128xf32>
    %428 = arith.addf %426, %427 : vector<16x128xf32>
    %429 = vector.extract_strided_slice %428 {offsets = [0, 0], sizes = [16, 32], strides = [1, 1]} : vector<16x128xf32> to vector<16x32xf32>
    %430 = arith.negf %429 : vector<16x32xf32>
    %431 = math.exp %430 : vector<16x32xf32>
    %cst_126 = arith.constant 1.000000e+00 : f32
    %432 = vector.broadcast %cst_126 : f32 to vector<16x32xf32>
    %433 = arith.addf %432, %431 : vector<16x32xf32>
    %434 = arith.divf %432, %433 : vector<16x32xf32>
    %435 = vector.extract_strided_slice %428 {offsets = [0, 32], sizes = [16, 32], strides = [1, 1]} : vector<16x128xf32> to vector<16x32xf32>
    %436 = arith.negf %435 : vector<16x32xf32>
    %437 = math.exp %436 : vector<16x32xf32>
    %cst_127 = arith.constant 1.000000e+00 : f32
    %438 = vector.broadcast %cst_127 : f32 to vector<16x32xf32>
    %439 = arith.addf %438, %437 : vector<16x32xf32>
    %440 = arith.divf %438, %439 : vector<16x32xf32>
    %441 = vector.extract_strided_slice %428 {offsets = [0, 64], sizes = [16, 32], strides = [1, 1]} : vector<16x128xf32> to vector<16x32xf32>
    %442 = math.tanh %441 : vector<16x32xf32>
    %443 = vector.extract_strided_slice %428 {offsets = [0, 96], sizes = [16, 32], strides = [1, 1]} : vector<16x128xf32> to vector<16x32xf32>
    %444 = arith.negf %443 : vector<16x32xf32>
    %445 = math.exp %444 : vector<16x32xf32>
    %cst_128 = arith.constant 1.000000e+00 : f32
    %446 = vector.broadcast %cst_128 : f32 to vector<16x32xf32>
    %447 = arith.addf %446, %445 : vector<16x32xf32>
    %448 = arith.divf %446, %447 : vector<16x32xf32>
    %449 = arith.mulf %440, %387 : vector<16x32xf32>
    %450 = arith.mulf %434, %442 : vector<16x32xf32>
    %451 = arith.addf %449, %450 : vector<16x32xf32>
    %452 = math.tanh %451 : vector<16x32xf32>
    %453 = arith.mulf %448, %452 : vector<16x32xf32>
    %454 = vector.broadcast %264 : vector<1x32xf32> to vector<16x32xf32>
    %455 = arith.mulf %425, %454 : vector<16x32xf32>
    %cst_129 = arith.constant dense<0.000000e+00> : vector<16xf32>
    %456 = vector.multi_reduction <add>, %455, %cst_129 [1] : vector<16x32xf32> to vector<16xf32>
    %457 = vector.shape_cast %456 : vector<16xf32> to vector<16x1xf32>
    %458 = vector.broadcast %265 : vector<1x32xf32> to vector<16x32xf32>
    %459 = arith.mulf %453, %458 : vector<16x32xf32>
    %cst_130 = arith.constant dense<0.000000e+00> : vector<16xf32>
    %460 = vector.multi_reduction <add>, %459, %cst_130 [1] : vector<16x32xf32> to vector<16xf32>
    %461 = vector.shape_cast %460 : vector<16xf32> to vector<16x1xf32>
    %c0_131 = arith.constant 0 : index
    %c0_132 = arith.constant 0 : index
    %462 = vector.load %arg16[%c0_131, %c0_132] : memref<1x1xf32, #tpu.memory_space<vmem>>, vector<1x1xf32>
    %463 = arith.addf %329, %461 : vector<16x1xf32>
    %464 = vector.broadcast %462 : vector<1x1xf32> to vector<16x1xf32>
    %465 = arith.addf %463, %464 : vector<16x1xf32>
    %466 = arith.addf %393, %397 : vector<16x1xf32>
    %467 = vector.broadcast %462 : vector<1x1xf32> to vector<16x1xf32>
    %468 = arith.addf %466, %467 : vector<16x1xf32>
    %469 = arith.addf %457, %333 : vector<16x1xf32>
    %470 = vector.broadcast %462 : vector<1x1xf32> to vector<16x1xf32>
    %471 = arith.addf %469, %470 : vector<16x1xf32>
    %472 = arith.maximumf %465, %468 : vector<16x1xf32>
    %473 = arith.maximumf %472, %471 : vector<16x1xf32>
    %474 = arith.subf %465, %473 : vector<16x1xf32>
    %475 = math.exp %474 : vector<16x1xf32>
    %476 = arith.subf %468, %473 : vector<16x1xf32>
    %477 = math.exp %476 : vector<16x1xf32>
    %478 = arith.subf %471, %473 : vector<16x1xf32>
    %479 = math.exp %478 : vector<16x1xf32>
    %480 = arith.addf %475, %477 : vector<16x1xf32>
    %481 = arith.addf %480, %479 : vector<16x1xf32>
    %482 = tpu.reciprocal %481 : vector<16x1xf32> -> vector<16x1xf32>
    %483 = arith.mulf %475, %482 : vector<16x1xf32>
    %c0_133 = arith.constant 0 : index
    %c0_134 = arith.constant 0 : index
    %484 = vector.load %arg24[%c0_133, %c0_134] : memref<48x32xf32, #tpu.memory_space<vmem>>, vector<16x32xf32>
    %485 = vector.broadcast %483 : vector<16x1xf32> to vector<16x32xf32>
    %486 = arith.mulf %485, %484 : vector<16x32xf32>
    %487 = arith.mulf %477, %482 : vector<16x1xf32>
    %c16_135 = arith.constant 16 : index
    %c0_136 = arith.constant 0 : index
    %488 = vector.load %arg24[%c16_135, %c0_136] : memref<48x32xf32, #tpu.memory_space<vmem>>, vector<16x32xf32>
    %489 = vector.broadcast %487 : vector<16x1xf32> to vector<16x32xf32>
    %490 = arith.mulf %489, %488 : vector<16x32xf32>
    %491 = arith.addf %486, %490 : vector<16x32xf32>
    %492 = arith.mulf %479, %482 : vector<16x1xf32>
    %c32_137 = arith.constant 32 : index
    %c0_138 = arith.constant 0 : index
    %493 = vector.load %arg24[%c32_137, %c0_138] : memref<48x32xf32, #tpu.memory_space<vmem>>, vector<16x32xf32>
    %494 = vector.broadcast %492 : vector<16x1xf32> to vector<16x32xf32>
    %495 = arith.mulf %494, %493 : vector<16x32xf32>
    %496 = arith.addf %491, %495 : vector<16x32xf32>
    %c0_139 = arith.constant 0 : index
    %c0_140 = arith.constant 0 : index
    %497 = vector.load %arg5[%c0_139, %c0_140] : memref<2x16xf32, #tpu.memory_space<vmem>>, vector<2x16xf32>
    %498 = arith.truncf %497 : vector<2x16xf32> to vector<2x16xbf16>
    %499 = arith.truncf %496 : vector<16x32xf32> to vector<16x32xbf16>
    %cst_141 = arith.constant dense<0.000000e+00> : vector<2x32xf32>
    %500 = tpu.matmul %498, %499, %cst_141 {dimension_numbers = #tpu.dot_dimension_numbers<[1], [0], [0], [1], [0, 0, 1, 1], [], []>} : vector<2x16xbf16>, vector<16x32xbf16>, vector<2x32xf32> -> vector<2x32xf32>
    %c0_142 = arith.constant 0 : index
    %c0_143 = arith.constant 0 : index
    %501 = vector.load %arg17[%c0_142, %c0_143] : memref<32x32xf32, #tpu.memory_space<vmem>>, vector<32x32xf32>
    %cst_144 = arith.constant dense<0.000000e+00> : vector<2x32xf32>
    %502 = tpu.matmul %500, %501, %cst_144 {dimension_numbers = #tpu.dot_dimension_numbers<[1], [0], [0], [1], [0, 0, 1, 1], [], []>} : vector<2x32xf32>, vector<32x32xf32>, vector<2x32xf32> -> vector<2x32xf32>
    %c0_145 = arith.constant 0 : index
    %c0_146 = arith.constant 0 : index
    %503 = vector.load %arg18[%c0_145, %c0_146] : memref<1x32xf32, #tpu.memory_space<vmem>>, vector<1x32xf32>
    %504 = vector.broadcast %503 : vector<1x32xf32> to vector<2x32xf32>
    %505 = arith.addf %502, %504 : vector<2x32xf32>
    %cst_147 = arith.constant 0.000000e+00 : f32
    %506 = vector.broadcast %cst_147 : f32 to vector<2x32xf32>
    %507 = arith.maximumf %505, %506 : vector<2x32xf32>
    %c0_148 = arith.constant 0 : index
    %c0_149 = arith.constant 0 : index
    %508 = vector.load %arg19[%c0_148, %c0_149] : memref<32x16xf32, #tpu.memory_space<vmem>>, vector<32x16xf32>
    %cst_150 = arith.constant dense<0.000000e+00> : vector<2x16xf32>
    %509 = tpu.matmul %507, %508, %cst_150 {dimension_numbers = #tpu.dot_dimension_numbers<[1], [0], [0], [1], [0, 0, 1, 1], [], []>} : vector<2x32xf32>, vector<32x16xf32>, vector<2x16xf32> -> vector<2x16xf32>
    %c0_151 = arith.constant 0 : index
    %c0_152 = arith.constant 0 : index
    %510 = vector.load %arg20[%c0_151, %c0_152] : memref<1x16xf32, #tpu.memory_space<vmem>>, vector<1x16xf32>
    %511 = vector.broadcast %510 : vector<1x16xf32> to vector<2x16xf32>
    %512 = arith.addf %509, %511 : vector<2x16xf32>
    %cst_153 = arith.constant dense<0.000000e+00> : vector<2xf32>
    %513 = vector.multi_reduction <add>, %512, %cst_153 [1] : vector<2x16xf32> to vector<2xf32>
    %514 = vector.shape_cast %513 : vector<2xf32> to vector<2x1xf32>
    %cst_154 = arith.constant 1.600000e+01 : f32
    %515 = vector.broadcast %cst_154 : f32 to vector<2x1xf32>
    %516 = arith.divf %514, %515 : vector<2x1xf32>
    %517 = vector.broadcast %516 : vector<2x1xf32> to vector<2x16xf32>
    %518 = arith.subf %512, %517 : vector<2x16xf32>
    %519 = arith.mulf %518, %518 : vector<2x16xf32>
    %cst_155 = arith.constant dense<0.000000e+00> : vector<2xf32>
    %520 = vector.multi_reduction <add>, %519, %cst_155 [1] : vector<2x16xf32> to vector<2xf32>
    %521 = vector.shape_cast %520 : vector<2xf32> to vector<2x1xf32>
    %cst_156 = arith.constant 1.600000e+01 : f32
    %522 = vector.broadcast %cst_156 : f32 to vector<2x1xf32>
    %523 = arith.divf %521, %522 : vector<2x1xf32>
    %524 = vector.broadcast %516 : vector<2x1xf32> to vector<2x16xf32>
    %525 = arith.subf %512, %524 : vector<2x16xf32>
    %cst_157 = arith.constant 9.99999974E-6 : f32
    %526 = vector.broadcast %cst_157 : f32 to vector<2x1xf32>
    %527 = arith.addf %523, %526 : vector<2x1xf32>
    %528 = math.rsqrt %527 : vector<2x1xf32>
    %529 = vector.broadcast %528 : vector<2x1xf32> to vector<2x16xf32>
    %530 = arith.mulf %525, %529 : vector<2x16xf32>
    %c0_158 = arith.constant 0 : index
    %c0_159 = arith.constant 0 : index
    %531 = vector.load %arg21[%c0_158, %c0_159] : memref<1x16xf32, #tpu.memory_space<vmem>>, vector<1x16xf32>
    %532 = vector.broadcast %531 : vector<1x16xf32> to vector<2x16xf32>
    %533 = arith.mulf %530, %532 : vector<2x16xf32>
    %c0_160 = arith.constant 0 : index
    %c0_161 = arith.constant 0 : index
    %534 = vector.load %arg22[%c0_160, %c0_161] : memref<1x16xf32, #tpu.memory_space<vmem>>, vector<1x16xf32>
    %535 = vector.broadcast %534 : vector<1x16xf32> to vector<2x16xf32>
    %536 = arith.addf %533, %535 : vector<2x16xf32>
    %c0_162 = arith.constant 0 : index
    %c0_163 = arith.constant 0 : index
    %537 = vector.load %arg23[%c0_162, %c0_163] : memref<2x16xf32, #tpu.memory_space<vmem>>, vector<2x16xf32>
    tpu.vector_store %arg23[%c0_162, %c0_163], %536 {strides = array<i32>} : memref<2x16xf32, #tpu.memory_space<vmem>>, vector<2x16xf32>,
    return
  }
}

</mosaic_0001>

<llo_original>
// kernel: tpu_custom_call.1
$region0: #{tpu_custom_call.1}
  #allocation0 [shape = 'u32[]', space=smem, size = 0x4, offset = 0x4, fixed_abs, tag = 'smem constant byte address 0x4 - core index']
  #allocation1 [shape = 'u32[144,128]{1,0:T(1,128)}', space=vmem, size = 0x12000, scoped, tag = 'internal scratch']
  #allocation2 [shape = 'f32[48,32]{1,0:T(8,128)}', space=vmem, size = 0x6000, scoped, tag = 'scratch operand']
  #allocation3 [shape = 'f32[1,1]{1,0:T(1,128)S(1)}', space=vmem, size = 0x200, scoped, tag = 'scoped memory for tpu_custom_call.1']
  %s0 = inlined_call_operand.hbm [shape: f32[16,32], index: 0, kind: input, shape index: {}]
  %s1 = inlined_call_operand.hbm [shape: f32[16,16], index: 1, kind: input, shape index: {}]
  %s2 = inlined_call_operand.hbm [shape: f32[2,16,16], index: 2, kind: input, shape index: {}]
  %s3 = inlined_call_operand.hbm [shape: f32[16], index: 3, kind: input, shape index: {}]
  %s4 = inlined_call_operand.hbm [shape: f32[16], index: 4, kind: input, shape index: {}]
  %s5 = inlined_call_operand.hbm [shape: f32[2,16], index: 5, kind: input, shape index: {}]
  %s6 = inlined_call_operand.vmem [shape: f32[2,32,128], index: 6, kind: input, shape index: {}]
  %s7 = inlined_call_operand.hbm [shape: f32[2,32,32], index: 7, kind: input, shape index: {}]
  %s8 = inlined_call_operand.hbm [shape: f32[2,1,32], index: 8, kind: input, shape index: {}]
  %s9 = inlined_call_operand.hbm [shape: f32[2,1,32], index: 9, kind: input, shape index: {}]
  %s10 = inlined_call_operand.hbm [shape: f32[32,256], index: 10, kind: input, shape index: {}]
  %s11 = inlined_call_operand.hbm [shape: f32[1,256], index: 11, kind: input, shape index: {}]
  %s12 = inlined_call_operand.vmem [shape: f32[32,128], index: 12, kind: input, shape index: {}]
  %s13 = inlined_call_operand.hbm [shape: f32[32,128], index: 13, kind: input, shape index: {}]
  %s14 = inlined_call_operand.hbm [shape: f32[1,32], index: 14, kind: input, shape index: {}]
  %s15 = inlined_call_operand.hbm [shape: f32[1,32], index: 15, kind: input, shape index: {}]
  %s16 = inlined_call_operand.<no memory space> [shape: f32[1,1], index: 16, kind: input, shape index: {}]
  %s17 = inlined_call_operand.hbm [shape: f32[32,32], index: 17, kind: input, shape index: {}]
  %s18 = inlined_call_operand.vmem [shape: f32[1,32], index: 18, kind: input, shape index: {}]
  %s19 = inlined_call_operand.vmem [shape: f32[32,16], index: 19, kind: input, shape index: {}]
  %s20 = inlined_call_operand.vmem [shape: f32[1,16], index: 20, kind: input, shape index: {}]
  %s21 = inlined_call_operand.vmem [shape: f32[1,16], index: 21, kind: input, shape index: {}]
  %s22 = inlined_call_operand.vmem [shape: f32[1,16], index: 22, kind: input, shape index: {}]
  %s23 = inlined_call_operand.hbm [shape: f32[2,16], index: 23, kind: output, shape index: {}]
  %s24 = sld [smem:[#allocation0]]
  $region162: #{tpu_custom_call.1} parent=0
    _
  %s26 = ssub.s32 1, %s24
  %s27 = scalar_select 0, %s26, %s24
  %v28 = vstv %s16
  %29 = vst [vmem:[#allocation3] sm:$0x1] %v28
  $region1: #{tpu_custom_call.1} parent=0
    #allocation4 [shape = 'u8[8192]{0}', space=vmem, size = 0x2000, scoped, tag = 'input window, operand 0, single buffered']
    #allocation5 [shape = 's32[1]{0}', space=sflag, size = 0x4, scoped, tag = 'scoped memory for tpu_custom_call.1']
    #allocation6 [shape = 's32[1]{0}', space=sflag, size = 0x4, scoped, tag = 'scoped memory for tpu_custom_call.1']
    #allocation7 [shape = 's32[1]{0}', space=sflag, size = 0x4, scoped, tag = 'scoped memory for tpu_custom_call.1']
    #allocation8 [shape = 'u8[8192]{0}', space=vmem, size = 0x2000, scoped, tag = 'input window, operand 1, single buffered']
    #allocation9 [shape = 's32[1]{0}', space=sflag, size = 0x4, scoped, tag = 'scoped memory for tpu_custom_call.1']
    #allocation10 [shape = 'u8[16384]{0}', space=vmem, size = 0x4000, scoped, tag = 'input window, operand 2, single buffered']
    #allocation11 [shape = 'u8[512]{0}', space=smem, size = 0x200, scoped, tag = 'input window, operand 3, single buffered']
    #allocation12 [shape = 'u8[512]{0}', space=smem, size = 0x200, scoped, tag = 'input window, operand 4, single buffered']
    #allocation13 [shape = 's32[1]{0}', space=sflag, size = 0x4, scoped, tag = 'scoped memory for tpu_custom_call.1']
    #allocation14 [shape = 'u8[1024]{0}', space=vmem, size = 0x400, scoped, tag = 'input window, operand 5, single buffered']
    #allocation15 [shape = 's32[1]{0}', space=sflag, size = 0x4, scoped, tag = 'scoped memory for tpu_custom_call.1']
    #allocation16 [shape = 'u8[32768]{0}', space=vmem, size = 0x8000, scoped, tag = 'input window, operand 7, single buffered']
    #allocation17 [shape = 'u8[1024]{0}', space=vmem, size = 0x400, scoped, tag = 'input window, operand 8, single buffered']
    #allocation18 [shape = 's32[1]{0}', space=sflag, size = 0x4, scoped, tag = 'scoped memory for tpu_custom_call.1']
    #allocation19 [shape = 'u8[1024]{0}', space=vmem, size = 0x400, scoped, tag = 'input window, operand 9, single buffered']
    #allocation20 [shape = 'u8[32768]{0}', space=vmem, size = 0x8000, scoped, tag = 'input window, operand 10, single buffered']
    #allocation21 [shape = 's32[1]{0}', space=sflag, size = 0x4, scoped, tag = 'scoped memory for tpu_custom_call.1']
    #allocation22 [shape = 'u8[1024]{0}', space=vmem, size = 0x400, scoped, tag = 'input window, operand 11, single buffered']
    #allocation23 [shape = 'u8[16384]{0}', space=vmem, size = 0x4000, scoped, tag = 'input window, operand 13, single buffered']
    #allocation24 [shape = 's32[1]{0}', space=sflag, size = 0x4, scoped, tag = 'scoped memory for tpu_custom_call.1']
    #allocation25 [shape = 'u8[512]{0}', space=vmem, size = 0x400, scoped, tag = 'input window, operand 14, single buffered']
    #allocation26 [shape = 'u8[512]{0}', space=vmem, size = 0x400, scoped, tag = 'input window, operand 15, single buffered']
    #allocation27 [shape = 's32[1]{0}', space=sflag, size = 0x4, scoped, tag = 'scoped memory for tpu_custom_call.1']
    #allocation28 [shape = 'u8[16384]{0}', space=vmem, size = 0x4000, scoped, tag = 'input window, operand 17, single buffered']
    #allocation29 [shape = 'u8[1024]{0}', space=vmem, size = 0x400, scoped, tag = 'output window, operand 0, single buffered']
    %30 = vsyncpa [#allocation5], 0
    %31 = vsyncpa [#allocation9], 0
    %32 = vsyncpa [#allocation7], 0
    %33 = vsyncpa [#allocation13], 0
    %34 = vsyncpa [#allocation15], 0
    %35 = vsyncpa [#allocation18], 0
    %36 = vsyncpa [#allocation21], 0
    %37 = vsyncpa [#allocation24], 0
    %38 = vsyncpa [#allocation27], 0
    %39 = vsyncpa [#allocation6], 0
    // Predicated region
    $region2: #{tpu_custom_call.1} parent=1 // pred_check
      _
    $region3: #{tpu_custom_call.1} parent=1 // pred_check_branch
      %41 = sbr.rel (0) target = $region5
    $region4: #{tpu_custom_call.1} parent=1 // pred_region
      %s43 = ssub.s32 256, 256
      %44 = vsyncadd [#allocation5], %s43
      %s45 = sshll.u32 [#allocation4], 4
      %s46 = int_to_ptr.vmem [resolvable:$true] %s45
      %51 = dma.hbm_to_vmem [thread:$0]  %s0, 256, %s46, [#allocation5], 128, 128, 8
    $region5: #{tpu_custom_call.1} parent=1 // pred_fallthru
      _
    // Predicated region
    $region6: #{tpu_custom_call.1} parent=1 // pred_check
      _
    $region7: #{tpu_custom_call.1} parent=1 // pred_check_branch
      %53 = sbr.rel (0) target = $region9
    $region8: #{tpu_custom_call.1} parent=1 // pred_region
      %s55 = ssub.s32 256, 256
      %56 = vsyncadd [#allocation9], %s55
      %s57 = sshll.u32 [#allocation8], 4
      %s58 = int_to_ptr.vmem [resolvable:$true] %s57
      %63 = dma.hbm_to_vmem [thread:$0]  %s1, 256, %s58, [#allocation9], 128, 128, 8
    $region9: #{tpu_custom_call.1} parent=1 // pred_fallthru
      _
    // Predicated region
    $region10: #{tpu_custom_call.1} parent=1 // pred_check
      _
    $region11: #{tpu_custom_call.1} parent=1 // pred_check_branch
      %65 = sbr.rel (0) target = $region13
    $region12: #{tpu_custom_call.1} parent=1 // pred_region
      %s67 = ssub.s32 512, 512
      %68 = vsyncadd [#allocation9], %s67
      %s69 = sshll.u32 [#allocation10], 4
      %s70 = int_to_ptr.vmem [resolvable:$true] %s69
      %75 = dma.hbm_to_vmem [thread:$0]  %s2, 512, %s70, [#allocation9], 128, 128, 8
    $region13: #{tpu_custom_call.1} parent=1 // pred_fallthru
      _
    // Predicated region
    $region14: #{tpu_custom_call.1} parent=1 // pred_check
      _
    $region15: #{tpu_custom_call.1} parent=1 // pred_check_branch
      %77 = sbr.rel (0) target = $region17
    $region16: #{tpu_custom_call.1} parent=1 // pred_region
      %s79 = ssub.s32 16, 16
      %80 = vsyncadd [#allocation7], %s79
      %83 = dma.hbm_to_smem %s3, 16, [#allocation11], [#allocation7]
    $region17: #{tpu_custom_call.1} parent=1 // pred_fallthru
      _
    // Predicated region
    $region18: #{tpu_custom_call.1} parent=1 // pred_check
      _
    $region19: #{tpu_custom_call.1} parent=1 // pred_check_branch
      %85 = sbr.rel (0) target = $region21
    $region20: #{tpu_custom_call.1} parent=1 // pred_region
      %s87 = ssub.s32 16, 16
      %88 = vsyncadd [#allocation13], %s87
      %91 = dma.hbm_to_smem %s4, 16, [#allocation12], [#allocation13]
    $region21: #{tpu_custom_call.1} parent=1 // pred_fallthru
      _
    // Predicated region
    $region22: #{tpu_custom_call.1} parent=1 // pred_check
      _
    $region23: #{tpu_custom_call.1} parent=1 // pred_check_branch
      %93 = sbr.rel (0) target = $region25
    $region24: #{tpu_custom_call.1} parent=1 // pred_region
      %s95 = ssub.s32 32, 32
      %96 = vsyncadd [#allocation15], %s95
      %s98 = sshll.u32 [#allocation14], 4
      %s99 = int_to_ptr.vmem [resolvable:$true] %s98
      %101 = dma.hbm_to_vmem [thread:$0]  %s5, 32, %s99, [#allocation15]
    $region25: #{tpu_custom_call.1} parent=1 // pred_fallthru
      _
    // Predicated region
    $region26: #{tpu_custom_call.1} parent=1 // pred_check
      _
    $region27: #{tpu_custom_call.1} parent=1 // pred_check_branch
      %103 = sbr.rel (0) target = $region29
    $region28: #{tpu_custom_call.1} parent=1 // pred_region
      _
    $region29: #{tpu_custom_call.1} parent=1 // pred_fallthru
      _
    // Predicated region
    $region30: #{tpu_custom_call.1} parent=1 // pred_check
      _
    $region31: #{tpu_custom_call.1} parent=1 // pred_check_branch
      %105 = sbr.rel (0) target = $region33
    $region32: #{tpu_custom_call.1} parent=1 // pred_region
      %s107 = ssub.s32 1024, 1024
      %108 = vsyncadd [#allocation15], %s107
      %s109 = sshll.u32 [#allocation16], 4
      %s110 = int_to_ptr.vmem [resolvable:$true] %s109
      %115 = dma.hbm_to_vmem [thread:$0]  %s7, 1024, %s110, [#allocation15], 128, 128, 8
    $region33: #{tpu_custom_call.1} parent=1 // pred_fallthru
      _
    // Predicated region
    $region34: #{tpu_custom_call.1} parent=1 // pred_check
      _
    $region35: #{tpu_custom_call.1} parent=1 // pred_check_branch
      %117 = sbr.rel (0) target = $region37
    $region36: #{tpu_custom_call.1} parent=1 // pred_region
      %s119 = ssub.s32 32, 32
      %120 = vsyncadd [#allocation18], %s119
      %s121 = sshll.u32 [#allocation17], 4
      %s122 = int_to_ptr.vmem [resolvable:$true] %s121
      %127 = dma.hbm_to_vmem [thread:$0]  %s8, 32, %s122, [#allocation18], 16, 16, 1
    $region37: #{tpu_custom_call.1} parent=1 // pred_fallthru
      _
    // Predicated region
    $region38: #{tpu_custom_call.1} parent=1 // pred_check
      _
    $region39: #{tpu_custom_call.1} parent=1 // pred_check_branch
      %129 = sbr.rel (0) target = $region41
    $region40: #{tpu_custom_call.1} parent=1 // pred_region
      %s131 = ssub.s32 32, 32
      %132 = vsyncadd [#allocation18], %s131
      %s133 = sshll.u32 [#allocation19], 4
      %s134 = int_to_ptr.vmem [resolvable:$true] %s133
      %139 = dma.hbm_to_vmem [thread:$0]  %s9, 32, %s134, [#allocation18], 16, 16, 1
    $region41: #{tpu_custom_call.1} parent=1 // pred_fallthru
      _
    // Predicated region
    $region42: #{tpu_custom_call.1} parent=1 // pred_check
      _
    $region43: #{tpu_custom_call.1} parent=1 // pred_check_branch
      %141 = sbr.rel (0) target = $region45
    $region44: #{tpu_custom_call.1} parent=1 // pred_region
      %s143 = ssub.s32 1024, 1024
      %144 = vsyncadd [#allocation21], %s143
      %s145 = sshll.u32 [#allocation20], 4
      %s146 = int_to_ptr.vmem [resolvable:$true] %s145
      %151 = dma.hbm_to_vmem [thread:$0]  %s10, 1024, %s146, [#allocation21], 256, 256, 16
    $region45: #{tpu_custom_call.1} parent=1 // pred_fallthru
      _
    // Predicated region
    $region46: #{tpu_custom_call.1} parent=1 // pred_check
      _
    $region47: #{tpu_custom_call.1} parent=1 // pred_check_branch
      %153 = sbr.rel (0) target = $region49
    $region48: #{tpu_custom_call.1} parent=1 // pred_region
      %s155 = ssub.s32 32, 32
      %156 = vsyncadd [#allocation21], %s155
      %s158 = sshll.u32 [#allocation22], 4
      %s159 = int_to_ptr.vmem [resolvable:$true] %s158
      %161 = dma.hbm_to_vmem [thread:$0]  %s11, 32, %s159, [#allocation21]
    $region49: #{tpu_custom_call.1} parent=1 // pred_fallthru
      _
    // Predicated region
    $region50: #{tpu_custom_call.1} parent=1 // pred_check
      _
    $region51: #{tpu_custom_call.1} parent=1 // pred_check_branch
      %163 = sbr.rel (0) target = $region53
    $region52: #{tpu_custom_call.1} parent=1 // pred_region
      _
    $region53: #{tpu_custom_call.1} parent=1 // pred_fallthru
      _
    // Predicated region
    $region54: #{tpu_custom_call.1} parent=1 // pred_check
      _
    $region55: #{tpu_custom_call.1} parent=1 // pred_check_branch
      %165 = sbr.rel (0) target = $region57
    $region56: #{tpu_custom_call.1} parent=1 // pred_region
      %s167 = ssub.s32 512, 512
      %168 = vsyncadd [#allocation24], %s167
      %s169 = sshll.u32 [#allocation23], 4
      %s170 = int_to_ptr.vmem [resolvable:$true] %s169
      %175 = dma.hbm_to_vmem [thread:$0]  %s13, 512, %s170, [#allocation24], 128, 128, 8
    $region57: #{tpu_custom_call.1} parent=1 // pred_fallthru
      _
    // Predicated region
    $region58: #{tpu_custom_call.1} parent=1 // pred_check
      _
    $region59: #{tpu_custom_call.1} parent=1 // pred_check_branch
      %177 = sbr.rel (0) target = $region61
    $region60: #{tpu_custom_call.1} parent=1 // pred_region
      %s179 = ssub.s32 16, 16
      %180 = vsyncadd [#allocation24], %s179
      %s182 = sshll.u32 [#allocation25], 4
      %s183 = int_to_ptr.vmem [resolvable:$true] %s182
      %185 = dma.hbm_to_vmem [thread:$0]  %s14, 16, %s183, [#allocation24]
    $region61: #{tpu_custom_call.1} parent=1 // pred_fallthru
      _
    // Predicated region
    $region62: #{tpu_custom_call.1} parent=1 // pred_check
      _
    $region63: #{tpu_custom_call.1} parent=1 // pred_check_branch
      %187 = sbr.rel (0) target = $region65
    $region64: #{tpu_custom_call.1} parent=1 // pred_region
      %s189 = ssub.s32 16, 16
      %190 = vsyncadd [#allocation27], %s189
      %s192 = sshll.u32 [#allocation26], 4
      %s193 = int_to_ptr.vmem [resolvable:$true] %s192
      %195 = dma.hbm_to_vmem [thread:$0]  %s15, 16, %s193, [#allocation27]
    $region65: #{tpu_custom_call.1} parent=1 // pred_fallthru
      _
    // Predicated region
    $region66: #{tpu_custom_call.1} parent=1 // pred_check
      _
    $region67: #{tpu_custom_call.1} parent=1 // pred_check_branch
      %197 = sbr.rel (0) target = $region69
    $region68: #{tpu_custom_call.1} parent=1 // pred_region
      _
    $region69: #{tpu_custom_call.1} parent=1 // pred_fallthru
      _
    // Predicated region
    $region70: #{tpu_custom_call.1} parent=1 // pred_check
      _
    $region71: #{tpu_custom_call.1} parent=1 // pred_check_branch
      %199 = sbr.rel (0) target = $region73
    $region72: #{tpu_custom_call.1} parent=1 // pred_region
      %s201 = ssub.s32 512, 512
      %202 = vsyncadd [#allocation27], %s201
      %s203 = sshll.u32 [#allocation28], 4
      %s204 = int_to_ptr.vmem [resolvable:$true] %s203
      %209 = dma.hbm_to_vmem [thread:$0]  %s17, 512, %s204, [#allocation27], 128, 128, 8
    $region73: #{tpu_custom_call.1} parent=1 // pred_fallthru
      _
    // Predicated region
    $region74: #{tpu_custom_call.1} parent=1 // pred_check
      _
    $region75: #{tpu_custom_call.1} parent=1 // pred_check_branch
      %211 = sbr.rel (0) target = $region77
    $region76: #{tpu_custom_call.1} parent=1 // pred_region
      _
    $region77: #{tpu_custom_call.1} parent=1 // pred_fallthru
      _
    // Predicated region
    $region78: #{tpu_custom_call.1} parent=1 // pred_check
      _
    $region79: #{tpu_custom_call.1} parent=1 // pred_check_branch
      %213 = sbr.rel (0) target = $region81
    $region80: #{tpu_custom_call.1} parent=1 // pred_region
      _
    $region81: #{tpu_custom_call.1} parent=1 // pred_fallthru
      _
    // Predicated region
    $region82: #{tpu_custom_call.1} parent=1 // pred_check
      _
    $region83: #{tpu_custom_call.1} parent=1 // pred_check_branch
      %215 = sbr.rel (0) target = $region85
    $region84: #{tpu_custom_call.1} parent=1 // pred_region
      _
    $region85: #{tpu_custom_call.1} parent=1 // pred_fallthru
      _
    // Predicated region
    $region86: #{tpu_custom_call.1} parent=1 // pred_check
      _
    $region87: #{tpu_custom_call.1} parent=1 // pred_check_branch
      %217 = sbr.rel (0) target = $region89
    $region88: #{tpu_custom_call.1} parent=1 // pred_region
      _
    $region89: #{tpu_custom_call.1} parent=1 // pred_fallthru
      _
    // Predicated region
    $region90: #{tpu_custom_call.1} parent=1 // pred_check
      _
    $region91: #{tpu_custom_call.1} parent=1 // pred_check_branch
      %219 = sbr.rel (0) target = $region93
    $region92: #{tpu_custom_call.1} parent=1 // pred_region
      _
    $region93: #{tpu_custom_call.1} parent=1 // pred_fallthru
      _
    // Predicated region
    $region94: #{tpu_custom_call.1} parent=1 // pred_check
      _
    $region95: #{tpu_custom_call.1} parent=1 // pred_check_branch
      %221 = sbr.rel (0) target = $region97
    $region96: #{tpu_custom_call.1} parent=1 // pred_region
      %222 = dma.done [#allocation5], 256
    $region97: #{tpu_custom_call.1} parent=1 // pred_fallthru
      _
    // Predicated region
    $region98: #{tpu_custom_call.1} parent=1 // pred_check
      _
    $region99: #{tpu_custom_call.1} parent=1 // pred_check_branch
      %224 = sbr.rel (0) target = $region101
    $region100: #{tpu_custom_call.1} parent=1 // pred_region
      %225 = dma.done [#allocation9], 256
    $region101: #{tpu_custom_call.1} parent=1 // pred_fallthru
      _
    // Predicated region
    $region102: #{tpu_custom_call.1} parent=1 // pred_check
      _
    $region103: #{tpu_custom_call.1} parent=1 // pred_check_branch
      %227 = sbr.rel (0) target = $region105
    $region104: #{tpu_custom_call.1} parent=1 // pred_region
      %228 = dma.done [#allocation9], 512
    $region105: #{tpu_custom_call.1} parent=1 // pred_fallthru
      _
    // Predicated region
    $region106: #{tpu_custom_call.1} parent=1 // pred_check
      _
    $region107: #{tpu_custom_call.1} parent=1 // pred_check_branch
      %230 = sbr.rel (0) target = $region109
    $region108: #{tpu_custom_call.1} parent=1 // pred_region
      %231 = dma.done [#allocation7], 16
    $region109: #{tpu_custom_call.1} parent=1 // pred_fallthru
      _
    // Predicated region
    $region110: #{tpu_custom_call.1} parent=1 // pred_check
      _
    $region111: #{tpu_custom_call.1} parent=1 // pred_check_branch
      %233 = sbr.rel (0) target = $region113
    $region112: #{tpu_custom_call.1} parent=1 // pred_region
      %234 = dma.done [#allocation13], 16
    $region113: #{tpu_custom_call.1} parent=1 // pred_fallthru
      _
    // Predicated region
    $region114: #{tpu_custom_call.1} parent=1 // pred_check
      _
    $region115: #{tpu_custom_call.1} parent=1 // pred_check_branch
      %236 = sbr.rel (0) target = $region117
    $region116: #{tpu_custom_call.1} parent=1 // pred_region
      %237 = dma.done [#allocation15], 32
    $region117: #{tpu_custom_call.1} parent=1 // pred_fallthru
      _
    // Predicated region
    $region118: #{tpu_custom_call.1} parent=1 // pred_check
      _
    $region119: #{tpu_custom_call.1} parent=1 // pred_check_branch
      %239 = sbr.rel (0) target = $region121
    $region120: #{tpu_custom_call.1} parent=1 // pred_region
      %240 = dma.done [#allocation15], 1024
    $region121: #{tpu_custom_call.1} parent=1 // pred_fallthru
      _
    // Predicated region
    $region122: #{tpu_custom_call.1} parent=1 // pred_check
      _
    $region123: #{tpu_custom_call.1} parent=1 // pred_check_branch
      %242 = sbr.rel (0) target = $region125
    $region124: #{tpu_custom_call.1} parent=1 // pred_region
      %243 = dma.done [#allocation18], 32
    $region125: #{tpu_custom_call.1} parent=1 // pred_fallthru
      _
    // Predicated region
    $region126: #{tpu_custom_call.1} parent=1 // pred_check
      _
    $region127: #{tpu_custom_call.1} parent=1 // pred_check_branch
      %245 = sbr.rel (0) target = $region129
    $region128: #{tpu_custom_call.1} parent=1 // pred_region
      %246 = dma.done [#allocation18], 32
    $region129: #{tpu_custom_call.1} parent=1 // pred_fallthru
      _
    // Predicated region
    $region130: #{tpu_custom_call.1} parent=1 // pred_check
      _
    $region131: #{tpu_custom_call.1} parent=1 // pred_check_branch
      %248 = sbr.rel (0) target = $region133
    $region132: #{tpu_custom_call.1} parent=1 // pred_region
      %249 = dma.done [#allocation21], 1024
    $region133: #{tpu_custom_call.1} parent=1 // pred_fallthru
      _
    // Predicated region
    $region134: #{tpu_custom_call.1} parent=1 // pred_check
      _
    $region135: #{tpu_custom_call.1} parent=1 // pred_check_branch
      %251 = sbr.rel (0) target = $region137
    $region136: #{tpu_custom_call.1} parent=1 // pred_region
      %252 = dma.done [#allocation21], 32
    $region137: #{tpu_custom_call.1} parent=1 // pred_fallthru
      _
    // Predicated region
    $region138: #{tpu_custom_call.1} parent=1 // pred_check
      _
    $region139: #{tpu_custom_call.1} parent=1 // pred_check_branch
      %254 = sbr.rel (0) target = $region141
    $region140: #{tpu_custom_call.1} parent=1 // pred_region
      %255 = dma.done [#allocation24], 512
    $region141: #{tpu_custom_call.1} parent=1 // pred_fallthru
      _
    // Predicated region
    $region142: #{tpu_custom_call.1} parent=1 // pred_check
      _
    $region143: #{tpu_custom_call.1} parent=1 // pred_check_branch
      %257 = sbr.rel (0) target = $region145
    $region144: #{tpu_custom_call.1} parent=1 // pred_region
      %258 = dma.done [#allocation24], 16
    $region145: #{tpu_custom_call.1} parent=1 // pred_fallthru
      _
    // Predicated region
    $region146: #{tpu_custom_call.1} parent=1 // pred_check
      _
    $region147: #{tpu_custom_call.1} parent=1 // pred_check_branch
      %260 = sbr.rel (0) target = $region149
    $region148: #{tpu_custom_call.1} parent=1 // pred_region
      %261 = dma.done [#allocation27], 16
    $region149: #{tpu_custom_call.1} parent=1 // pred_fallthru
      _
    // Predicated region
    $region150: #{tpu_custom_call.1} parent=1 // pred_check
      _
    $region151: #{tpu_custom_call.1} parent=1 // pred_check_branch
      %263 = sbr.rel (0) target = $region153
    $region152: #{tpu_custom_call.1} parent=1 // pred_region
      %264 = dma.done [#allocation27], 512
    $region153: #{tpu_custom_call.1} parent=1 // pred_fallthru
      _
    %265 = sfence
    %v267 = vld [vmem:[#allocation8] sm:$0xff]
    %v268 = vld [vmem:[#allocation8 + $0x8] sm:$0xff]
    %v269 = vld [vmem:[#allocation10] sm:$0xff]
    %v270 = vld [vmem:[#allocation10 + $0x8] sm:$0xff]
    %s271 = scalar_lea.vmem [#allocation10], 16
    %v272 = vld [vmem:[%s271] sm:$0xff]
    %v273 = vld [vmem:[%s271 + $0x8] sm:$0xff]
    %vm274 = vcmask 130048
    %v275 = vsel %vm274, %v267, 0.0
    %276 = vadd.xlane.f32.xlu0 %v275
    %v277 = vpop.xlane.xlu0 %276
    %v278 = vsel %vm274, %v268, 0.0
    %279 = vadd.xlane.f32.xlu0 %v278
    %v280 = vpop.xlane.xlu0 %279
    %v281 = vmax.f32 %v277, 1.0
    %v282 = vmax.f32 %v280, 1.0
    %v283 = vrcp.pop %v281
    %v284 = vrcp.pop %v282
    %v285 = vld [vmem:[#allocation4] sm:$0xff]
    %v286 = vld [vmem:[#allocation4 + $0x8] sm:$0xff]
    %vm287 = vcmask 261120
    %288 = vst.msk [vmem:[#allocation2] sm:$0xff] %vm287, %v285
    %289 = vst.msk [vmem:[#allocation2 + $0x8] sm:$0xff] %vm287, %v286
    %v290 = vld [vmem:[#allocation2] sm:$0xff]
    %v291 = vld [vmem:[#allocation2 + $0x8] sm:$0xff]
    %v292 = vld [vmem:[%s6] sm:$0xff]
    %v293 = vld [vmem:[%s6 + $0x8] sm:$0xff]
    %v294 = vld [vmem:[%s6 + $0x10] sm:$0xff]
    %v295 = vld [vmem:[%s6 + $0x18] sm:$0xff]
    %v296 = vpack.c.bf16 %v291, %v290
    %v297 = vpack.c.bf16 %v293, %v292
    %v298 = vpack.c.bf16 %v295, %v294
    %v300 = vsel %vm287, %v296, 0
    %302 = vmatprep.subr.bf16.mxu0 0
    %303 = vmatpush1.bf16.msra.mxu0 %v297
    %304 = vmatprep.subr.bf16.mxu0 0
    %305 = vmatpush1.bf16.msra.mxu0 %v298
    %306 = vmatprep.subr.bf16.mxu0 0
    %307 = vmatpush1.bf16.msra.mxu0 0
    %308 = vmatprep.subr.bf16.mxu0 0
    %309 = vmatpush1.bf16.msra.mxu0 0
    %310 = vmatprep.subr.bf16.mxu0 0
    %311 = vmatpush1.bf16.msra.mxu0 0
    %312 = vmatprep.subr.bf16.mxu0 0
    %313 = vmatpush1.bf16.msra.mxu0 0
    %314 = vmatprep.subr.bf16.mxu0 0
    %315 = vmatpush1.bf16.msra.mxu0 0
    %316 = vmatprep.subr.bf16.mxu0 0
    %317 = vmatpush1.bf16.msra.mxu0 0
    %318 = vmatprep.subr.bf16.mxu0 0
    %319 = vmatpush1.bf16.msra.mxu0 0
    %320 = vmatprep.subr.bf16.mxu0 0
    %321 = vmatpush1.bf16.msra.mxu0 0
    %322 = vmatprep.subr.bf16.mxu0 0
    %323 = vmatpush1.bf16.msra.mxu0 0
    %324 = vmatprep.subr.bf16.mxu0 0
    %325 = vmatpush1.bf16.msra.mxu0 0
    %326 = vmatprep.subr.bf16.mxu0 0
    %327 = vmatpush1.bf16.msra.mxu0 0
    %328 = vmatprep.subr.bf16.mxu0 0
    %329 = vmatpush1.bf16.msra.mxu0 0
    %330 = vmatprep.subr.bf16.mxu0 0
    %331 = vmatpush1.bf16.msra.mxu0 0
    %332 = vmatprep.subr.bf16.mxu0 0
    %333 = vmatpush1.bf16.msra.mxu0 0
    %334 = vmatprep.mubr.bf16.mxu0 0
    %335 = vmatmul.mubr.bf16.gmra.mrb[0].mxu0 %v300
    %v336 = vpop.f32.mrb[0].mxu0
    %v337 = vadd.f32 0.0, %v336
    %v338 = vpop.f32.mrb[0].mxu0
    %v339 = vpop.f32.mrb[0].mxu0
    %v340 = vadd.f32 0.0, %v339
    %v341 = vpop.f32.mrb[0].mxu0
    %342 = vdwg.mxu0
    %s343 = sld [smem:[#allocation11]]
    %v344 = vstv %s343
    %v345 = vsub.f32 %v269, %v344
    %v346 = vsub.f32 %v270, %v344
    %v347 = vmul.f32 %v345, %v345
    %v348 = vmul.f32 %v346, %v346
    %s349 = sld [smem:[#allocation12]]
    %v350 = vstv %s349
    %v351 = vmul.f32 %v347, %v350
    %v352 = vmul.f32 %v348, %v350
    %v353 = vadd.f32 %v351, 0.0
    %v354 = vadd.f32 %v352, 0.0
    %s355 = sld [smem:[#allocation11 + $0x4]]
    %v356 = vstv %s355
    %v357 = vsub.f32 %v272, %v356
    %v358 = vsub.f32 %v273, %v356
    %v359 = vmul.f32 %v357, %v357
    %v360 = vmul.f32 %v358, %v358
    %s361 = sld [smem:[#allocation12 + $0x4]]
    %v362 = vstv %s361
    %v363 = vmul.f32 %v359, %v362
    %v364 = vmul.f32 %v360, %v362
    %v365 = vadd.f32 %v353, %v363
    %v366 = vadd.f32 %v354, %v364
    %v367 = vmul.f32 %v365, 1.442695
    %v368 = vpow.pop %v367
    %v369 = vmul.f32 %v366, 1.442695
    %v370 = vpow.pop %v369
    %v371 = vmul.f32 %v368, %v267
    %v372 = vmul.f32 %v370, %v268
    %v373 = vpack.c.bf16 %v372, %v371
    %v374 = vpack.c.bf16 %v340, %v337
    %s375 = sld [smem:[#allocation11 + $0x1]]
    %v376 = vstv %s375
    %v377 = vsub.f32 %v269, %v376
    %v378 = vsub.f32 %v270, %v376
    %v379 = vmul.f32 %v377, %v377
    %v380 = vmul.f32 %v378, %v378
    %s381 = sld [smem:[#allocation12 + $0x1]]
    %v382 = vstv %s381
    %v383 = vmul.f32 %v379, %v382
    %v384 = vmul.f32 %v380, %v382
    %v385 = vadd.f32 %v383, 0.0
    %v386 = vadd.f32 %v384, 0.0
    %s387 = sld [smem:[#allocation11 + $0x5]]
    %v388 = vstv %s387
    %v389 = vsub.f32 %v272, %v388
    %v390 = vsub.f32 %v273, %v388
    %v391 = vmul.f32 %v389, %v389
    %v392 = vmul.f32 %v390, %v390
    %s393 = sld [smem:[#allocation12 + $0x5]]
    %v394 = vstv %s393
    %v395 = vmul.f32 %v391, %v394
    %v396 = vmul.f32 %v392, %v394
    %v397 = vadd.f32 %v385, %v395
    %v398 = vadd.f32 %v386, %v396
    %v399 = vmul.f32 %v397, 1.442695
    %v400 = vpow.pop %v399
    %v401 = vmul.f32 %v398, 1.442695
    %v402 = vpow.pop %v401
    %v403 = vmul.f32 %v400, %v267
    %v404 = vmul.f32 %v402, %v268
    %v405 = vpack.c.bf16 %v404, %v403
    %407 = vrot.lane.b32.xlu0 %v374, 96
    %v408 = vpop.permute.xlu0 %407
    %v411 = vsel %vm274, %v405, 0
    %413 = vmatprep.subr.bf16.mxu0 0
    %414 = vmatpush1.bf16.msra.mxu0 %v408
    %415 = vmatprep.subr.bf16.mxu0 0
    %416 = vmatpush1.bf16.msra.mxu0 0
    %417 = vmatprep.subr.bf16.mxu0 0
    %418 = vmatpush1.bf16.msra.mxu0 0
    %419 = vmatprep.subr.bf16.mxu0 0
    %420 = vmatpush1.bf16.msra.mxu0 0
    %421 = vmatprep.subr.bf16.mxu0 0
    %422 = vmatpush1.bf16.msra.mxu0 0
    %423 = vmatprep.subr.bf16.mxu0 0
    %424 = vmatpush1.bf16.msra.mxu0 0
    %425 = vmatprep.subr.bf16.mxu0 0
    %426 = vmatpush1.bf16.msra.mxu0 0
    %427 = vmatprep.subr.bf16.mxu0 0
    %428 = vmatpush1.bf16.msra.mxu0 0
    %429 = vmatprep.subr.bf16.mxu0 0
    %430 = vmatpush1.bf16.msra.mxu0 0
    %431 = vmatprep.subr.bf16.mxu0 0
    %432 = vmatpush1.bf16.msra.mxu0 0
    %433 = vmatprep.subr.bf16.mxu0 0
    %434 = vmatpush1.bf16.msra.mxu0 0
    %435 = vmatprep.subr.bf16.mxu0 0
    %436 = vmatpush1.bf16.msra.mxu0 0
    %437 = vmatprep.subr.bf16.mxu0 0
    %438 = vmatpush1.bf16.msra.mxu0 0
    %439 = vmatprep.subr.bf16.mxu0 0
    %440 = vmatpush1.bf16.msra.mxu0 0
    %441 = vmatprep.subr.bf16.mxu0 0
    %442 = vmatpush1.bf16.msra.mxu0 0
    %443 = vmatprep.subr.bf16.mxu0 0
    %444 = vmatpush1.bf16.msra.mxu0 0
    %445 = vmatprep.mubr.bf16.mxu0 0
    %446 = vmatmul.mubr.bf16.gmra.mrb[0].mxu0 %v411
    %v447 = vpop.f32.mrb[0].mxu0
    %v448 = vadd.f32 0.0, %v447
    %v449 = vpop.f32.mrb[0].mxu0
    %v450 = vpop.f32.mrb[0].mxu0
    %v451 = vadd.f32 0.0, %v450
    %v452 = vpop.f32.mrb[0].mxu0
    %453 = vdwg.mxu0
    %v455 = vsel %vm274, %v373, 0
    %457 = vmatprep.subr.bf16.mxu0 0
    %458 = vmatpush1.bf16.msra.mxu0 %v374
    %459 = vmatprep.subr.bf16.mxu0 0
    %460 = vmatpush1.bf16.msra.mxu0 0
    %461 = vmatprep.subr.bf16.mxu0 0
    %462 = vmatpush1.bf16.msra.mxu0 0
    %463 = vmatprep.subr.bf16.mxu0 0
    %464 = vmatpush1.bf16.msra.mxu0 0
    %465 = vmatprep.subr.bf16.mxu0 0
    %466 = vmatpush1.bf16.msra.mxu0 0
    %467 = vmatprep.subr.bf16.mxu0 0
    %468 = vmatpush1.bf16.msra.mxu0 0
    %469 = vmatprep.subr.bf16.mxu0 0
    %470 = vmatpush1.bf16.msra.mxu0 0
    %471 = vmatprep.subr.bf16.mxu0 0
    %472 = vmatpush1.bf16.msra.mxu0 0
    %473 = vmatprep.subr.bf16.mxu0 0
    %474 = vmatpush1.bf16.msra.mxu0 0
    %475 = vmatprep.subr.bf16.mxu0 0
    %476 = vmatpush1.bf16.msra.mxu0 0
    %477 = vmatprep.subr.bf16.mxu0 0
    %478 = vmatpush1.bf16.msra.mxu0 0
    %479 = vmatprep.subr.bf16.mxu0 0
    %480 = vmatpush1.bf16.msra.mxu0 0
    %481 = vmatprep.subr.bf16.mxu0 0
    %482 = vmatpush1.bf16.msra.mxu0 0
    %483 = vmatprep.subr.bf16.mxu0 0
    %484 = vmatpush1.bf16.msra.mxu0 0
    %485 = vmatprep.subr.bf16.mxu0 0
    %486 = vmatpush1.bf16.msra.mxu0 0
    %487 = vmatprep.subr.bf16.mxu0 0
    %488 = vmatpush1.bf16.msra.mxu0 0
    %489 = vmatprep.mubr.bf16.mxu0 0
    %490 = vmatmul.mubr.bf16.gmra.mrb[0].mxu0 %v455
    %v491 = vpop.f32.mrb[0].mxu0
    %v492 = vadd.f32 %v448, %v491
    %v493 = vpop.f32.mrb[0].mxu0
    %v494 = vpop.f32.mrb[0].mxu0
    %v495 = vadd.f32 %v451, %v494
    %v496 = vpop.f32.mrb[0].mxu0
    %497 = vdwg.mxu0
    %s498 = sld [smem:[#allocation11 + $0x2]]
    %v499 = vstv %s498
    %v500 = vsub.f32 %v269, %v499
    %v501 = vsub.f32 %v270, %v499
    %v502 = vmul.f32 %v500, %v500
    %v503 = vmul.f32 %v501, %v501
    %s504 = sld [smem:[#allocation12 + $0x2]]
    %v505 = vstv %s504
    %v506 = vmul.f32 %v502, %v505
    %v507 = vmul.f32 %v503, %v505
    %v508 = vadd.f32 %v506, 0.0
    %v509 = vadd.f32 %v507, 0.0
    %s510 = sld [smem:[#allocation11 + $0x6]]
    %v511 = vstv %s510
    %v512 = vsub.f32 %v272, %v511
    %v513 = vsub.f32 %v273, %v511
    %v514 = vmul.f32 %v512, %v512
    %v515 = vmul.f32 %v513, %v513
    %s516 = sld [smem:[#allocation12 + $0x6]]
    %v517 = vstv %s516
    %v518 = vmul.f32 %v514, %v517
    %v519 = vmul.f32 %v515, %v517
    %v520 = vadd.f32 %v508, %v518
    %v521 = vadd.f32 %v509, %v519
    %v522 = vmul.f32 %v520, 1.442695
    %v523 = vpow.pop %v522
    %v524 = vmul.f32 %v521, 1.442695
    %v525 = vpow.pop %v524
    %v526 = vmul.f32 %v523, %v267
    %v527 = vmul.f32 %v525, %v268
    %v528 = vpack.c.bf16 %v527, %v526
    %529 = vrot.lane.b32.xlu0 %v374, 64
    %v530 = vpop.permute.xlu0 %529
    %v533 = vsel %vm274, %v528, 0
    %535 = vmatprep.subr.bf16.mxu0 0
    %536 = vmatpush1.bf16.msra.mxu0 %v530
    %537 = vmatprep.subr.bf16.mxu0 0
    %538 = vmatpush1.bf16.msra.mxu0 0
    %539 = vmatprep.subr.bf16.mxu0 0
    %540 = vmatpush1.bf16.msra.mxu0 0
    %541 = vmatprep.subr.bf16.mxu0 0
    %542 = vmatpush1.bf16.msra.mxu0 0
    %543 = vmatprep.subr.bf16.mxu0 0
    %544 = vmatpush1.bf16.msra.mxu0 0
    %545 = vmatprep.subr.bf16.mxu0 0
    %546 = vmatpush1.bf16.msra.mxu0 0
    %547 = vmatprep.subr.bf16.mxu0 0
    %548 = vmatpush1.bf16.msra.mxu0 0
    %549 = vmatprep.subr.bf16.mxu0 0
    %550 = vmatpush1.bf16.msra.mxu0 0
    %551 = vmatprep.subr.bf16.mxu0 0
    %552 = vmatpush1.bf16.msra.mxu0 0
    %553 = vmatprep.subr.bf16.mxu0 0
    %554 = vmatpush1.bf16.msra.mxu0 0
    %555 = vmatprep.subr.bf16.mxu0 0
    %556 = vmatpush1.bf16.msra.mxu0 0
    %557 = vmatprep.subr.bf16.mxu0 0
    %558 = vmatpush1.bf16.msra.mxu0 0
    %559 = vmatprep.subr.bf16.mxu0 0
    %560 = vmatpush1.bf16.msra.mxu0 0
    %561 = vmatprep.subr.bf16.mxu0 0
    %562 = vmatpush1.bf16.msra.mxu0 0
    %563 = vmatprep.subr.bf16.mxu0 0
    %564 = vmatpush1.bf16.msra.mxu0 0
    %565 = vmatprep.subr.bf16.mxu0 0
    %566 = vmatpush1.bf16.msra.mxu0 0
    %567 = vmatprep.mubr.bf16.mxu0 0
    %568 = vmatmul.mubr.bf16.gmra.mrb[0].mxu0 %v533
    %v569 = vpop.f32.mrb[0].mxu0
    %v570 = vadd.f32 0.0, %v569
    %v571 = vpop.f32.mrb[0].mxu0
    %v572 = vpop.f32.mrb[0].mxu0
    %v573 = vadd.f32 0.0, %v572
    %v574 = vpop.f32.mrb[0].mxu0
    %575 = vdwg.mxu0
    %v576 = vadd.f32 %v492, %v570
    %v577 = vadd.f32 %v495, %v573
    %s578 = sld [smem:[#allocation11 + $0x3]]
    %v579 = vstv %s578
    %v580 = vsub.f32 %v269, %v579
    %v581 = vsub.f32 %v270, %v579
    %v582 = vmul.f32 %v580, %v580
    %v583 = vmul.f32 %v581, %v581
    %s584 = sld [smem:[#allocation12 + $0x3]]
    %v585 = vstv %s584
    %v586 = vmul.f32 %v582, %v585
    %v587 = vmul.f32 %v583, %v585
    %v588 = vadd.f32 %v586, 0.0
    %v589 = vadd.f32 %v587, 0.0
    %s590 = sld [smem:[#allocation11 + $0x7]]
    %v591 = vstv %s590
    %v592 = vsub.f32 %v272, %v591
    %v593 = vsub.f32 %v273, %v591
    %v594 = vmul.f32 %v592, %v592
    %v595 = vmul.f32 %v593, %v593
    %s596 = sld [smem:[#allocation12 + $0x7]]
    %v597 = vstv %s596
    %v598 = vmul.f32 %v594, %v597
    %v599 = vmul.f32 %v595, %v597
    %v600 = vadd.f32 %v588, %v598
    %v601 = vadd.f32 %v589, %v599
    %v602 = vmul.f32 %v600, 1.442695
    %v603 = vpow.pop %v602
    %v604 = vmul.f32 %v601, 1.442695
    %v605 = vpow.pop %v604
    %v606 = vmul.f32 %v603, %v267
    %v607 = vmul.f32 %v605, %v268
    %v608 = vpack.c.bf16 %v607, %v606
    %609 = vrot.lane.b32.xlu0 %v374, 32
    %v610 = vpop.permute.xlu0 %609
    %v613 = vsel %vm274, %v608, 0
    %615 = vmatprep.subr.bf16.mxu0 0
    %616 = vmatpush1.bf16.msra.mxu0 %v610
    %617 = vmatprep.subr.bf16.mxu0 0
    %618 = vmatpush1.bf16.msra.mxu0 0
    %619 = vmatprep.subr.bf16.mxu0 0
    %620 = vmatpush1.bf16.msra.mxu0 0
    %621 = vmatprep.subr.bf16.mxu0 0
    %622 = vmatpush1.bf16.msra.mxu0 0
    %623 = vmatprep.subr.bf16.mxu0 0
    %624 = vmatpush1.bf16.msra.mxu0 0
    %625 = vmatprep.subr.bf16.mxu0 0
    %626 = vmatpush1.bf16.msra.mxu0 0
    %627 = vmatprep.subr.bf16.mxu0 0
    %628 = vmatpush1.bf16.msra.mxu0 0
    %629 = vmatprep.subr.bf16.mxu0 0
    %630 = vmatpush1.bf16.msra.mxu0 0
    %631 = vmatprep.subr.bf16.mxu0 0
    %632 = vmatpush1.bf16.msra.mxu0 0
    %633 = vmatprep.subr.bf16.mxu0 0
    %634 = vmatpush1.bf16.msra.mxu0 0
    %635 = vmatprep.subr.bf16.mxu0 0
    %636 = vmatpush1.bf16.msra.mxu0 0
    %637 = vmatprep.subr.bf16.mxu0 0
    %638 = vmatpush1.bf16.msra.mxu0 0
    %639 = vmatprep.subr.bf16.mxu0 0
    %640 = vmatpush1.bf16.msra.mxu0 0
    %641 = vmatprep.subr.bf16.mxu0 0
    %642 = vmatpush1.bf16.msra.mxu0 0
    %643 = vmatprep.subr.bf16.mxu0 0
    %644 = vmatpush1.bf16.msra.mxu0 0
    %645 = vmatprep.subr.bf16.mxu0 0
    %646 = vmatpush1.bf16.msra.mxu0 0
    %647 = vmatprep.mubr.bf16.mxu0 0
    %648 = vmatmul.mubr.bf16.gmra.mrb[0].mxu0 %v613
    %v649 = vpop.f32.mrb[0].mxu0
    %v650 = vadd.f32 0.0, %v649
    %v651 = vpop.f32.mrb[0].mxu0
    %v652 = vpop.f32.mrb[0].mxu0
    %v653 = vadd.f32 0.0, %v652
    %v654 = vpop.f32.mrb[0].mxu0
    %655 = vdwg.mxu0
    %v656 = vadd.f32 %v576, %v650
    %v657 = vadd.f32 %v577, %v653
    %v658 = vmul.f32 %v656, %v283
    %v659 = vmul.f32 %v657, %v284
    %v660 = vld [vmem:[#allocation16] sm:$0xff]
    %v661 = vld [vmem:[#allocation16 + $0x8] sm:$0xff]
    %v662 = vld [vmem:[#allocation16 + $0x10] sm:$0xff]
    %v663 = vld [vmem:[#allocation16 + $0x18] sm:$0xff]
    %v664 = vpack.c.bf16 %v661, %v660
    %v665 = vpack.c.bf16 %v663, %v662
    %666 = vmatprep.subr.bf16.mxu0 0
    %667 = vmatpush1.bf16.msra.mxu0 %v664
    %668 = vmatprep.subr.bf16.mxu0 0
    %669 = vmatpush1.bf16.msra.mxu0 %v665
    %670 = vmatprep.subr.bf16.mxu0 0
    %671 = vmatpush1.bf16.msra.mxu0 0
    %672 = vmatprep.subr.bf16.mxu0 0
    %673 = vmatpush1.bf16.msra.mxu0 0
    %674 = vmatprep.subr.bf16.mxu0 0
    %675 = vmatpush1.bf16.msra.mxu0 0
    %676 = vmatprep.subr.bf16.mxu0 0
    %677 = vmatpush1.bf16.msra.mxu0 0
    %678 = vmatprep.subr.bf16.mxu0 0
    %679 = vmatpush1.bf16.msra.mxu0 0
    %680 = vmatprep.subr.bf16.mxu0 0
    %681 = vmatpush1.bf16.msra.mxu0 0
    %682 = vmatprep.subr.bf16.mxu0 0
    %683 = vmatpush1.bf16.msra.mxu0 0
    %684 = vmatprep.subr.bf16.mxu0 0
    %685 = vmatpush1.bf16.msra.mxu0 0
    %686 = vmatprep.subr.bf16.mxu0 0
    %687 = vmatpush1.bf16.msra.mxu0 0
    %688 = vmatprep.subr.bf16.mxu0 0
    %689 = vmatpush1.bf16.msra.mxu0 0
    %690 = vmatprep.subr.bf16.mxu0 0
    %691 = vmatpush1.bf16.msra.mxu0 0
    %692 = vmatprep.subr.bf16.mxu0 0
    %693 = vmatpush1.bf16.msra.mxu0 0
    %694 = vmatprep.subr.bf16.mxu0 0
    %695 = vmatpush1.bf16.msra.mxu0 0
    %696 = vmatprep.subr.bf16.mxu0 0
    %697 = vmatpush1.bf16.msra.mxu0 0
    %698 = vmatprep.mubr.bf16.mxu0 0
    %699 = vmatmul.mubr.bf16.gmra.mrb[0].mxu0 %v300
    %v700 = vpop.f32.mrb[0].mxu0
    %v701 = vadd.f32 0.0, %v700
    %v702 = vpop.f32.mrb[0].mxu0
    %v703 = vpop.f32.mrb[0].mxu0
    %v704 = vadd.f32 0.0, %v703
    %v705 = vpop.f32.mrb[0].mxu0
    %706 = vdwg.mxu0
    %v707 = vadd.f32 %v658, %v701
    %v708 = vadd.f32 %v659, %v704
    %v709 = vld [vmem:[#allocation17] sm:$0x1]
    %v711 = vlaneseq
    %v712 = vshrl.u32 %v711, 7
    %v713 = vsub.s32 0, %v712
    %v714 = vrot.slane %v709, %v713
    %v716 = vmul.f32 %v707, %v714
    %v717 = vmul.f32 %v708, %v714
    %v718 = vld [vmem:[#allocation19] sm:$0x1]
    %v720 = vlaneseq
    %v721 = vshrl.u32 %v720, 7
    %v722 = vsub.s32 0, %v721
    %v723 = vrot.slane %v718, %v722
    %v725 = vadd.f32 %v716, %v723
    %v726 = vadd.f32 %v717, %v723
    %v727 = vmax.f32 %v725, 0.0
    %v728 = vmax.f32 %v726, 0.0
    %729 = vst.msk [vmem:[#allocation2 + $0x10] sm:$0xff] %vm287, %v727
    %730 = vst.msk [vmem:[#allocation2 + $0x18] sm:$0xff] %vm287, %v728
    %v731 = vld [vmem:[#allocation2 + $0x10] sm:$0xff]
    %v732 = vld [vmem:[#allocation2 + $0x18] sm:$0xff]
    %s733 = scalar_lea.vmem %s6, 32
    %v734 = vld [vmem:[%s733] sm:$0xff]
    %v735 = vld [vmem:[%s733 + $0x8] sm:$0xff]
    %v736 = vld [vmem:[%s733 + $0x10] sm:$0xff]
    %v737 = vld [vmem:[%s733 + $0x18] sm:$0xff]
    %v738 = vpack.c.bf16 %v732, %v731
    %v739 = vpack.c.bf16 %v735, %v734
    %v740 = vpack.c.bf16 %v737, %v736
    %v742 = vsel %vm287, %v738, 0
    %744 = vmatprep.subr.bf16.mxu0 0
    %745 = vmatpush1.bf16.msra.mxu0 %v739
    %746 = vmatprep.subr.bf16.mxu0 0
    %747 = vmatpush1.bf16.msra.mxu0 %v740
    %748 = vmatprep.subr.bf16.mxu0 0
    %749 = vmatpush1.bf16.msra.mxu0 0
    %750 = vmatprep.subr.bf16.mxu0 0
    %751 = vmatpush1.bf16.msra.mxu0 0
    %752 = vmatprep.subr.bf16.mxu0 0
    %753 = vmatpush1.bf16.msra.mxu0 0
    %754 = vmatprep.subr.bf16.mxu0 0
    %755 = vmatpush1.bf16.msra.mxu0 0
    %756 = vmatprep.subr.bf16.mxu0 0
    %757 = vmatpush1.bf16.msra.mxu0 0
    %758 = vmatprep.subr.bf16.mxu0 0
    %759 = vmatpush1.bf16.msra.mxu0 0
    %760 = vmatprep.subr.bf16.mxu0 0
    %761 = vmatpush1.bf16.msra.mxu0 0
    %762 = vmatprep.subr.bf16.mxu0 0
    %763 = vmatpush1.bf16.msra.mxu0 0
    %764 = vmatprep.subr.bf16.mxu0 0
    %765 = vmatpush1.bf16.msra.mxu0 0
    %766 = vmatprep.subr.bf16.mxu0 0
    %767 = vmatpush1.bf16.msra.mxu0 0
    %768 = vmatprep.subr.bf16.mxu0 0
    %769 = vmatpush1.bf16.msra.mxu0 0
    %770 = vmatprep.subr.bf16.mxu0 0
    %771 = vmatpush1.bf16.msra.mxu0 0
    %772 = vmatprep.subr.bf16.mxu0 0
    %773 = vmatpush1.bf16.msra.mxu0 0
    %774 = vmatprep.subr.bf16.mxu0 0
    %775 = vmatpush1.bf16.msra.mxu0 0
    %776 = vmatprep.mubr.bf16.mxu0 0
    %777 = vmatmul.mubr.bf16.gmra.mrb[0].mxu0 %v742
    %v778 = vpop.f32.mrb[0].mxu0
    %v779 = vadd.f32 0.0, %v778
    %v780 = vpop.f32.mrb[0].mxu0
    %v781 = vpop.f32.mrb[0].mxu0
    %v782 = vadd.f32 0.0, %v781
    %v783 = vpop.f32.mrb[0].mxu0
    %784 = vdwg.mxu0
    %s785 = sld [smem:[#allocation11 + $0x8]]
    %v786 = vstv %s785
    %v787 = vsub.f32 %v269, %v786
    %v788 = vsub.f32 %v270, %v786
    %v789 = vmul.f32 %v787, %v787
    %v790 = vmul.f32 %v788, %v788
    %s791 = sld [smem:[#allocation12 + $0x8]]
    %v792 = vstv %s791
    %v793 = vmul.f32 %v789, %v792
    %v794 = vmul.f32 %v790, %v792
    %v795 = vadd.f32 %v793, 0.0
    %v796 = vadd.f32 %v794, 0.0
    %s797 = sld [smem:[#allocation11 + $0xc]]
    %v798 = vstv %s797
    %v799 = vsub.f32 %v272, %v798
    %v800 = vsub.f32 %v273, %v798
    %v801 = vmul.f32 %v799, %v799
    %v802 = vmul.f32 %v800, %v800
    %s803 = sld [smem:[#allocation12 + $0xc]]
    %v804 = vstv %s803
    %v805 = vmul.f32 %v801, %v804
    %v806 = vmul.f32 %v802, %v804
    %v807 = vadd.f32 %v795, %v805
    %v808 = vadd.f32 %v796, %v806
    %v809 = vmul.f32 %v807, 1.442695
    %v810 = vpow.pop %v809
    %v811 = vmul.f32 %v808, 1.442695
    %v812 = vpow.pop %v811
    %v813 = vmul.f32 %v810, %v267
    %v814 = vmul.f32 %v812, %v268
    %v815 = vpack.c.bf16 %v814, %v813
    %v816 = vpack.c.bf16 %v782, %v779
    %s817 = sld [smem:[#allocation11 + $0x9]]
    %v818 = vstv %s817
    %v819 = vsub.f32 %v269, %v818
    %v820 = vsub.f32 %v270, %v818
    %v821 = vmul.f32 %v819, %v819
    %v822 = vmul.f32 %v820, %v820
    %s823 = sld [smem:[#allocation12 + $0x9]]
    %v824 = vstv %s823
    %v825 = vmul.f32 %v821, %v824
    %v826 = vmul.f32 %v822, %v824
    %v827 = vadd.f32 %v825, 0.0
    %v828 = vadd.f32 %v826, 0.0
    %s829 = sld [smem:[#allocation11 + $0xd]]
    %v830 = vstv %s829
    %v831 = vsub.f32 %v272, %v830
    %v832 = vsub.f32 %v273, %v830
    %v833 = vmul.f32 %v831, %v831
    %v834 = vmul.f32 %v832, %v832
    %s835 = sld [smem:[#allocation12 + $0xd]]
    %v836 = vstv %s835
    %v837 = vmul.f32 %v833, %v836
    %v838 = vmul.f32 %v834, %v836
    %v839 = vadd.f32 %v827, %v837
    %v840 = vadd.f32 %v828, %v838
    %v841 = vmul.f32 %v839, 1.442695
    %v842 = vpow.pop %v841
    %v843 = vmul.f32 %v840, 1.442695
    %v844 = vpow.pop %v843
    %v845 = vmul.f32 %v842, %v267
    %v846 = vmul.f32 %v844, %v268
    %v847 = vpack.c.bf16 %v846, %v845
    %849 = vrot.lane.b32.xlu0 %v816, 96
    %v850 = vpop.permute.xlu0 %849
    %v853 = vsel %vm274, %v847, 0
    %855 = vmatprep.subr.bf16.mxu0 0
    %856 = vmatpush1.bf16.msra.mxu0 %v850
    %857 = vmatprep.subr.bf16.mxu0 0
    %858 = vmatpush1.bf16.msra.mxu0 0
    %859 = vmatprep.subr.bf16.mxu0 0
    %860 = vmatpush1.bf16.msra.mxu0 0
    %861 = vmatprep.subr.bf16.mxu0 0
    %862 = vmatpush1.bf16.msra.mxu0 0
    %863 = vmatprep.subr.bf16.mxu0 0
    %864 = vmatpush1.bf16.msra.mxu0 0
    %865 = vmatprep.subr.bf16.mxu0 0
    %866 = vmatpush1.bf16.msra.mxu0 0
    %867 = vmatprep.subr.bf16.mxu0 0
    %868 = vmatpush1.bf16.msra.mxu0 0
    %869 = vmatprep.subr.bf16.mxu0 0
    %870 = vmatpush1.bf16.msra.mxu0 0
    %871 = vmatprep.subr.bf16.mxu0 0
    %872 = vmatpush1.bf16.msra.mxu0 0
    %873 = vmatprep.subr.bf16.mxu0 0
    %874 = vmatpush1.bf16.msra.mxu0 0
    %875 = vmatprep.subr.bf16.mxu0 0
    %876 = vmatpush1.bf16.msra.mxu0 0
    %877 = vmatprep.subr.bf16.mxu0 0
    %878 = vmatpush1.bf16.msra.mxu0 0
    %879 = vmatprep.subr.bf16.mxu0 0
    %880 = vmatpush1.bf16.msra.mxu0 0
    %881 = vmatprep.subr.bf16.mxu0 0
    %882 = vmatpush1.bf16.msra.mxu0 0
    %883 = vmatprep.subr.bf16.mxu0 0
    %884 = vmatpush1.bf16.msra.mxu0 0
    %885 = vmatprep.subr.bf16.mxu0 0
    %886 = vmatpush1.bf16.msra.mxu0 0
    %887 = vmatprep.mubr.bf16.mxu0 0
    %888 = vmatmul.mubr.bf16.gmra.mrb[0].mxu0 %v853
    %v889 = vpop.f32.mrb[0].mxu0
    %v890 = vadd.f32 0.0, %v889
    %v891 = vpop.f32.mrb[0].mxu0
    %v892 = vpop.f32.mrb[0].mxu0
    %v893 = vadd.f32 0.0, %v892
    %v894 = vpop.f32.mrb[0].mxu0
    %895 = vdwg.mxu0
    %v897 = vsel %vm274, %v815, 0
    %899 = vmatprep.subr.bf16.mxu0 0
    %900 = vmatpush1.bf16.msra.mxu0 %v816
    %901 = vmatprep.subr.bf16.mxu0 0
    %902 = vmatpush1.bf16.msra.mxu0 0
    %903 = vmatprep.subr.bf16.mxu0 0
    %904 = vmatpush1.bf16.msra.mxu0 0
    %905 = vmatprep.subr.bf16.mxu0 0
    %906 = vmatpush1.bf16.msra.mxu0 0
    %907 = vmatprep.subr.bf16.mxu0 0
    %908 = vmatpush1.bf16.msra.mxu0 0
    %909 = vmatprep.subr.bf16.mxu0 0
    %910 = vmatpush1.bf16.msra.mxu0 0
    %911 = vmatprep.subr.bf16.mxu0 0
    %912 = vmatpush1.bf16.msra.mxu0 0
    %913 = vmatprep.subr.bf16.mxu0 0
    %914 = vmatpush1.bf16.msra.mxu0 0
    %915 = vmatprep.subr.bf16.mxu0 0
    %916 = vmatpush1.bf16.msra.mxu0 0
    %917 = vmatprep.subr.bf16.mxu0 0
    %918 = vmatpush1.bf16.msra.mxu0 0
    %919 = vmatprep.subr.bf16.mxu0 0
    %920 = vmatpush1.bf16.msra.mxu0 0
    %921 = vmatprep.subr.bf16.mxu0 0
    %922 = vmatpush1.bf16.msra.mxu0 0
    %923 = vmatprep.subr.bf16.mxu0 0
    %924 = vmatpush1.bf16.msra.mxu0 0
    %925 = vmatprep.subr.bf16.mxu0 0
    %926 = vmatpush1.bf16.msra.mxu0 0
    %927 = vmatprep.subr.bf16.mxu0 0
    %928 = vmatpush1.bf16.msra.mxu0 0
    %929 = vmatprep.subr.bf16.mxu0 0
    %930 = vmatpush1.bf16.msra.mxu0 0
    %931 = vmatprep.mubr.bf16.mxu0 0
    %932 = vmatmul.mubr.bf16.gmra.mrb[0].mxu0 %v897
    %v933 = vpop.f32.mrb[0].mxu0
    %v934 = vadd.f32 %v890, %v933
    %v935 = vpop.f32.mrb[0].mxu0
    %v936 = vpop.f32.mrb[0].mxu0
    %v937 = vadd.f32 %v893, %v936
    %v938 = vpop.f32.mrb[0].mxu0
    %939 = vdwg.mxu0
    %s940 = sld [smem:[#allocation11 + $0xa]]
    %v941 = vstv %s940
    %v942 = vsub.f32 %v269, %v941
    %v943 = vsub.f32 %v270, %v941
    %v944 = vmul.f32 %v942, %v942
    %v945 = vmul.f32 %v943, %v943
    %s946 = sld [smem:[#allocation12 + $0xa]]
    %v947 = vstv %s946
    %v948 = vmul.f32 %v944, %v947
    %v949 = vmul.f32 %v945, %v947
    %v950 = vadd.f32 %v948, 0.0
    %v951 = vadd.f32 %v949, 0.0
    %s952 = sld [smem:[#allocation11 + $0xe]]
    %v953 = vstv %s952
    %v954 = vsub.f32 %v272, %v953
    %v955 = vsub.f32 %v273, %v953
    %v956 = vmul.f32 %v954, %v954
    %v957 = vmul.f32 %v955, %v955
    %s958 = sld [smem:[#allocation12 + $0xe]]
    %v959 = vstv %s958
    %v960 = vmul.f32 %v956, %v959
    %v961 = vmul.f32 %v957, %v959
    %v962 = vadd.f32 %v950, %v960
    %v963 = vadd.f32 %v951, %v961
    %v964 = vmul.f32 %v962, 1.442695
    %v965 = vpow.pop %v964
    %v966 = vmul.f32 %v963, 1.442695
    %v967 = vpow.pop %v966
    %v968 = vmul.f32 %v965, %v267
    %v969 = vmul.f32 %v967, %v268
    %v970 = vpack.c.bf16 %v969, %v968
    %971 = vrot.lane.b32.xlu0 %v816, 64
    %v972 = vpop.permute.xlu0 %971
    %v975 = vsel %vm274, %v970, 0
    %977 = vmatprep.subr.bf16.mxu0 0
    %978 = vmatpush1.bf16.msra.mxu0 %v972
    %979 = vmatprep.subr.bf16.mxu0 0
    %980 = vmatpush1.bf16.msra.mxu0 0
    %981 = vmatprep.subr.bf16.mxu0 0
    %982 = vmatpush1.bf16.msra.mxu0 0
    %983 = vmatprep.subr.bf16.mxu0 0
    %984 = vmatpush1.bf16.msra.mxu0 0
    %985 = vmatprep.subr.bf16.mxu0 0
    %986 = vmatpush1.bf16.msra.mxu0 0
    %987 = vmatprep.subr.bf16.mxu0 0
    %988 = vmatpush1.bf16.msra.mxu0 0
    %989 = vmatprep.subr.bf16.mxu0 0
    %990 = vmatpush1.bf16.msra.mxu0 0
    %991 = vmatprep.subr.bf16.mxu0 0
    %992 = vmatpush1.bf16.msra.mxu0 0
    %993 = vmatprep.subr.bf16.mxu0 0
    %994 = vmatpush1.bf16.msra.mxu0 0
    %995 = vmatprep.subr.bf16.mxu0 0
    %996 = vmatpush1.bf16.msra.mxu0 0
    %997 = vmatprep.subr.bf16.mxu0 0
    %998 = vmatpush1.bf16.msra.mxu0 0
    %999 = vmatprep.subr.bf16.mxu0 0
    %1000 = vmatpush1.bf16.msra.mxu0 0
    %1001 = vmatprep.subr.bf16.mxu0 0
    %1002 = vmatpush1.bf16.msra.mxu0 0
    %1003 = vmatprep.subr.bf16.mxu0 0
    %1004 = vmatpush1.bf16.msra.mxu0 0
    %1005 = vmatprep.subr.bf16.mxu0 0
    %1006 = vmatpush1.bf16.msra.mxu0 0
    %1007 = vmatprep.subr.bf16.mxu0 0
    %1008 = vmatpush1.bf16.msra.mxu0 0
    %1009 = vmatprep.mubr.bf16.mxu0 0
    %1010 = vmatmul.mubr.bf16.gmra.mrb[0].mxu0 %v975
    %v1011 = vpop.f32.mrb[0].mxu0
    %v1012 = vadd.f32 0.0, %v1011
    %v1013 = vpop.f32.mrb[0].mxu0
    %v1014 = vpop.f32.mrb[0].mxu0
    %v1015 = vadd.f32 0.0, %v1014
    %v1016 = vpop.f32.mrb[0].mxu0
    %1017 = vdwg.mxu0
    %v1018 = vadd.f32 %v934, %v1012
    %v1019 = vadd.f32 %v937, %v1015
    %s1020 = sld [smem:[#allocation11 + $0xb]]
    %v1021 = vstv %s1020
    %v1022 = vsub.f32 %v269, %v1021
    %v1023 = vsub.f32 %v270, %v1021
    %v1024 = vmul.f32 %v1022, %v1022
    %v1025 = vmul.f32 %v1023, %v1023
    %s1026 = sld [smem:[#allocation12 + $0xb]]
    %v1027 = vstv %s1026
    %v1028 = vmul.f32 %v1024, %v1027
    %v1029 = vmul.f32 %v1025, %v1027
    %v1030 = vadd.f32 %v1028, 0.0
    %v1031 = vadd.f32 %v1029, 0.0
    %s1032 = sld [smem:[#allocation11 + $0xf]]
    %v1033 = vstv %s1032
    %v1034 = vsub.f32 %v272, %v1033
    %v1035 = vsub.f32 %v273, %v1033
    %v1036 = vmul.f32 %v1034, %v1034
    %v1037 = vmul.f32 %v1035, %v1035
    %s1038 = sld [smem:[#allocation12 + $0xf]]
    %v1039 = vstv %s1038
    %v1040 = vmul.f32 %v1036, %v1039
    %v1041 = vmul.f32 %v1037, %v1039
    %v1042 = vadd.f32 %v1030, %v1040
    %v1043 = vadd.f32 %v1031, %v1041
    %v1044 = vmul.f32 %v1042, 1.442695
    %v1045 = vpow.pop %v1044
    %v1046 = vmul.f32 %v1043, 1.442695
    %v1047 = vpow.pop %v1046
    %v1048 = vmul.f32 %v1045, %v267
    %v1049 = vmul.f32 %v1047, %v268
    %v1050 = vpack.c.bf16 %v1049, %v1048
    %1051 = vrot.lane.b32.xlu0 %v816, 32
    %v1052 = vpop.permute.xlu0 %1051
    %v1055 = vsel %vm274, %v1050, 0
    %1057 = vmatprep.subr.bf16.mxu0 0
    %1058 = vmatpush1.bf16.msra.mxu0 %v1052
    %1059 = vmatprep.subr.bf16.mxu0 0
    %1060 = vmatpush1.bf16.msra.mxu0 0
    %1061 = vmatprep.subr.bf16.mxu0 0
    %1062 = vmatpush1.bf16.msra.mxu0 0
    %1063 = vmatprep.subr.bf16.mxu0 0
    %1064 = vmatpush1.bf16.msra.mxu0 0
    %1065 = vmatprep.subr.bf16.mxu0 0
    %1066 = vmatpush1.bf16.msra.mxu0 0
    %1067 = vmatprep.subr.bf16.mxu0 0
    %1068 = vmatpush1.bf16.msra.mxu0 0
    %1069 = vmatprep.subr.bf16.mxu0 0
    %1070 = vmatpush1.bf16.msra.mxu0 0
    %1071 = vmatprep.subr.bf16.mxu0 0
    %1072 = vmatpush1.bf16.msra.mxu0 0
    %1073 = vmatprep.subr.bf16.mxu0 0
    %1074 = vmatpush1.bf16.msra.mxu0 0
    %1075 = vmatprep.subr.bf16.mxu0 0
    %1076 = vmatpush1.bf16.msra.mxu0 0
    %1077 = vmatprep.subr.bf16.mxu0 0
    %1078 = vmatpush1.bf16.msra.mxu0 0
    %1079 = vmatprep.subr.bf16.mxu0 0
    %1080 = vmatpush1.bf16.msra.mxu0 0
    %1081 = vmatprep.subr.bf16.mxu0 0
    %1082 = vmatpush1.bf16.msra.mxu0 0
    %1083 = vmatprep.subr.bf16.mxu0 0
    %1084 = vmatpush1.bf16.msra.mxu0 0
    %1085 = vmatprep.subr.bf16.mxu0 0
    %1086 = vmatpush1.bf16.msra.mxu0 0
    %1087 = vmatprep.subr.bf16.mxu0 0
    %1088 = vmatpush1.bf16.msra.mxu0 0
    %1089 = vmatprep.mubr.bf16.mxu0 0
    %1090 = vmatmul.mubr.bf16.gmra.mrb[0].mxu0 %v1055
    %v1091 = vpop.f32.mrb[0].mxu0
    %v1092 = vadd.f32 0.0, %v1091
    %v1093 = vpop.f32.mrb[0].mxu0
    %v1094 = vpop.f32.mrb[0].mxu0
    %v1095 = vadd.f32 0.0, %v1094
    %v1096 = vpop.f32.mrb[0].mxu0
    %1097 = vdwg.mxu0
    %v1098 = vadd.f32 %v1018, %v1092
    %v1099 = vadd.f32 %v1019, %v1095
    %v1100 = vmul.f32 %v1098, %v283
    %v1101 = vmul.f32 %v1099, %v284
    %s1102 = scalar_lea.vmem [#allocation16], 32
    %v1103 = vld [vmem:[%s1102] sm:$0xff]
    %v1104 = vld [vmem:[%s1102 + $0x8] sm:$0xff]
    %v1105 = vld [vmem:[%s1102 + $0x10] sm:$0xff]
    %v1106 = vld [vmem:[%s1102 + $0x18] sm:$0xff]
    %v1107 = vpack.c.bf16 %v1104, %v1103
    %v1108 = vpack.c.bf16 %v1106, %v1105
    %1109 = vmatprep.subr.bf16.mxu0 0
    %1110 = vmatpush1.bf16.msra.mxu0 %v1107
    %1111 = vmatprep.subr.bf16.mxu0 0
    %1112 = vmatpush1.bf16.msra.mxu0 %v1108
    %1113 = vmatprep.subr.bf16.mxu0 0
    %1114 = vmatpush1.bf16.msra.mxu0 0
    %1115 = vmatprep.subr.bf16.mxu0 0
    %1116 = vmatpush1.bf16.msra.mxu0 0
    %1117 = vmatprep.subr.bf16.mxu0 0
    %1118 = vmatpush1.bf16.msra.mxu0 0
    %1119 = vmatprep.subr.bf16.mxu0 0
    %1120 = vmatpush1.bf16.msra.mxu0 0
    %1121 = vmatprep.subr.bf16.mxu0 0
    %1122 = vmatpush1.bf16.msra.mxu0 0
    %1123 = vmatprep.subr.bf16.mxu0 0
    %1124 = vmatpush1.bf16.msra.mxu0 0
    %1125 = vmatprep.subr.bf16.mxu0 0
    %1126 = vmatpush1.bf16.msra.mxu0 0
    %1127 = vmatprep.subr.bf16.mxu0 0
    %1128 = vmatpush1.bf16.msra.mxu0 0
    %1129 = vmatprep.subr.bf16.mxu0 0
    %1130 = vmatpush1.bf16.msra.mxu0 0
    %1131 = vmatprep.subr.bf16.mxu0 0
    %1132 = vmatpush1.bf16.msra.mxu0 0
    %1133 = vmatprep.subr.bf16.mxu0 0
    %1134 = vmatpush1.bf16.msra.mxu0 0
    %1135 = vmatprep.subr.bf16.mxu0 0
    %1136 = vmatpush1.bf16.msra.mxu0 0
    %1137 = vmatprep.subr.bf16.mxu0 0
    %1138 = vmatpush1.bf16.msra.mxu0 0
    %1139 = vmatprep.subr.bf16.mxu0 0
    %1140 = vmatpush1.bf16.msra.mxu0 0
    %1141 = vmatprep.mubr.bf16.mxu0 0
    %1142 = vmatmul.mubr.bf16.gmra.mrb[0].mxu0 %v742
    %v1143 = vpop.f32.mrb[0].mxu0
    %v1144 = vadd.f32 0.0, %v1143
    %v1145 = vpop.f32.mrb[0].mxu0
    %v1146 = vpop.f32.mrb[0].mxu0
    %v1147 = vadd.f32 0.0, %v1146
    %v1148 = vpop.f32.mrb[0].mxu0
    %1149 = vdwg.mxu0
    %v1150 = vadd.f32 %v1100, %v1144
    %v1151 = vadd.f32 %v1101, %v1147
    %s1152 = scalar_lea.vmem [#allocation17], 1
    %v1153 = vld [vmem:[%s1152] sm:$0x1]
    %v1155 = vlaneseq
    %v1156 = vshrl.u32 %v1155, 7
    %v1157 = vsub.s32 0, %v1156
    %v1158 = vrot.slane %v1153, %v1157
    %v1160 = vmul.f32 %v1150, %v1158
    %v1161 = vmul.f32 %v1151, %v1158
    %s1162 = scalar_lea.vmem [#allocation19], 1
    %v1163 = vld [vmem:[%s1162] sm:$0x1]
    %v1165 = vlaneseq
    %v1166 = vshrl.u32 %v1165, 7
    %v1167 = vsub.s32 0, %v1166
    %v1168 = vrot.slane %v1163, %v1167
    %v1170 = vadd.f32 %v1160, %v1168
    %v1171 = vadd.f32 %v1161, %v1168
    %1172 = vst.msk [vmem:[#allocation2 + $0x20] sm:$0xff] %vm287, %v1170
    %1173 = vst.msk [vmem:[#allocation2 + $0x28] sm:$0xff] %vm287, %v1171
    %v1174 = vld [vmem:[#allocation2] sm:$0xff]
    %v1175 = vld [vmem:[#allocation2 + $0x8] sm:$0xff]
    %v1176 = vld [vmem:[#allocation2 + $0x10] sm:$0xff]
    %v1177 = vld [vmem:[#allocation2 + $0x18] sm:$0xff]
    %v1178 = vld [vmem:[#allocation2 + $0x20] sm:$0xff]
    %v1179 = vld [vmem:[#allocation2 + $0x28] sm:$0xff]
    %v1180 = vld [vmem:[#allocation20] sm:$0xff]
    %v1181 = vld [vmem:[#allocation20 + $0x8] sm:$0xff]
    %v1182 = vld [vmem:[#allocation20 + $0x10] sm:$0xff]
    %v1183 = vld [vmem:[#allocation20 + $0x18] sm:$0xff]
    %v1184 = vld [vmem:[#allocation20 + $0x20] sm:$0xff]
    %v1185 = vld [vmem:[#allocation20 + $0x28] sm:$0xff]
    %v1186 = vld [vmem:[#allocation20 + $0x30] sm:$0xff]
    %v1187 = vld [vmem:[#allocation20 + $0x38] sm:$0xff]
    %v1188 = vpack.c.bf16 %v1175, %v1174
    %v1189 = vpack.c.bf16 %v1177, %v1176
    %v1190 = vpack.c.bf16 %v1179, %v1178
    %v1191 = vpack.c.bf16 %v1182, %v1180
    %v1192 = vpack.c.bf16 %v1183, %v1181
    %v1193 = vpack.c.bf16 %v1186, %v1184
    %v1194 = vpack.c.bf16 %v1187, %v1185
    %v1195 = vld [vmem:[#allocation22] sm:$0x3]
    %v1197 = vlaneseq
    %v1198 = vshrl.u32 %v1197, 7
    %v1199 = vsub.s32 0, %v1198
    %v1200 = vrot.slane %v1195, %v1199
    %v1201 = vlaneseq
    %v1202 = vshrl.u32 %v1201, 7
    %v1203 = vsub.s32 1, %v1202
    %v1204 = vrot.slane %v1195, %v1203
    %v1208 = vsel %vm287, %v1188, 0
    %v1211 = vsel %vm287, %v1189, 0
    %v1214 = vsel %vm287, %v1190, 0
    %1216 = vmatprep.subr.bf16.mxu0 %v1192
    %1217 = vmatpush1.bf16.msra.mxu0 %v1191
    %1218 = vmatprep.subr.bf16.mxu0 %v1194
    %1219 = vmatpush1.bf16.msra.mxu0 %v1193
    %1220 = vmatprep.subr.bf16.mxu0 0
    %1221 = vmatpush1.bf16.msra.mxu0 0
    %1222 = vmatprep.subr.bf16.mxu0 0
    %1223 = vmatpush1.bf16.msra.mxu0 0
    %1224 = vmatprep.subr.bf16.mxu0 0
    %1225 = vmatpush1.bf16.msra.mxu0 0
    %1226 = vmatprep.subr.bf16.mxu0 0
    %1227 = vmatpush1.bf16.msra.mxu0 0
    %1228 = vmatprep.subr.bf16.mxu0 0
    %1229 = vmatpush1.bf16.msra.mxu0 0
    %1230 = vmatprep.subr.bf16.mxu0 0
    %1231 = vmatpush1.bf16.msra.mxu0 0
    %1232 = vmatprep.subr.bf16.mxu0 0
    %1233 = vmatpush1.bf16.msra.mxu0 0
    %1234 = vmatprep.subr.bf16.mxu0 0
    %1235 = vmatpush1.bf16.msra.mxu0 0
    %1236 = vmatprep.subr.bf16.mxu0 0
    %1237 = vmatpush1.bf16.msra.mxu0 0
    %1238 = vmatprep.subr.bf16.mxu0 0
    %1239 = vmatpush1.bf16.msra.mxu0 0
    %1240 = vmatprep.subr.bf16.mxu0 0
    %1241 = vmatpush1.bf16.msra.mxu0 0
    %1242 = vmatprep.subr.bf16.mxu0 0
    %1243 = vmatpush1.bf16.msra.mxu0 0
    %1244 = vmatprep.subr.bf16.mxu0 0
    %1245 = vmatpush1.bf16.msra.mxu0 0
    %1246 = vmatprep.subr.bf16.mxu0 0
    %1247 = vmatpush1.bf16.msra.mxu0 0
    %1248 = vmatprep.mubr.bf16.mxu0 0
    %1249 = vmatmul.mubr.bf16.gmra.mrb[0].mxu0 %v1208
    %v1250 = vpop.f32.mrb[0].mxu0
    %v1251 = vadd.f32 %v1200, %v1250
    %v1252 = vpop.f32.mrb[0].mxu0
    %v1253 = vadd.f32 %v1204, %v1252
    %v1254 = vpop.f32.mrb[0].mxu0
    %v1255 = vadd.f32 %v1200, %v1254
    %v1256 = vpop.f32.mrb[0].mxu0
    %v1257 = vadd.f32 %v1204, %v1256
    %1258 = vmatprep.mubr.bf16.mxu0 0
    %1259 = vmatmul.mubr.bf16.gmra.mrb[0].mxu0 %v1211
    %v1260 = vpop.f32.mrb[0].mxu0
    %v1261 = vadd.f32 %v1200, %v1260
    %v1262 = vpop.f32.mrb[0].mxu0
    %v1263 = vadd.f32 %v1204, %v1262
    %v1264 = vpop.f32.mrb[0].mxu0
    %v1265 = vadd.f32 %v1200, %v1264
    %v1266 = vpop.f32.mrb[0].mxu0
    %v1267 = vadd.f32 %v1204, %v1266
    %1268 = vmatprep.mubr.bf16.mxu0 0
    %1269 = vmatmul.mubr.bf16.gmra.mrb[0].mxu0 %v1214
    %v1270 = vpop.f32.mrb[0].mxu0
    %v1271 = vadd.f32 %v1200, %v1270
    %v1272 = vpop.f32.mrb[0].mxu0
    %v1273 = vadd.f32 %v1204, %v1272
    %v1274 = vpop.f32.mrb[0].mxu0
    %v1275 = vadd.f32 %v1200, %v1274
    %v1276 = vpop.f32.mrb[0].mxu0
    %v1277 = vadd.f32 %v1204, %v1276
    %1278 = vdwg.mxu0
    %v1279 = vld [vmem:[%s12] sm:$0xff]
    %v1280 = vld [vmem:[%s12 + $0x8] sm:$0xff]
    %v1281 = vld [vmem:[%s12 + $0x10] sm:$0xff]
    %v1282 = vld [vmem:[%s12 + $0x18] sm:$0xff]
    %v1283 = vld [vmem:[#allocation23] sm:$0xff]
    %v1284 = vld [vmem:[#allocation23 + $0x8] sm:$0xff]
    %v1285 = vld [vmem:[#allocation23 + $0x10] sm:$0xff]
    %v1286 = vld [vmem:[#allocation23 + $0x18] sm:$0xff]
    %v1287 = vld [vmem:[#allocation25] sm:$0x1]
    %v1288 = vld [vmem:[#allocation26] sm:$0x1]
    %v1290 = vsel %vm287, 0.0, 0
    %1292 = vmatprep.subr.mxu0 0.0
    %1293 = vmatpush1.msra.mxu0 %v1279
    %1294 = vmatprep.subr.mxu0 0.0
    %1295 = vmatpush1.msra.mxu0 %v1280
    %1296 = vmatprep.subr.mxu0 0.0
    %1297 = vmatpush1.msra.mxu0 %v1281
    %1298 = vmatprep.subr.mxu0 0.0
    %1299 = vmatpush1.msra.mxu0 %v1282
    %1300 = vmatprep.subr.mxu0 0.0
    %1301 = vmatpush1.msra.mxu0 0.0
    %1302 = vmatprep.subr.mxu0 0.0
    %1303 = vmatpush1.msra.mxu0 0.0
    %1304 = vmatprep.subr.mxu0 0.0
    %1305 = vmatpush1.msra.mxu0 0.0
    %1306 = vmatprep.subr.mxu0 0.0
    %1307 = vmatpush1.msra.mxu0 0.0
    %1308 = vmatprep.subr.mxu0 0.0
    %1309 = vmatpush1.msra.mxu0 0.0
    %1310 = vmatprep.subr.mxu0 0.0
    %1311 = vmatpush1.msra.mxu0 0.0
    %1312 = vmatprep.subr.mxu0 0.0
    %1313 = vmatpush1.msra.mxu0 0.0
    %1314 = vmatprep.subr.mxu0 0.0
    %1315 = vmatpush1.msra.mxu0 0.0
    %1316 = vmatprep.subr.mxu0 0.0
    %1317 = vmatpush1.msra.mxu0 0.0
    %1318 = vmatprep.subr.mxu0 0.0
    %1319 = vmatpush1.msra.mxu0 0.0
    %1320 = vmatprep.subr.mxu0 0.0
    %1321 = vmatpush1.msra.mxu0 0.0
    %1322 = vmatprep.subr.mxu0 0.0
    %1323 = vmatpush1.msra.mxu0 0.0
    %1324 = vmatprep.subr.mxu0 0.0
    %1325 = vmatpush1.msra.mxu0 0.0
    %1326 = vmatprep.subr.mxu0 0.0
    %1327 = vmatpush1.msra.mxu0 0.0
    %1328 = vmatprep.subr.mxu0 0.0
    %1329 = vmatpush1.msra.mxu0 0.0
    %1330 = vmatprep.subr.mxu0 0.0
    %1331 = vmatpush1.msra.mxu0 0.0
    %1332 = vmatprep.subr.mxu0 0.0
    %1333 = vmatpush1.msra.mxu0 0.0
    %1334 = vmatprep.subr.mxu0 0.0
    %1335 = vmatpush1.msra.mxu0 0.0
    %1336 = vmatprep.subr.mxu0 0.0
    %1337 = vmatpush1.msra.mxu0 0.0
    %1338 = vmatprep.subr.mxu0 0.0
    %1339 = vmatpush1.msra.mxu0 0.0
    %1340 = vmatprep.subr.mxu0 0.0
    %1341 = vmatpush1.msra.mxu0 0.0
    %1342 = vmatprep.subr.mxu0 0.0
    %1343 = vmatpush1.msra.mxu0 0.0
    %1344 = vmatprep.subr.mxu0 0.0
    %1345 = vmatpush1.msra.mxu0 0.0
    %1346 = vmatprep.subr.mxu0 0.0
    %1347 = vmatpush1.msra.mxu0 0.0
    %1348 = vmatprep.subr.mxu0 0.0
    %1349 = vmatpush1.msra.mxu0 0.0
    %1350 = vmatprep.subr.mxu0 0.0
    %1351 = vmatpush1.msra.mxu0 0.0
    %1352 = vmatprep.subr.mxu0 0.0
    %1353 = vmatpush1.msra.mxu0 0.0
    %1354 = vmatprep.subr.mxu0 0.0
    %1355 = vmatpush1.msra.mxu0 0.0
    %1356 = vmatprep.mubr.f32.mxu0 0.0
    %1357 = vmatmul.mubr.f32.gmra.mrb[0].mxu0 %v1290
    %v1358 = vpop.f32.mrb[0].mxu0
    %v1359 = vadd.f32 0.0, %v1358
    %v1360 = vpop.f32.mrb[0].mxu0
    %1361 = vmatprep.mubr.f32.mxu0 0.0
    %1362 = vmatmul.mubr.f32.gmra.mrb[0].mxu0 %v1290
    %v1363 = vpop.f32.mrb[0].mxu0
    %v1364 = vadd.f32 0.0, %v1363
    %v1365 = vpop.f32.mrb[0].mxu0
    %1366 = vdwg.mxu0
    %v1367 = vadd.f32 %v1251, %v1359
    %v1368 = vadd.f32 %v1255, %v1364
    %v1369 = vxor.u32 %v1367, 2147483648
    %v1370 = vxor.u32 %v1368, 2147483648
    %v1371 = vmul.f32 %v1369, 1.442695
    %v1372 = vpow.pop %v1371
    %v1373 = vmul.f32 %v1370, 1.442695
    %v1374 = vpow.pop %v1373
    %v1375 = vadd.f32 %v1372, 1.0
    %v1376 = vadd.f32 %v1374, 1.0
    %v1377 = vrcp.pop %v1375
    %v1378 = vmul.f32 1.0, %v1377
    %v1379 = vrcp.pop %v1376
    %v1380 = vmul.f32 1.0, %v1379
    %v1381 = vtanh.pop %v1367
    %v1382 = vtanh.pop %v1368
    %v1383 = vmul.f32 %v1378, 0.0
    %v1384 = vmul.f32 %v1380, 0.0
    %1387 = vrot.lane.b32.xlu0 %v1381, 64
    %v1388 = vpop.permute.xlu0 %1387
    %1389 = vrot.lane.b32.xlu0 %v1382, 64
    %v1390 = vpop.permute.xlu0 %1389
    %v1393 = vmul.f32 %v1378, %v1388
    %v1394 = vmul.f32 %v1380, %v1390
    %1397 = vrot.lane.b32.xlu0 %v1393, 32
    %v1398 = vpop.permute.xlu0 %1397
    %1399 = vrot.lane.b32.xlu0 %v1394, 32
    %v1400 = vpop.permute.xlu0 %1399
    %v1403 = vadd.f32 %v1383, %v1398
    %v1404 = vadd.f32 %v1384, %v1400
    %v1405 = vtanh.pop %v1403
    %v1406 = vtanh.pop %v1404
    %1409 = vrot.lane.b32.xlu0 %v1405, 64
    %v1410 = vpop.permute.xlu0 %1409
    %1411 = vrot.lane.b32.xlu0 %v1406, 64
    %v1412 = vpop.permute.xlu0 %1411
    %v1415 = vmul.f32 %v1378, %v1410
    %v1416 = vmul.f32 %v1380, %v1412
    %1417 = vmatprep.subr.mxu0 0.0
    %1418 = vmatpush1.msra.mxu0 %v1283
    %1419 = vmatprep.subr.mxu0 0.0
    %1420 = vmatpush1.msra.mxu0 %v1284
    %1421 = vmatprep.subr.mxu0 0.0
    %1422 = vmatpush1.msra.mxu0 %v1285
    %1423 = vmatprep.subr.mxu0 0.0
    %1424 = vmatpush1.msra.mxu0 %v1286
    %1425 = vmatprep.subr.mxu0 0.0
    %1426 = vmatpush1.msra.mxu0 0.0
    %1427 = vmatprep.subr.mxu0 0.0
    %1428 = vmatpush1.msra.mxu0 0.0
    %1429 = vmatprep.subr.mxu0 0.0
    %1430 = vmatpush1.msra.mxu0 0.0
    %1431 = vmatprep.subr.mxu0 0.0
    %1432 = vmatpush1.msra.mxu0 0.0
    %1433 = vmatprep.subr.mxu0 0.0
    %1434 = vmatpush1.msra.mxu0 0.0
    %1435 = vmatprep.subr.mxu0 0.0
    %1436 = vmatpush1.msra.mxu0 0.0
    %1437 = vmatprep.subr.mxu0 0.0
    %1438 = vmatpush1.msra.mxu0 0.0
    %1439 = vmatprep.subr.mxu0 0.0
    %1440 = vmatpush1.msra.mxu0 0.0
    %1441 = vmatprep.subr.mxu0 0.0
    %1442 = vmatpush1.msra.mxu0 0.0
    %1443 = vmatprep.subr.mxu0 0.0
    %1444 = vmatpush1.msra.mxu0 0.0
    %1445 = vmatprep.subr.mxu0 0.0
    %1446 = vmatpush1.msra.mxu0 0.0
    %1447 = vmatprep.subr.mxu0 0.0
    %1448 = vmatpush1.msra.mxu0 0.0
    %1449 = vmatprep.subr.mxu0 0.0
    %1450 = vmatpush1.msra.mxu0 0.0
    %1451 = vmatprep.subr.mxu0 0.0
    %1452 = vmatpush1.msra.mxu0 0.0
    %1453 = vmatprep.subr.mxu0 0.0
    %1454 = vmatpush1.msra.mxu0 0.0
    %1455 = vmatprep.subr.mxu0 0.0
    %1456 = vmatpush1.msra.mxu0 0.0
    %1457 = vmatprep.subr.mxu0 0.0
    %1458 = vmatpush1.msra.mxu0 0.0
    %1459 = vmatprep.subr.mxu0 0.0
    %1460 = vmatpush1.msra.mxu0 0.0
    %1461 = vmatprep.subr.mxu0 0.0
    %1462 = vmatpush1.msra.mxu0 0.0
    %1463 = vmatprep.subr.mxu0 0.0
    %1464 = vmatpush1.msra.mxu0 0.0
    %1465 = vmatprep.subr.mxu0 0.0
    %1466 = vmatpush1.msra.mxu0 0.0
    %1467 = vmatprep.subr.mxu0 0.0
    %1468 = vmatpush1.msra.mxu0 0.0
    %1469 = vmatprep.subr.mxu0 0.0
    %1470 = vmatpush1.msra.mxu0 0.0
    %1471 = vmatprep.subr.mxu0 0.0
    %1472 = vmatpush1.msra.mxu0 0.0
    %1473 = vmatprep.subr.mxu0 0.0
    %1474 = vmatpush1.msra.mxu0 0.0
    %1475 = vmatprep.subr.mxu0 0.0
    %1476 = vmatpush1.msra.mxu0 0.0
    %1477 = vmatprep.subr.mxu0 0.0
    %1478 = vmatpush1.msra.mxu0 0.0
    %1479 = vmatprep.subr.mxu0 0.0
    %1480 = vmatpush1.msra.mxu0 0.0
    %1481 = vmatprep.mubr.f32.mxu0 0.0
    %1482 = vmatmul.mubr.f32.gmra.mrb[0].mxu0 %v1290
    %v1483 = vpop.f32.mrb[0].mxu0
    %v1484 = vadd.f32 0.0, %v1483
    %v1485 = vpop.f32.mrb[0].mxu0
    %1486 = vmatprep.mubr.f32.mxu0 0.0
    %1487 = vmatmul.mubr.f32.gmra.mrb[0].mxu0 %v1290
    %v1488 = vpop.f32.mrb[0].mxu0
    %v1489 = vadd.f32 0.0, %v1488
    %v1490 = vpop.f32.mrb[0].mxu0
    %1491 = vdwg.mxu0
    %v1492 = vadd.f32 %v1273, %v1484
    %v1493 = vadd.f32 %v1277, %v1489
    %v1494 = vxor.u32 %v1492, 2147483648
    %v1495 = vxor.u32 %v1493, 2147483648
    %v1496 = vmul.f32 %v1494, 1.442695
    %v1497 = vpow.pop %v1496
    %v1498 = vmul.f32 %v1495, 1.442695
    %v1499 = vpow.pop %v1498
    %v1500 = vadd.f32 %v1497, 1.0
    %v1501 = vadd.f32 %v1499, 1.0
    %v1502 = vrcp.pop %v1500
    %v1503 = vmul.f32 1.0, %v1502
    %v1504 = vrcp.pop %v1501
    %v1505 = vmul.f32 1.0, %v1504
    %v1506 = vtanh.pop %v1492
    %v1507 = vtanh.pop %v1493
    %v1508 = vmul.f32 %v1503, 0.0
    %v1509 = vmul.f32 %v1505, 0.0
    %1512 = vrot.lane.b32.xlu0 %v1506, 64
    %v1513 = vpop.permute.xlu0 %1512
    %1514 = vrot.lane.b32.xlu0 %v1507, 64
    %v1515 = vpop.permute.xlu0 %1514
    %v1518 = vmul.f32 %v1503, %v1513
    %v1519 = vmul.f32 %v1505, %v1515
    %1522 = vrot.lane.b32.xlu0 %v1518, 32
    %v1523 = vpop.permute.xlu0 %1522
    %1524 = vrot.lane.b32.xlu0 %v1519, 32
    %v1525 = vpop.permute.xlu0 %1524
    %v1528 = vadd.f32 %v1508, %v1523
    %v1529 = vadd.f32 %v1509, %v1525
    %v1530 = vtanh.pop %v1528
    %v1531 = vtanh.pop %v1529
    %1534 = vrot.lane.b32.xlu0 %v1530, 64
    %v1535 = vpop.permute.xlu0 %1534
    %1536 = vrot.lane.b32.xlu0 %v1531, 64
    %v1537 = vpop.permute.xlu0 %1536
    %v1540 = vmul.f32 %v1503, %v1535
    %v1541 = vmul.f32 %v1505, %v1537
    %v1543 = vlaneseq
    %v1544 = vshrl.u32 %v1543, 7
    %v1545 = vsub.s32 0, %v1544
    %v1546 = vrot.slane %v1287, %v1545
    %1547 = vrot.lane.b32.xlu0 %v1546, 96
    %v1548 = vpop.permute.xlu0 %1547
    %v1550 = vmul.f32 %v1415, %v1548
    %v1551 = vmul.f32 %v1416, %v1548
    %1554 = vrot.lane.b32.xlu0 %v1550, 32
    %v1555 = vpop.permute.xlu0 %1554
    %1556 = vrot.lane.b32.xlu0 %v1551, 32
    %v1557 = vpop.permute.xlu0 %1556
    %v1560 = vsel %vm287, %v1555, 0.0
    %1561 = vadd.xlane.f32.xlu0 %v1560
    %v1562 = vpop.xlane.xlu0 %1561
    %v1563 = vsel %vm287, %v1557, 0.0
    %1564 = vadd.xlane.f32.xlu0 %v1563
    %v1565 = vpop.xlane.xlu0 %1564
    %v1567 = vlaneseq
    %v1568 = vshrl.u32 %v1567, 7
    %v1569 = vsub.s32 0, %v1568
    %v1570 = vrot.slane %v1288, %v1569
    %1571 = vrot.lane.b32.xlu0 %v1570, 96
    %v1572 = vpop.permute.xlu0 %1571
    %v1574 = vmul.f32 %v1540, %v1572
    %v1575 = vmul.f32 %v1541, %v1572
    %1578 = vrot.lane.b32.xlu0 %v1574, 32
    %v1579 = vpop.permute.xlu0 %1578
    %1580 = vrot.lane.b32.xlu0 %v1575, 32
    %v1581 = vpop.permute.xlu0 %1580
    %v1584 = vsel %vm287, %v1579, 0.0
    %1585 = vadd.xlane.f32.xlu0 %v1584
    %v1586 = vpop.xlane.xlu0 %1585
    %v1587 = vsel %vm287, %v1581, 0.0
    %1588 = vadd.xlane.f32.xlu0 %v1587
    %v1589 = vpop.xlane.xlu0 %1588
    %1592 = vrot.lane.b32.xlu0 %v1415, 32
    %v1593 = vpop.permute.xlu0 %1592
    %1594 = vrot.lane.b32.xlu0 %v1416, 32
    %v1595 = vpop.permute.xlu0 %1594
    %v1596 = vsel %vm287, %v1593, 0
    %v1598 = vsel %vm287, %v1595, 0
    %1600 = vmatprep.subr.mxu0 0.0
    %1601 = vmatpush1.msra.mxu0 %v1279
    %1602 = vmatprep.subr.mxu0 0.0
    %1603 = vmatpush1.msra.mxu0 %v1280
    %1604 = vmatprep.subr.mxu0 0.0
    %1605 = vmatpush1.msra.mxu0 %v1281
    %1606 = vmatprep.subr.mxu0 0.0
    %1607 = vmatpush1.msra.mxu0 %v1282
    %1608 = vmatprep.subr.mxu0 0.0
    %1609 = vmatpush1.msra.mxu0 0.0
    %1610 = vmatprep.subr.mxu0 0.0
    %1611 = vmatpush1.msra.mxu0 0.0
    %1612 = vmatprep.subr.mxu0 0.0
    %1613 = vmatpush1.msra.mxu0 0.0
    %1614 = vmatprep.subr.mxu0 0.0
    %1615 = vmatpush1.msra.mxu0 0.0
    %1616 = vmatprep.subr.mxu0 0.0
    %1617 = vmatpush1.msra.mxu0 0.0
    %1618 = vmatprep.subr.mxu0 0.0
    %1619 = vmatpush1.msra.mxu0 0.0
    %1620 = vmatprep.subr.mxu0 0.0
    %1621 = vmatpush1.msra.mxu0 0.0
    %1622 = vmatprep.subr.mxu0 0.0
    %1623 = vmatpush1.msra.mxu0 0.0
    %1624 = vmatprep.subr.mxu0 0.0
    %1625 = vmatpush1.msra.mxu0 0.0
    %1626 = vmatprep.subr.mxu0 0.0
    %1627 = vmatpush1.msra.mxu0 0.0
    %1628 = vmatprep.subr.mxu0 0.0
    %1629 = vmatpush1.msra.mxu0 0.0
    %1630 = vmatprep.subr.mxu0 0.0
    %1631 = vmatpush1.msra.mxu0 0.0
    %1632 = vmatprep.subr.mxu0 0.0
    %1633 = vmatpush1.msra.mxu0 0.0
    %1634 = vmatprep.subr.mxu0 0.0
    %1635 = vmatpush1.msra.mxu0 0.0
    %1636 = vmatprep.subr.mxu0 0.0
    %1637 = vmatpush1.msra.mxu0 0.0
    %1638 = vmatprep.subr.mxu0 0.0
    %1639 = vmatpush1.msra.mxu0 0.0
    %1640 = vmatprep.subr.mxu0 0.0
    %1641 = vmatpush1.msra.mxu0 0.0
    %1642 = vmatprep.subr.mxu0 0.0
    %1643 = vmatpush1.msra.mxu0 0.0
    %1644 = vmatprep.subr.mxu0 0.0
    %1645 = vmatpush1.msra.mxu0 0.0
    %1646 = vmatprep.subr.mxu0 0.0
    %1647 = vmatpush1.msra.mxu0 0.0
    %1648 = vmatprep.subr.mxu0 0.0
    %1649 = vmatpush1.msra.mxu0 0.0
    %1650 = vmatprep.subr.mxu0 0.0
    %1651 = vmatpush1.msra.mxu0 0.0
    %1652 = vmatprep.subr.mxu0 0.0
    %1653 = vmatpush1.msra.mxu0 0.0
    %1654 = vmatprep.subr.mxu0 0.0
    %1655 = vmatpush1.msra.mxu0 0.0
    %1656 = vmatprep.subr.mxu0 0.0
    %1657 = vmatpush1.msra.mxu0 0.0
    %1658 = vmatprep.subr.mxu0 0.0
    %1659 = vmatpush1.msra.mxu0 0.0
    %1660 = vmatprep.subr.mxu0 0.0
    %1661 = vmatpush1.msra.mxu0 0.0
    %1662 = vmatprep.subr.mxu0 0.0
    %1663 = vmatpush1.msra.mxu0 0.0
    %1664 = vmatprep.mubr.f32.mxu0 0.0
    %1665 = vmatmul.mubr.f32.gmra.mrb[0].mxu0 %v1596
    %v1666 = vpop.f32.mrb[0].mxu0
    %v1667 = vadd.f32 0.0, %v1666
    %v1668 = vpop.f32.mrb[0].mxu0
    %1669 = vmatprep.mubr.f32.mxu0 0.0
    %1670 = vmatmul.mubr.f32.gmra.mrb[0].mxu0 %v1598
    %v1671 = vpop.f32.mrb[0].mxu0
    %v1672 = vadd.f32 0.0, %v1671
    %v1673 = vpop.f32.mrb[0].mxu0
    %1674 = vdwg.mxu0
    %v1675 = vadd.f32 %v1261, %v1667
    %v1676 = vadd.f32 %v1265, %v1672
    %v1677 = vxor.u32 %v1675, 2147483648
    %v1678 = vxor.u32 %v1676, 2147483648
    %v1679 = vmul.f32 %v1677, 1.442695
    %v1680 = vpow.pop %v1679
    %v1681 = vmul.f32 %v1678, 1.442695
    %v1682 = vpow.pop %v1681
    %v1683 = vadd.f32 %v1680, 1.0
    %v1684 = vadd.f32 %v1682, 1.0
    %v1685 = vrcp.pop %v1683
    %v1686 = vmul.f32 1.0, %v1685
    %v1687 = vrcp.pop %v1684
    %v1688 = vmul.f32 1.0, %v1687
    %v1689 = vtanh.pop %v1675
    %v1690 = vtanh.pop %v1676
    %v1691 = vmul.f32 %v1686, %v1403
    %v1692 = vmul.f32 %v1688, %v1404
    %1695 = vrot.lane.b32.xlu0 %v1689, 64
    %v1696 = vpop.permute.xlu0 %1695
    %1697 = vrot.lane.b32.xlu0 %v1690, 64
    %v1698 = vpop.permute.xlu0 %1697
    %v1701 = vmul.f32 %v1686, %v1696
    %v1702 = vmul.f32 %v1688, %v1698
    %1705 = vrot.lane.b32.xlu0 %v1701, 32
    %v1706 = vpop.permute.xlu0 %1705
    %1707 = vrot.lane.b32.xlu0 %v1702, 32
    %v1708 = vpop.permute.xlu0 %1707
    %v1711 = vadd.f32 %v1691, %v1706
    %v1712 = vadd.f32 %v1692, %v1708
    %v1713 = vtanh.pop %v1711
    %v1714 = vtanh.pop %v1712
    %1717 = vrot.lane.b32.xlu0 %v1713, 64
    %v1718 = vpop.permute.xlu0 %1717
    %1719 = vrot.lane.b32.xlu0 %v1714, 64
    %v1720 = vpop.permute.xlu0 %1719
    %v1723 = vmul.f32 %v1686, %v1718
    %v1724 = vmul.f32 %v1688, %v1720
    %1727 = vrot.lane.b32.xlu0 %v1540, 32
    %v1728 = vpop.permute.xlu0 %1727
    %1729 = vrot.lane.b32.xlu0 %v1541, 32
    %v1730 = vpop.permute.xlu0 %1729
    %v1731 = vsel %vm287, %v1728, 0
    %v1733 = vsel %vm287, %v1730, 0
    %1735 = vmatprep.subr.mxu0 0.0
    %1736 = vmatpush1.msra.mxu0 %v1283
    %1737 = vmatprep.subr.mxu0 0.0
    %1738 = vmatpush1.msra.mxu0 %v1284
    %1739 = vmatprep.subr.mxu0 0.0
    %1740 = vmatpush1.msra.mxu0 %v1285
    %1741 = vmatprep.subr.mxu0 0.0
    %1742 = vmatpush1.msra.mxu0 %v1286
    %1743 = vmatprep.subr.mxu0 0.0
    %1744 = vmatpush1.msra.mxu0 0.0
    %1745 = vmatprep.subr.mxu0 0.0
    %1746 = vmatpush1.msra.mxu0 0.0
    %1747 = vmatprep.subr.mxu0 0.0
    %1748 = vmatpush1.msra.mxu0 0.0
    %1749 = vmatprep.subr.mxu0 0.0
    %1750 = vmatpush1.msra.mxu0 0.0
    %1751 = vmatprep.subr.mxu0 0.0
    %1752 = vmatpush1.msra.mxu0 0.0
    %1753 = vmatprep.subr.mxu0 0.0
    %1754 = vmatpush1.msra.mxu0 0.0
    %1755 = vmatprep.subr.mxu0 0.0
    %1756 = vmatpush1.msra.mxu0 0.0
    %1757 = vmatprep.subr.mxu0 0.0
    %1758 = vmatpush1.msra.mxu0 0.0
    %1759 = vmatprep.subr.mxu0 0.0
    %1760 = vmatpush1.msra.mxu0 0.0
    %1761 = vmatprep.subr.mxu0 0.0
    %1762 = vmatpush1.msra.mxu0 0.0
    %1763 = vmatprep.subr.mxu0 0.0
    %1764 = vmatpush1.msra.mxu0 0.0
    %1765 = vmatprep.subr.mxu0 0.0
    %1766 = vmatpush1.msra.mxu0 0.0
    %1767 = vmatprep.subr.mxu0 0.0
    %1768 = vmatpush1.msra.mxu0 0.0
    %1769 = vmatprep.subr.mxu0 0.0
    %1770 = vmatpush1.msra.mxu0 0.0
    %1771 = vmatprep.subr.mxu0 0.0
    %1772 = vmatpush1.msra.mxu0 0.0
    %1773 = vmatprep.subr.mxu0 0.0
    %1774 = vmatpush1.msra.mxu0 0.0
    %1775 = vmatprep.subr.mxu0 0.0
    %1776 = vmatpush1.msra.mxu0 0.0
    %1777 = vmatprep.subr.mxu0 0.0
    %1778 = vmatpush1.msra.mxu0 0.0
    %1779 = vmatprep.subr.mxu0 0.0
    %1780 = vmatpush1.msra.mxu0 0.0
    %1781 = vmatprep.subr.mxu0 0.0
    %1782 = vmatpush1.msra.mxu0 0.0
    %1783 = vmatprep.subr.mxu0 0.0
    %1784 = vmatpush1.msra.mxu0 0.0
    %1785 = vmatprep.subr.mxu0 0.0
    %1786 = vmatpush1.msra.mxu0 0.0
    %1787 = vmatprep.subr.mxu0 0.0
    %1788 = vmatpush1.msra.mxu0 0.0
    %1789 = vmatprep.subr.mxu0 0.0
    %1790 = vmatpush1.msra.mxu0 0.0
    %1791 = vmatprep.subr.mxu0 0.0
    %1792 = vmatpush1.msra.mxu0 0.0
    %1793 = vmatprep.subr.mxu0 0.0
    %1794 = vmatpush1.msra.mxu0 0.0
    %1795 = vmatprep.subr.mxu0 0.0
    %1796 = vmatpush1.msra.mxu0 0.0
    %1797 = vmatprep.subr.mxu0 0.0
    %1798 = vmatpush1.msra.mxu0 0.0
    %1799 = vmatprep.mubr.f32.mxu0 0.0
    %1800 = vmatmul.mubr.f32.gmra.mrb[0].mxu0 %v1731
    %v1801 = vpop.f32.mrb[0].mxu0
    %v1802 = vadd.f32 0.0, %v1801
    %v1803 = vpop.f32.mrb[0].mxu0
    %1804 = vmatprep.mubr.f32.mxu0 0.0
    %1805 = vmatmul.mubr.f32.gmra.mrb[0].mxu0 %v1733
    %v1806 = vpop.f32.mrb[0].mxu0
    %v1807 = vadd.f32 0.0, %v1806
    %v1808 = vpop.f32.mrb[0].mxu0
    %1809 = vdwg.mxu0
    %v1810 = vadd.f32 %v1263, %v1802
    %v1811 = vadd.f32 %v1267, %v1807
    %v1812 = vxor.u32 %v1810, 2147483648
    %v1813 = vxor.u32 %v1811, 2147483648
    %v1814 = vmul.f32 %v1812, 1.442695
    %v1815 = vpow.pop %v1814
    %v1816 = vmul.f32 %v1813, 1.442695
    %v1817 = vpow.pop %v1816
    %v1818 = vadd.f32 %v1815, 1.0
    %v1819 = vadd.f32 %v1817, 1.0
    %v1820 = vrcp.pop %v1818
    %v1821 = vmul.f32 1.0, %v1820
    %v1822 = vrcp.pop %v1819
    %v1823 = vmul.f32 1.0, %v1822
    %v1824 = vtanh.pop %v1810
    %v1825 = vtanh.pop %v1811
    %v1826 = vmul.f32 %v1821, %v1528
    %v1827 = vmul.f32 %v1823, %v1529
    %1830 = vrot.lane.b32.xlu0 %v1824, 64
    %v1831 = vpop.permute.xlu0 %1830
    %1832 = vrot.lane.b32.xlu0 %v1825, 64
    %v1833 = vpop.permute.xlu0 %1832
    %v1836 = vmul.f32 %v1821, %v1831
    %v1837 = vmul.f32 %v1823, %v1833
    %1840 = vrot.lane.b32.xlu0 %v1836, 32
    %v1841 = vpop.permute.xlu0 %1840
    %1842 = vrot.lane.b32.xlu0 %v1837, 32
    %v1843 = vpop.permute.xlu0 %1842
    %v1846 = vadd.f32 %v1826, %v1841
    %v1847 = vadd.f32 %v1827, %v1843
    %v1848 = vtanh.pop %v1846
    %v1849 = vtanh.pop %v1847
    %1852 = vrot.lane.b32.xlu0 %v1848, 64
    %v1853 = vpop.permute.xlu0 %1852
    %1854 = vrot.lane.b32.xlu0 %v1849, 64
    %v1855 = vpop.permute.xlu0 %1854
    %v1858 = vmul.f32 %v1821, %v1853
    %v1859 = vmul.f32 %v1823, %v1855
    %v1860 = vmul.f32 %v1723, %v1548
    %v1861 = vmul.f32 %v1724, %v1548
    %1864 = vrot.lane.b32.xlu0 %v1860, 32
    %v1865 = vpop.permute.xlu0 %1864
    %1866 = vrot.lane.b32.xlu0 %v1861, 32
    %v1867 = vpop.permute.xlu0 %1866
    %v1870 = vsel %vm287, %v1865, 0.0
    %1871 = vadd.xlane.f32.xlu0 %v1870
    %v1872 = vpop.xlane.xlu0 %1871
    %v1873 = vsel %vm287, %v1867, 0.0
    %1874 = vadd.xlane.f32.xlu0 %v1873
    %v1875 = vpop.xlane.xlu0 %1874
    %v1876 = vmul.f32 %v1858, %v1572
    %v1877 = vmul.f32 %v1859, %v1572
    %1880 = vrot.lane.b32.xlu0 %v1876, 32
    %v1881 = vpop.permute.xlu0 %1880
    %1882 = vrot.lane.b32.xlu0 %v1877, 32
    %v1883 = vpop.permute.xlu0 %1882
    %v1886 = vsel %vm287, %v1881, 0.0
    %1887 = vadd.xlane.f32.xlu0 %v1886
    %v1888 = vpop.xlane.xlu0 %1887
    %v1889 = vsel %vm287, %v1883, 0.0
    %1890 = vadd.xlane.f32.xlu0 %v1889
    %v1891 = vpop.xlane.xlu0 %1890
    %1894 = vrot.lane.b32.xlu0 %v1723, 32
    %v1895 = vpop.permute.xlu0 %1894
    %1896 = vrot.lane.b32.xlu0 %v1724, 32
    %v1897 = vpop.permute.xlu0 %1896
    %v1898 = vsel %vm287, %v1895, 0
    %v1900 = vsel %vm287, %v1897, 0
    %1902 = vmatprep.subr.mxu0 0.0
    %1903 = vmatpush1.msra.mxu0 %v1279
    %1904 = vmatprep.subr.mxu0 0.0
    %1905 = vmatpush1.msra.mxu0 %v1280
    %1906 = vmatprep.subr.mxu0 0.0
    %1907 = vmatpush1.msra.mxu0 %v1281
    %1908 = vmatprep.subr.mxu0 0.0
    %1909 = vmatpush1.msra.mxu0 %v1282
    %1910 = vmatprep.subr.mxu0 0.0
    %1911 = vmatpush1.msra.mxu0 0.0
    %1912 = vmatprep.subr.mxu0 0.0
    %1913 = vmatpush1.msra.mxu0 0.0
    %1914 = vmatprep.subr.mxu0 0.0
    %1915 = vmatpush1.msra.mxu0 0.0
    %1916 = vmatprep.subr.mxu0 0.0
    %1917 = vmatpush1.msra.mxu0 0.0
    %1918 = vmatprep.subr.mxu0 0.0
    %1919 = vmatpush1.msra.mxu0 0.0
    %1920 = vmatprep.subr.mxu0 0.0
    %1921 = vmatpush1.msra.mxu0 0.0
    %1922 = vmatprep.subr.mxu0 0.0
    %1923 = vmatpush1.msra.mxu0 0.0
    %1924 = vmatprep.subr.mxu0 0.0
    %1925 = vmatpush1.msra.mxu0 0.0
    %1926 = vmatprep.subr.mxu0 0.0
    %1927 = vmatpush1.msra.mxu0 0.0
    %1928 = vmatprep.subr.mxu0 0.0
    %1929 = vmatpush1.msra.mxu0 0.0
    %1930 = vmatprep.subr.mxu0 0.0
    %1931 = vmatpush1.msra.mxu0 0.0
    %1932 = vmatprep.subr.mxu0 0.0
    %1933 = vmatpush1.msra.mxu0 0.0
    %1934 = vmatprep.subr.mxu0 0.0
    %1935 = vmatpush1.msra.mxu0 0.0
    %1936 = vmatprep.subr.mxu0 0.0
    %1937 = vmatpush1.msra.mxu0 0.0
    %1938 = vmatprep.subr.mxu0 0.0
    %1939 = vmatpush1.msra.mxu0 0.0
    %1940 = vmatprep.subr.mxu0 0.0
    %1941 = vmatpush1.msra.mxu0 0.0
    %1942 = vmatprep.subr.mxu0 0.0
    %1943 = vmatpush1.msra.mxu0 0.0
    %1944 = vmatprep.subr.mxu0 0.0
    %1945 = vmatpush1.msra.mxu0 0.0
    %1946 = vmatprep.subr.mxu0 0.0
    %1947 = vmatpush1.msra.mxu0 0.0
    %1948 = vmatprep.subr.mxu0 0.0
    %1949 = vmatpush1.msra.mxu0 0.0
    %1950 = vmatprep.subr.mxu0 0.0
    %1951 = vmatpush1.msra.mxu0 0.0
    %1952 = vmatprep.subr.mxu0 0.0
    %1953 = vmatpush1.msra.mxu0 0.0
    %1954 = vmatprep.subr.mxu0 0.0
    %1955 = vmatpush1.msra.mxu0 0.0
    %1956 = vmatprep.subr.mxu0 0.0
    %1957 = vmatpush1.msra.mxu0 0.0
    %1958 = vmatprep.subr.mxu0 0.0
    %1959 = vmatpush1.msra.mxu0 0.0
    %1960 = vmatprep.subr.mxu0 0.0
    %1961 = vmatpush1.msra.mxu0 0.0
    %1962 = vmatprep.subr.mxu0 0.0
    %1963 = vmatpush1.msra.mxu0 0.0
    %1964 = vmatprep.subr.mxu0 0.0
    %1965 = vmatpush1.msra.mxu0 0.0
    %1966 = vmatprep.mubr.f32.mxu0 0.0
    %1967 = vmatmul.mubr.f32.gmra.mrb[0].mxu0 %v1898
    %v1968 = vpop.f32.mrb[0].mxu0
    %v1969 = vadd.f32 0.0, %v1968
    %v1970 = vpop.f32.mrb[0].mxu0
    %1971 = vmatprep.mubr.f32.mxu0 0.0
    %1972 = vmatmul.mubr.f32.gmra.mrb[0].mxu0 %v1900
    %v1973 = vpop.f32.mrb[0].mxu0
    %v1974 = vadd.f32 0.0, %v1973
    %v1975 = vpop.f32.mrb[0].mxu0
    %1976 = vdwg.mxu0
    %v1977 = vadd.f32 %v1271, %v1969
    %v1978 = vadd.f32 %v1275, %v1974
    %v1979 = vxor.u32 %v1977, 2147483648
    %v1980 = vxor.u32 %v1978, 2147483648
    %v1981 = vmul.f32 %v1979, 1.442695
    %v1982 = vpow.pop %v1981
    %v1983 = vmul.f32 %v1980, 1.442695
    %v1984 = vpow.pop %v1983
    %v1985 = vadd.f32 %v1982, 1.0
    %v1986 = vadd.f32 %v1984, 1.0
    %v1987 = vrcp.pop %v1985
    %v1988 = vmul.f32 1.0, %v1987
    %v1989 = vrcp.pop %v1986
    %v1990 = vmul.f32 1.0, %v1989
    %v1991 = vtanh.pop %v1977
    %v1992 = vtanh.pop %v1978
    %v1993 = vmul.f32 %v1988, %v1711
    %v1994 = vmul.f32 %v1990, %v1712
    %1997 = vrot.lane.b32.xlu0 %v1991, 64
    %v1998 = vpop.permute.xlu0 %1997
    %1999 = vrot.lane.b32.xlu0 %v1992, 64
    %v2000 = vpop.permute.xlu0 %1999
    %v2003 = vmul.f32 %v1988, %v1998
    %v2004 = vmul.f32 %v1990, %v2000
    %2007 = vrot.lane.b32.xlu0 %v2003, 32
    %v2008 = vpop.permute.xlu0 %2007
    %2009 = vrot.lane.b32.xlu0 %v2004, 32
    %v2010 = vpop.permute.xlu0 %2009
    %v2013 = vadd.f32 %v1993, %v2008
    %v2014 = vadd.f32 %v1994, %v2010
    %v2015 = vtanh.pop %v2013
    %v2016 = vtanh.pop %v2014
    %2019 = vrot.lane.b32.xlu0 %v2015, 64
    %v2020 = vpop.permute.xlu0 %2019
    %2021 = vrot.lane.b32.xlu0 %v2016, 64
    %v2022 = vpop.permute.xlu0 %2021
    %v2025 = vmul.f32 %v1988, %v2020
    %v2026 = vmul.f32 %v1990, %v2022
    %2029 = vrot.lane.b32.xlu0 %v1858, 32
    %v2030 = vpop.permute.xlu0 %2029
    %2031 = vrot.lane.b32.xlu0 %v1859, 32
    %v2032 = vpop.permute.xlu0 %2031
    %v2033 = vsel %vm287, %v2030, 0
    %v2035 = vsel %vm287, %v2032, 0
    %2037 = vmatprep.subr.mxu0 0.0
    %2038 = vmatpush1.msra.mxu0 %v1283
    %2039 = vmatprep.subr.mxu0 0.0
    %2040 = vmatpush1.msra.mxu0 %v1284
    %2041 = vmatprep.subr.mxu0 0.0
    %2042 = vmatpush1.msra.mxu0 %v1285
    %2043 = vmatprep.subr.mxu0 0.0
    %2044 = vmatpush1.msra.mxu0 %v1286
    %2045 = vmatprep.subr.mxu0 0.0
    %2046 = vmatpush1.msra.mxu0 0.0
    %2047 = vmatprep.subr.mxu0 0.0
    %2048 = vmatpush1.msra.mxu0 0.0
    %2049 = vmatprep.subr.mxu0 0.0
    %2050 = vmatpush1.msra.mxu0 0.0
    %2051 = vmatprep.subr.mxu0 0.0
    %2052 = vmatpush1.msra.mxu0 0.0
    %2053 = vmatprep.subr.mxu0 0.0
    %2054 = vmatpush1.msra.mxu0 0.0
    %2055 = vmatprep.subr.mxu0 0.0
    %2056 = vmatpush1.msra.mxu0 0.0
    %2057 = vmatprep.subr.mxu0 0.0
    %2058 = vmatpush1.msra.mxu0 0.0
    %2059 = vmatprep.subr.mxu0 0.0
    %2060 = vmatpush1.msra.mxu0 0.0
    %2061 = vmatprep.subr.mxu0 0.0
    %2062 = vmatpush1.msra.mxu0 0.0
    %2063 = vmatprep.subr.mxu0 0.0
    %2064 = vmatpush1.msra.mxu0 0.0
    %2065 = vmatprep.subr.mxu0 0.0
    %2066 = vmatpush1.msra.mxu0 0.0
    %2067 = vmatprep.subr.mxu0 0.0
    %2068 = vmatpush1.msra.mxu0 0.0
    %2069 = vmatprep.subr.mxu0 0.0
    %2070 = vmatpush1.msra.mxu0 0.0
    %2071 = vmatprep.subr.mxu0 0.0
    %2072 = vmatpush1.msra.mxu0 0.0
    %2073 = vmatprep.subr.mxu0 0.0
    %2074 = vmatpush1.msra.mxu0 0.0
    %2075 = vmatprep.subr.mxu0 0.0
    %2076 = vmatpush1.msra.mxu0 0.0
    %2077 = vmatprep.subr.mxu0 0.0
    %2078 = vmatpush1.msra.mxu0 0.0
    %2079 = vmatprep.subr.mxu0 0.0
    %2080 = vmatpush1.msra.mxu0 0.0
    %2081 = vmatprep.subr.mxu0 0.0
    %2082 = vmatpush1.msra.mxu0 0.0
    %2083 = vmatprep.subr.mxu0 0.0
    %2084 = vmatpush1.msra.mxu0 0.0
    %2085 = vmatprep.subr.mxu0 0.0
    %2086 = vmatpush1.msra.mxu0 0.0
    %2087 = vmatprep.subr.mxu0 0.0
    %2088 = vmatpush1.msra.mxu0 0.0
    %2089 = vmatprep.subr.mxu0 0.0
    %2090 = vmatpush1.msra.mxu0 0.0
    %2091 = vmatprep.subr.mxu0 0.0
    %2092 = vmatpush1.msra.mxu0 0.0
    %2093 = vmatprep.subr.mxu0 0.0
    %2094 = vmatpush1.msra.mxu0 0.0
    %2095 = vmatprep.subr.mxu0 0.0
    %2096 = vmatpush1.msra.mxu0 0.0
    %2097 = vmatprep.subr.mxu0 0.0
    %2098 = vmatpush1.msra.mxu0 0.0
    %2099 = vmatprep.subr.mxu0 0.0
    %2100 = vmatpush1.msra.mxu0 0.0
    %2101 = vmatprep.mubr.f32.mxu0 0.0
    %2102 = vmatmul.mubr.f32.gmra.mrb[0].mxu0 %v2033
    %v2103 = vpop.f32.mrb[0].mxu0
    %v2104 = vadd.f32 0.0, %v2103
    %v2105 = vpop.f32.mrb[0].mxu0
    %2106 = vmatprep.mubr.f32.mxu0 0.0
    %2107 = vmatmul.mubr.f32.gmra.mrb[0].mxu0 %v2035
    %v2108 = vpop.f32.mrb[0].mxu0
    %v2109 = vadd.f32 0.0, %v2108
    %v2110 = vpop.f32.mrb[0].mxu0
    %2111 = vdwg.mxu0
    %v2112 = vadd.f32 %v1253, %v2104
    %v2113 = vadd.f32 %v1257, %v2109
    %v2114 = vxor.u32 %v2112, 2147483648
    %v2115 = vxor.u32 %v2113, 2147483648
    %v2116 = vmul.f32 %v2114, 1.442695
    %v2117 = vpow.pop %v2116
    %v2118 = vmul.f32 %v2115, 1.442695
    %v2119 = vpow.pop %v2118
    %v2120 = vadd.f32 %v2117, 1.0
    %v2121 = vadd.f32 %v2119, 1.0
    %v2122 = vrcp.pop %v2120
    %v2123 = vmul.f32 1.0, %v2122
    %v2124 = vrcp.pop %v2121
    %v2125 = vmul.f32 1.0, %v2124
    %v2126 = vtanh.pop %v2112
    %v2127 = vtanh.pop %v2113
    %v2128 = vmul.f32 %v2123, %v1846
    %v2129 = vmul.f32 %v2125, %v1847
    %2132 = vrot.lane.b32.xlu0 %v2126, 64
    %v2133 = vpop.permute.xlu0 %2132
    %2134 = vrot.lane.b32.xlu0 %v2127, 64
    %v2135 = vpop.permute.xlu0 %2134
    %v2138 = vmul.f32 %v2123, %v2133
    %v2139 = vmul.f32 %v2125, %v2135
    %2142 = vrot.lane.b32.xlu0 %v2138, 32
    %v2143 = vpop.permute.xlu0 %2142
    %2144 = vrot.lane.b32.xlu0 %v2139, 32
    %v2145 = vpop.permute.xlu0 %2144
    %v2148 = vadd.f32 %v2128, %v2143
    %v2149 = vadd.f32 %v2129, %v2145
    %v2150 = vtanh.pop %v2148
    %v2151 = vtanh.pop %v2149
    %2154 = vrot.lane.b32.xlu0 %v2150, 64
    %v2155 = vpop.permute.xlu0 %2154
    %2156 = vrot.lane.b32.xlu0 %v2151, 64
    %v2157 = vpop.permute.xlu0 %2156
    %v2160 = vmul.f32 %v2123, %v2155
    %v2161 = vmul.f32 %v2125, %v2157
    %v2162 = vmul.f32 %v2025, %v1548
    %v2163 = vmul.f32 %v2026, %v1548
    %2166 = vrot.lane.b32.xlu0 %v2162, 32
    %v2167 = vpop.permute.xlu0 %2166
    %2168 = vrot.lane.b32.xlu0 %v2163, 32
    %v2169 = vpop.permute.xlu0 %2168
    %v2172 = vsel %vm287, %v2167, 0.0
    %2173 = vadd.xlane.f32.xlu0 %v2172
    %v2174 = vpop.xlane.xlu0 %2173
    %v2175 = vsel %vm287, %v2169, 0.0
    %2176 = vadd.xlane.f32.xlu0 %v2175
    %v2177 = vpop.xlane.xlu0 %2176
    %v2178 = vmul.f32 %v2160, %v1572
    %v2179 = vmul.f32 %v2161, %v1572
    %2182 = vrot.lane.b32.xlu0 %v2178, 32
    %v2183 = vpop.permute.xlu0 %2182
    %2184 = vrot.lane.b32.xlu0 %v2179, 32
    %v2185 = vpop.permute.xlu0 %2184
    %v2188 = vsel %vm287, %v2183, 0.0
    %2189 = vadd.xlane.f32.xlu0 %v2188
    %v2190 = vpop.xlane.xlu0 %2189
    %v2191 = vsel %vm287, %v2185, 0.0
    %2192 = vadd.xlane.f32.xlu0 %v2191
    %v2193 = vpop.xlane.xlu0 %2192
    %v2194 = vld [vmem:[#allocation3] sm:$0x1]
    %v2195 = vadd.f32 %v1562, %v2190
    %v2196 = vadd.f32 %v1565, %v2193
    %v2198 = vlaneseq
    %v2199 = vshrl.u32 %v2198, 7
    %v2200 = vsub.s32 0, %v2199
    %v2201 = vrot.slane %v2194, %v2200
    %v2203 = vadd.f32 %v2195, %v2201
    %v2204 = vadd.f32 %v2196, %v2201
    %v2205 = vadd.f32 %v1872, %v1888
    %v2206 = vadd.f32 %v1875, %v1891
    %v2207 = vadd.f32 %v2205, %v2201
    %v2208 = vadd.f32 %v2206, %v2201
    %v2209 = vadd.f32 %v2174, %v1586
    %v2210 = vadd.f32 %v2177, %v1589
    %v2211 = vadd.f32 %v2209, %v2201
    %v2212 = vadd.f32 %v2210, %v2201
    %v2213 = vmax.f32 %v2203, %v2207
    %v2214 = vmax.f32 %v2204, %v2208
    %v2215 = vmax.f32 %v2213, %v2211
    %v2216 = vmax.f32 %v2214, %v2212
    %v2217 = vsub.f32 %v2203, %v2215
    %v2218 = vsub.f32 %v2204, %v2216
    %v2219 = vmul.f32 %v2217, 1.442695
    %v2220 = vpow.pop %v2219
    %v2221 = vmul.f32 %v2218, 1.442695
    %v2222 = vpow.pop %v2221
    %v2223 = vsub.f32 %v2207, %v2215
    %v2224 = vsub.f32 %v2208, %v2216
    %v2225 = vmul.f32 %v2223, 1.442695
    %v2226 = vpow.pop %v2225
    %v2227 = vmul.f32 %v2224, 1.442695
    %v2228 = vpow.pop %v2227
    %v2229 = vsub.f32 %v2211, %v2215
    %v2230 = vsub.f32 %v2212, %v2216
    %v2231 = vmul.f32 %v2229, 1.442695
    %v2232 = vpow.pop %v2231
    %v2233 = vmul.f32 %v2230, 1.442695
    %v2234 = vpow.pop %v2233
    %v2235 = vadd.f32 %v2220, %v2226
    %v2236 = vadd.f32 %v2222, %v2228
    %v2237 = vadd.f32 %v2235, %v2232
    %v2238 = vadd.f32 %v2236, %v2234
    %v2239 = vrcp.pop %v2237
    %v2240 = vrcp.pop %v2238
    %v2241 = vmul.f32 %v2220, %v2239
    %v2242 = vmul.f32 %v2222, %v2240
    %v2243 = vld [vmem:[#allocation2] sm:$0xff]
    %v2244 = vld [vmem:[#allocation2 + $0x8] sm:$0xff]
    %2246 = vset.pattern.permute.xlu0 0
    %2247 = vperm.xlu0 %2246, %v2241
    %v2248 = vpop.permute.xlu0 %2247
    %2251 = vset.pattern.permute.xlu0 0
    %2252 = vperm.xlu0 %2251, %v2242
    %v2253 = vpop.permute.xlu0 %2252
    %v2255 = vmul.f32 %v2248, %v2243
    %v2256 = vmul.f32 %v2253, %v2244
    %v2257 = vmul.f32 %v2226, %v2239
    %v2258 = vmul.f32 %v2228, %v2240
    %v2259 = vld [vmem:[#allocation2 + $0x10] sm:$0xff]
    %v2260 = vld [vmem:[#allocation2 + $0x18] sm:$0xff]
    %2262 = vset.pattern.permute.xlu0 0
    %2263 = vperm.xlu0 %2262, %v2257
    %v2264 = vpop.permute.xlu0 %2263
    %2267 = vset.pattern.permute.xlu0 0
    %2268 = vperm.xlu0 %2267, %v2258
    %v2269 = vpop.permute.xlu0 %2268
    %v2271 = vmul.f32 %v2264, %v2259
    %v2272 = vmul.f32 %v2269, %v2260
    %v2273 = vadd.f32 %v2255, %v2271
    %v2274 = vadd.f32 %v2256, %v2272
    %v2275 = vmul.f32 %v2232, %v2239
    %v2276 = vmul.f32 %v2234, %v2240
    %2278 = vset.pattern.permute.xlu0 0
    %2279 = vperm.xlu0 %2278, %v2275
    %v2280 = vpop.permute.xlu0 %2279
    %2283 = vset.pattern.permute.xlu0 0
    %2284 = vperm.xlu0 %2283, %v2276
    %v2285 = vpop.permute.xlu0 %2284
    %v2287 = vmul.f32 %v2280, %v1178
    %v2288 = vmul.f32 %v2285, %v1179
    %v2289 = vadd.f32 %v2273, %v2287
    %v2290 = vadd.f32 %v2274, %v2288
    %v2291 = vld [vmem:[#allocation14] sm:$0x3]
    %v2292 = vpack.c.bf16 %v2291, %v2291
    %v2293 = vpack.c.bf16 %v2290, %v2289
    %v2295 = vsel %vm274, %v2292, 0
    %2297 = vmatprep.subr.bf16.mxu0 0
    %2298 = vmatpush1.bf16.msra.mxu0 %v2293
    %2299 = vmatprep.subr.bf16.mxu0 0
    %2300 = vmatpush1.bf16.msra.mxu0 0
    %2301 = vmatprep.subr.bf16.mxu0 0
    %2302 = vmatpush1.bf16.msra.mxu0 0
    %2303 = vmatprep.subr.bf16.mxu0 0
    %2304 = vmatpush1.bf16.msra.mxu0 0
    %2305 = vmatprep.subr.bf16.mxu0 0
    %2306 = vmatpush1.bf16.msra.mxu0 0
    %2307 = vmatprep.subr.bf16.mxu0 0
    %2308 = vmatpush1.bf16.msra.mxu0 0
    %2309 = vmatprep.subr.bf16.mxu0 0
    %2310 = vmatpush1.bf16.msra.mxu0 0
    %2311 = vmatprep.subr.bf16.mxu0 0
    %2312 = vmatpush1.bf16.msra.mxu0 0
    %2313 = vmatprep.subr.bf16.mxu0 0
    %2314 = vmatpush1.bf16.msra.mxu0 0
    %2315 = vmatprep.subr.bf16.mxu0 0
    %2316 = vmatpush1.bf16.msra.mxu0 0
    %2317 = vmatprep.subr.bf16.mxu0 0
    %2318 = vmatpush1.bf16.msra.mxu0 0
    %2319 = vmatprep.subr.bf16.mxu0 0
    %2320 = vmatpush1.bf16.msra.mxu0 0
    %2321 = vmatprep.subr.bf16.mxu0 0
    %2322 = vmatpush1.bf16.msra.mxu0 0
    %2323 = vmatprep.subr.bf16.mxu0 0
    %2324 = vmatpush1.bf16.msra.mxu0 0
    %2325 = vmatprep.subr.bf16.mxu0 0
    %2326 = vmatpush1.bf16.msra.mxu0 0
    %2327 = vmatprep.subr.bf16.mxu0 0
    %2328 = vmatpush1.bf16.msra.mxu0 0
    %2329 = vmatprep.mubr.bf16.mxu0 0
    %2330 = vmatmul.mubr.bf16.gmra.mrb[0].mxu0 %v2295
    %v2331 = vpop.f32.mrb[0].mxu0
    %v2332 = vadd.f32 0.0, %v2331
    %v2333 = vpop.f32.mrb[0].mxu0
    %v2334 = vpop.f32.mrb[0].mxu0
    %v2335 = vpop.f32.mrb[0].mxu0
    %2336 = vdwg.mxu0
    %v2337 = vld [vmem:[#allocation28] sm:$0xff]
    %v2338 = vld [vmem:[#allocation28 + $0x8] sm:$0xff]
    %v2339 = vld [vmem:[#allocation28 + $0x10] sm:$0xff]
    %v2340 = vld [vmem:[#allocation28 + $0x18] sm:$0xff]
    %v2341 = vld [vmem:[%s18] sm:$0x1]
    %v2343 = vlaneseq
    %v2344 = vshrl.u32 %v2343, 7
    %v2345 = vsub.s32 0, %v2344
    %v2346 = vrot.slane %v2341, %v2345
    %v2349 = vsel %vm287, %v2332, 0
    %2351 = vmatprep.subr.mxu0 0.0
    %2352 = vmatpush1.msra.mxu0 %v2337
    %2353 = vmatprep.subr.mxu0 0.0
    %2354 = vmatpush1.msra.mxu0 %v2338
    %2355 = vmatprep.subr.mxu0 0.0
    %2356 = vmatpush1.msra.mxu0 %v2339
    %2357 = vmatprep.subr.mxu0 0.0
    %2358 = vmatpush1.msra.mxu0 %v2340
    %2359 = vmatprep.subr.mxu0 0.0
    %2360 = vmatpush1.msra.mxu0 0.0
    %2361 = vmatprep.subr.mxu0 0.0
    %2362 = vmatpush1.msra.mxu0 0.0
    %2363 = vmatprep.subr.mxu0 0.0
    %2364 = vmatpush1.msra.mxu0 0.0
    %2365 = vmatprep.subr.mxu0 0.0
    %2366 = vmatpush1.msra.mxu0 0.0
    %2367 = vmatprep.subr.mxu0 0.0
    %2368 = vmatpush1.msra.mxu0 0.0
    %2369 = vmatprep.subr.mxu0 0.0
    %2370 = vmatpush1.msra.mxu0 0.0
    %2371 = vmatprep.subr.mxu0 0.0
    %2372 = vmatpush1.msra.mxu0 0.0
    %2373 = vmatprep.subr.mxu0 0.0
    %2374 = vmatpush1.msra.mxu0 0.0
    %2375 = vmatprep.subr.mxu0 0.0
    %2376 = vmatpush1.msra.mxu0 0.0
    %2377 = vmatprep.subr.mxu0 0.0
    %2378 = vmatpush1.msra.mxu0 0.0
    %2379 = vmatprep.subr.mxu0 0.0
    %2380 = vmatpush1.msra.mxu0 0.0
    %2381 = vmatprep.subr.mxu0 0.0
    %2382 = vmatpush1.msra.mxu0 0.0
    %2383 = vmatprep.subr.mxu0 0.0
    %2384 = vmatpush1.msra.mxu0 0.0
    %2385 = vmatprep.subr.mxu0 0.0
    %2386 = vmatpush1.msra.mxu0 0.0
    %2387 = vmatprep.subr.mxu0 0.0
    %2388 = vmatpush1.msra.mxu0 0.0
    %2389 = vmatprep.subr.mxu0 0.0
    %2390 = vmatpush1.msra.mxu0 0.0
    %2391 = vmatprep.subr.mxu0 0.0
    %2392 = vmatpush1.msra.mxu0 0.0
    %2393 = vmatprep.subr.mxu0 0.0
    %2394 = vmatpush1.msra.mxu0 0.0
    %2395 = vmatprep.subr.mxu0 0.0
    %2396 = vmatpush1.msra.mxu0 0.0
    %2397 = vmatprep.subr.mxu0 0.0
    %2398 = vmatpush1.msra.mxu0 0.0
    %2399 = vmatprep.subr.mxu0 0.0
    %2400 = vmatpush1.msra.mxu0 0.0
    %2401 = vmatprep.subr.mxu0 0.0
    %2402 = vmatpush1.msra.mxu0 0.0
    %2403 = vmatprep.subr.mxu0 0.0
    %2404 = vmatpush1.msra.mxu0 0.0
    %2405 = vmatprep.subr.mxu0 0.0
    %2406 = vmatpush1.msra.mxu0 0.0
    %2407 = vmatprep.subr.mxu0 0.0
    %2408 = vmatpush1.msra.mxu0 0.0
    %2409 = vmatprep.subr.mxu0 0.0
    %2410 = vmatpush1.msra.mxu0 0.0
    %2411 = vmatprep.subr.mxu0 0.0
    %2412 = vmatpush1.msra.mxu0 0.0
    %2413 = vmatprep.subr.mxu0 0.0
    %2414 = vmatpush1.msra.mxu0 0.0
    %2415 = vmatprep.mubr.f32.mxu0 0.0
    %2416 = vmatmul.mubr.f32.gmra.mrb[0].mxu0 %v2349
    %v2417 = vpop.f32.mrb[0].mxu0
    %v2418 = vadd.f32 %v2346, %v2417
    %v2419 = vpop.f32.mrb[0].mxu0
    %2420 = vdwg.mxu0
    %v2421 = vmax.f32 %v2418, 0.0
    %v2422 = vld [vmem:[%s19] sm:$0xff]
    %v2423 = vld [vmem:[%s19 + $0x8] sm:$0xff]
    %v2424 = vld [vmem:[%s19 + $0x10] sm:$0xff]
    %v2425 = vld [vmem:[%s19 + $0x18] sm:$0xff]
    %v2426 = vld [vmem:[%s20] sm:$0x1]
    %v2428 = vlaneseq
    %v2429 = vshrl.u32 %v2428, 7
    %v2430 = vsub.s32 0, %v2429
    %v2431 = vrot.slane %v2426, %v2430
    %v2434 = vsel %vm287, %v2421, 0
    %2436 = vmatprep.subr.mxu0 0.0
    %2437 = vmatpush1.msra.mxu0 %v2422
    %2438 = vmatprep.subr.mxu0 0.0
    %2439 = vmatpush1.msra.mxu0 %v2423
    %2440 = vmatprep.subr.mxu0 0.0
    %2441 = vmatpush1.msra.mxu0 %v2424
    %2442 = vmatprep.subr.mxu0 0.0
    %2443 = vmatpush1.msra.mxu0 %v2425
    %2444 = vmatprep.subr.mxu0 0.0
    %2445 = vmatpush1.msra.mxu0 0.0
    %2446 = vmatprep.subr.mxu0 0.0
    %2447 = vmatpush1.msra.mxu0 0.0
    %2448 = vmatprep.subr.mxu0 0.0
    %2449 = vmatpush1.msra.mxu0 0.0
    %2450 = vmatprep.subr.mxu0 0.0
    %2451 = vmatpush1.msra.mxu0 0.0
    %2452 = vmatprep.subr.mxu0 0.0
    %2453 = vmatpush1.msra.mxu0 0.0
    %2454 = vmatprep.subr.mxu0 0.0
    %2455 = vmatpush1.msra.mxu0 0.0
    %2456 = vmatprep.subr.mxu0 0.0
    %2457 = vmatpush1.msra.mxu0 0.0
    %2458 = vmatprep.subr.mxu0 0.0
    %2459 = vmatpush1.msra.mxu0 0.0
    %2460 = vmatprep.subr.mxu0 0.0
    %2461 = vmatpush1.msra.mxu0 0.0
    %2462 = vmatprep.subr.mxu0 0.0
    %2463 = vmatpush1.msra.mxu0 0.0
    %2464 = vmatprep.subr.mxu0 0.0
    %2465 = vmatpush1.msra.mxu0 0.0
    %2466 = vmatprep.subr.mxu0 0.0
    %2467 = vmatpush1.msra.mxu0 0.0
    %2468 = vmatprep.subr.mxu0 0.0
    %2469 = vmatpush1.msra.mxu0 0.0
    %2470 = vmatprep.subr.mxu0 0.0
    %2471 = vmatpush1.msra.mxu0 0.0
    %2472 = vmatprep.subr.mxu0 0.0
    %2473 = vmatpush1.msra.mxu0 0.0
    %2474 = vmatprep.subr.mxu0 0.0
    %2475 = vmatpush1.msra.mxu0 0.0
    %2476 = vmatprep.subr.mxu0 0.0
    %2477 = vmatpush1.msra.mxu0 0.0
    %2478 = vmatprep.subr.mxu0 0.0
    %2479 = vmatpush1.msra.mxu0 0.0
    %2480 = vmatprep.subr.mxu0 0.0
    %2481 = vmatpush1.msra.mxu0 0.0
    %2482 = vmatprep.subr.mxu0 0.0
    %2483 = vmatpush1.msra.mxu0 0.0
    %2484 = vmatprep.subr.mxu0 0.0
    %2485 = vmatpush1.msra.mxu0 0.0
    %2486 = vmatprep.subr.mxu0 0.0
    %2487 = vmatpush1.msra.mxu0 0.0
    %2488 = vmatprep.subr.mxu0 0.0
    %2489 = vmatpush1.msra.mxu0 0.0
    %2490 = vmatprep.subr.mxu0 0.0
    %2491 = vmatpush1.msra.mxu0 0.0
    %2492 = vmatprep.subr.mxu0 0.0
    %2493 = vmatpush1.msra.mxu0 0.0
    %2494 = vmatprep.subr.mxu0 0.0
    %2495 = vmatpush1.msra.mxu0 0.0
    %2496 = vmatprep.subr.mxu0 0.0
    %2497 = vmatpush1.msra.mxu0 0.0
    %2498 = vmatprep.subr.mxu0 0.0
    %2499 = vmatpush1.msra.mxu0 0.0
    %2500 = vmatprep.mubr.f32.mxu0 0.0
    %2501 = vmatmul.mubr.f32.gmra.mrb[0].mxu0 %v2434
    %v2502 = vpop.f32.mrb[0].mxu0
    %v2503 = vadd.f32 %v2431, %v2502
    %v2504 = vpop.f32.mrb[0].mxu0
    %2505 = vdwg.mxu0
    %vm2506 = vcmask 123904
    %v2507 = vsel %vm2506, %v2503, 0.0
    %2508 = vadd.xlane.f32.xlu0 %v2507
    %v2509 = vpop.xlane.xlu0 %2508
    %v2510 = vrcp.pop 16.0
    %v2511 = vmul.f32 %v2509, %v2510
    %v2512 = vsub.f32 %v2503, %v2511
    %v2513 = vmul.f32 %v2512, %v2512
    %v2514 = vsel %vm2506, %v2513, 0.0
    %2515 = vadd.xlane.f32.xlu0 %v2514
    %v2516 = vpop.xlane.xlu0 %2515
    %v2517 = vmul.f32 %v2516, %v2510
    %v2518 = vadd.f32 %v2517, 1e-05
    %v2519 = vrsqrt.pop %v2518
    %v2520 = vmul.f32 %v2512, %v2519
    %v2521 = vld [vmem:[%s21] sm:$0x1]
    %v2523 = vlaneseq
    %v2524 = vshrl.u32 %v2523, 7
    %v2525 = vsub.s32 0, %v2524
    %v2526 = vrot.slane %v2521, %v2525
    %v2528 = vmul.f32 %v2520, %v2526
    %v2529 = vld [vmem:[%s22] sm:$0x1]
    %v2531 = vlaneseq
    %v2532 = vshrl.u32 %v2531, 7
    %v2533 = vsub.s32 0, %v2532
    %v2534 = vrot.slane %v2529, %v2533
    %v2536 = vadd.f32 %v2528, %v2534
    %2537 = vst.msk [vmem:[#allocation29] sm:$0x3] %vm2506, %v2536
    // Predicated region
    $region154: #{tpu_custom_call.1} parent=1 // pred_check
      _
    $region155: #{tpu_custom_call.1} parent=1 // pred_check_branch
      %2539 = sbr.rel (0) target = $region157
    $region156: #{tpu_custom_call.1} parent=1 // pred_region
      %s2541 = ssub.s32 32, 32
      %2542 = vsyncadd [#allocation6], %s2541
      %s2544 = sshll.u32 [#allocation29], 4
      %s2545 = int_to_ptr.vmem [resolvable:$true] %s2544
      %2547 = dma.vmem_to_hbm [thread:$0]  %s2545, 32, %s23, [#allocation6]
    $region157: #{tpu_custom_call.1} parent=1 // pred_fallthru
      _
    // Predicated region
    $region158: #{tpu_custom_call.1} parent=1 // pred_check
      _
    $region159: #{tpu_custom_call.1} parent=1 // pred_check_branch
      %2549 = sbr.rel (0) target = $region161
    $region160: #{tpu_custom_call.1} parent=1 // pred_region
      %2550 = dma.done [#allocation6], 32
    $region161: #{tpu_custom_call.1} parent=1 // pred_fallthru
      _
    %2551 = vsyncpa [#allocation5], 1
    %2552 = vsyncpa [#allocation9], 1
    %2553 = vsyncpa [#allocation15], 1
    %2554 = vsyncpa [#allocation18], 1
    %2555 = vsyncpa [#allocation21], 1
    %2556 = vsyncpa [#allocation24], 1
    %2557 = vsyncpa [#allocation27], 1
    %2558 = vsyncpa [#allocation6], 1
    %2559 = vsyncpa [#allocation7], 1
    %2560 = vsyncpa [#allocation13], 1

</llo_original>
